<compile_context>
chip_gen: v6e
topology: v6e:2x2x1
jax: 0.10.0
libtpu: 0.0.40
codegen_flags: <defaults>
</compile_context>

<pallas_src>
import math

import jax
import jax.numpy as jnp
import numpy as np
from jax.experimental import pallas as pl
from jax.experimental.pallas import tpu as pltpu

N_LAYERS = 6          # len(mask) in the PyTorch module
D = 3                 # feature dim
H = 64                # hidden dim of nets()/nett()
HP = 2 * H            # 128: fused s||t hidden width
LEAKY_SLOPE = 0.01    # PyTorch nn.LeakyReLU default

# Static coupling masks -> compile-time index structure (no tensors in-kernel).
MASK_NP = np.array([[1, 1, 0], [0, 1, 1], [1, 0, 1]] * 2, dtype=np.float32)
ACTIVE = [tuple(int(j) for j in np.nonzero(MASK_NP[i])[0]) for i in range(N_LAYERS)]
PASSIVE = [int(np.where(MASK_NP[i] == 0.0)[0][0]) for i in range(N_LAYERS)]


def _leaky_relu(x):
    # Identical to where(x>0, x, 0.01*x) for slope in (0,1); 2 VALU passes.
    return jnp.maximum(x, LEAKY_SLOPE * x)


def realnvp_logprob_kernel(x_ref, w1_ref, b1_ref, w2_ref, b2_ref,
                           w3_ref, b3_ref, out_ref):
    # Feature-major: batch on the lane axis.
    z = x_ref[...].astype(jnp.float32)                     # (3, TB)
    zs = [z[0:1, :], z[1:2, :], z[2:3, :]]                 # three (1, TB) rows
    log_det = None

    # backward_p: iterate coupling layers in reverse (static unroll, 6 iters)
    for i in reversed(range(N_LAYERS)):
        a0, a1 = ACTIVE[i]
        p = PASSIVE[i]

        # Layer 1 (dead masked column already dropped host-side):
        # two VPU broadcast FMAs -> fused hs||ht of shape (128, TB).
        w1 = w1_ref[i]                                     # (128, 2) f32
        h = (w1[:, 0:1] * zs[a0]
             + w1[:, 1:2] * zs[a1]
             + b1_ref[i])                                  # (128, TB) f32
        h = _leaky_relu(h).astype(jnp.bfloat16)

        # Fused middle layer: one native 128x128 bf16 MXU matmul, f32 acc.
        h2 = (jnp.dot(w2_ref[i], h, preferred_element_type=jnp.float32)
              + b2_ref[i])                                 # (128, TB) f32
        h2 = _leaky_relu(h2).astype(jnp.bfloat16)

        # Fused output layer: only the passive feature's s/t rows (padded to
        # 8 sublanes host-side); row 0 = s-pre, row 1 = t-pre.
        st = (jnp.dot(w3_ref[i], h2, preferred_element_type=jnp.float32)
              + b3_ref[i])                                 # (8, TB) f32
        s = jnp.tanh(st[0:1, :])                           # (1, TB)
        t = st[1:2, :]                                     # (1, TB)

        # Coupling update touches only the passive row.
        zs[p] = (zs[p] - t) * jnp.exp(-s)
        log_det = (-s) if log_det is None else (log_det - s)

    # prior: MultivariateNormal(zeros(3), eye(3))
    #   log_prob(z) = -0.5 * ||z||^2 - (D/2) * log(2*pi)
    sq = zs[0] * zs[0] + zs[1] * zs[1] + zs[2] * zs[2]     # (1, TB)
    prior_lp = -0.5 * sq - 0.5 * D * math.log(2.0 * math.pi)

    out_ref[...] = (prior_lp + log_det).astype(out_ref.dtype)   # lane-dense


# ---------------------------------------------------------------------------
# Host-side parameter construction / packing
# ---------------------------------------------------------------------------
def make_params(key):
    """Deterministic parameter init (PyTorch Linear-style uniform)."""
    def linear(key, fan_in, fan_out):
        kw, kb = jax.random.split(key)
        bound = 1.0 / math.sqrt(fan_in)
        w = jax.random.uniform(kw, (fan_in, fan_out), jnp.float32, -bound, bound)
        b = jax.random.uniform(kb, (fan_out,), jnp.float32, -bound, bound)
        return w, b

    def stack_net(keys):
        w1s, b1s, w2s, b2s, w3s, b3s = [], [], [], [], [], []
        for k in keys:
            k1, k2, k3 = jax.random.split(k, 3)
            w1, b1 = linear(k1, D, H)
            w2, b2 = linear(k2, H, H)
            w3, b3 = linear(k3, H, D)
            w1s.append(w1); b1s.append(b1)
            w2s.append(w2); b2s.append(b2)
            w3s.append(w3); b3s.append(b3)
        return (jnp.stack(w1s), jnp.stack(b1s),
                jnp.stack(w2s), jnp.stack(b2s),
                jnp.stack(w3s), jnp.stack(b3s))

    ks, kt = jax.random.split(key)
    s_params = stack_net(jax.random.split(ks, N_LAYERS))
    t_params = stack_net(jax.random.split(kt, N_LAYERS))
    return s_params, t_params


def pack_params(s_params, t_params):
    """Fuse s-net and t-net per layer, fold the static masks in, transpose for
    the feature-major (weights @ activations) kernel layout, and cast the MXU
    operands (w2, w3) to bf16."""
    s_w1, s_b1, s_w2, s_b2, s_w3, s_b3 = s_params
    t_w1, t_b1, t_w2, t_b2, t_w3, t_b3 = t_params

    w1s, b1s, w2s, b2s, w3s, b3s = [], [], [], [], [], []
    for i in range(N_LAYERS):
        a0, a1 = ACTIVE[i]
        p = PASSIVE[i]

        # Layer 1: only the two active input features (masked row of z_ is 0).
        col0 = jnp.concatenate([s_w1[i, a0, :], t_w1[i, a0, :]])      # (128,)
        col1 = jnp.concatenate([s_w1[i, a1, :], t_w1[i, a1, :]])      # (128,)
        w1s.append(jnp.stack([col0, col1], axis=1))                   # (128, 2)
        b1s.append(jnp.concatenate([s_b1[i], t_b1[i]])[:, None])      # (128, 1)

        # Layer 2: block-diagonal [s_w2^T, 0; 0, t_w2^T] -> (128, 128).
        z64 = jnp.zeros((H, H), jnp.float32)
        top = jnp.concatenate([s_w2[i].T, z64], axis=1)               # (64, 128)
        bot = jnp.concatenate([z64, t_w2[i].T], axis=1)               # (64, 128)
        w2s.append(jnp.concatenate([top, bot], axis=0))               # (128, 128)
        b2s.append(jnp.concatenate([s_b2[i], t_b2[i]])[:, None])      # (128, 1)

        # Layer 3: only the passive-feature output rows (s-pre, t-pre),
        # padded to 8 sublanes.
        zv = jnp.zeros((H,), jnp.float32)
        row_s = jnp.concatenate([s_w3[i, :, p], zv])                  # (128,)
        row_t = jnp.concatenate([zv, t_w3[i, :, p]])                  # (128,)
        w3 = jnp.zeros((8, HP), jnp.float32).at[0].set(row_s).at[1].set(row_t)
        w3s.append(w3)                                                # (8, 128)
        b3 = jnp.zeros((8,), jnp.float32).at[0].set(s_b3[i, p]).at[1].set(t_b3[i, p])
        b3s.append(b3[:, None])                                       # (8, 1)

    w1 = jnp.stack(w1s)                                   # (6, 128, 2)   f32
    b1 = jnp.stack(b1s)                                   # (6, 128, 1)   f32
    w2 = jnp.stack(w2s).astype(jnp.bfloat16)              # (6, 128, 128) bf16
    b2 = jnp.stack(b2s)                                   # (6, 128, 1)   f32
    w3 = jnp.stack(w3s).astype(jnp.bfloat16)              # (6, 8, 128)   bf16
    b3 = jnp.stack(b3s)                                   # (6, 8, 1)     f32
    return (w1, b1, w2, b2, w3, b3)


# ---------------------------------------------------------------------------
# Pallas wrapper
# ---------------------------------------------------------------------------
def _round_up(n, k):
    return ((n + k - 1) // k) * k


def realnvp_log_prob(x, packed_params, *, block_b=4096):
    """x: (B, 3) f32.  Returns log_prob of shape (B,)."""
    w1, b1, w2, b2, w3, b3 = packed_params
    B = x.shape[0]

    # Batch tile: multiple of 128 lanes. Large default amortizes per-step
    # overhead; weights (~0.5 MiB) + hidden tensors stay well inside VMEM.
    block_b = max(128, (block_b // 128) * 128)
    TB = min(block_b, _round_up(B, 128))
    # Ensure >= 2 grid steps for mid-size batches so both v7x TensorCores
    # get work (no-op on v5e/v6e).
    if B > 128 and _round_up(B, TB) == TB:
        TB = max(128, _round_up((TB + 1) // 2, 128))
    Bp = _round_up(B, TB)

    xt = jnp.transpose(x).astype(jnp.float32)              # (3, B) feature-major
    if Bp != B:
        xt = jnp.pad(xt, ((0, 0), (0, Bp - B)))

    def full_spec(a):
        # Weights: full-array block, constant index_map -> VMEM-resident
        # across all grid steps.
        nd = a.ndim
        return pl.BlockSpec(a.shape, lambda i, _nd=nd: (0,) * _nd)

    out = pl.pallas_call(
        realnvp_logprob_kernel,
        out_shape=jax.ShapeDtypeStruct((1, Bp), jnp.float32),
        grid=(Bp // TB,),
        in_specs=[pl.BlockSpec((D, TB), lambda i: (0, i)),
                  full_spec(w1), full_spec(b1),
                  full_spec(w2), full_spec(b2),
                  full_spec(w3), full_spec(b3)],
        out_specs=pl.BlockSpec((1, TB), lambda i: (0, i)),
        compiler_params=pltpu.CompilerParams(
            dimension_semantics=("parallel",),
            vmem_limit_bytes=32 * 1024 * 1024),
    )(xt, w1, b1, w2, b2, w3, b3)

    return out[0, :B]                                      # (B,)


# ---------------------------------------------------------------------------
# Pure-JAX reference mirroring the PyTorch forward()
# ---------------------------------------------------------------------------
def realnvp_log_prob_ref(x, mask, s_params, t_params):
    s_w1, s_b1, s_w2, s_b2, s_w3, s_b3 = s_params
    t_w1, t_b1, t_w2, t_b2, t_w3, t_b3 = t_params

    def lrelu(v):
        return jnp.where(v > 0, v, LEAKY_SLOPE * v)

    z = x
    log_det = jnp.zeros((x.shape[0],), jnp.float32)
    for i in reversed(range(N_LAYERS)):
        m = mask[i]
        z_ = m * z
        hs = lrelu(z_ @ s_w1[i] + s_b1[i])
        hs = lrelu(hs @ s_w2[i] + s_b2[i])
        s = jnp.tanh(hs @ s_w3[i] + s_b3[i]) * (1 - m)
        ht = lrelu(z_ @ t_w1[i] + t_b1[i])
        ht = lrelu(ht @ t_w2[i] + t_b2[i])
        t = (ht @ t_w3[i] + t_b3[i]) * (1 - m)
        z = (1 - m) * (z - t) * jnp.exp(-s) + z_
        log_det = log_det - jnp.sum(s, axis=1)
    prior_lp = -0.5 * jnp.sum(z * z, axis=1) - 0.5 * D * math.log(2.0 * math.pi)
    return prior_lp + log_det


if __name__ == "__main__":
    key = jax.random.PRNGKey(0)
    kx, kp = jax.random.split(key)

    mask = jnp.asarray(MASK_NP)
    s_params, t_params = make_params(kp)
    packed = pack_params(s_params, t_params)

    # Small batch (single grid step, full-dim tile).
    B = 8
    x = jax.random.normal(kx, (B, D), jnp.float32)
    out = jax.block_until_ready(realnvp_log_prob(x, packed))
    ref = jax.block_until_ready(realnvp_log_prob_ref(x, mask, s_params, t_params))
    assert out.shape == (B,)
    # bf16 MXU operands -> slightly looser tolerance; accumulation stays f32.
    assert np.allclose(np.asarray(out), np.asarray(ref), rtol=3e-2, atol=3e-2), (
        out, ref)

    # Batch that is not a multiple of the tile: exercises the grid + padding
    # and the >=2-grid-step split.
    B2 = 300
    x2 = jax.random.normal(jax.random.PRNGKey(1), (B2, D), jnp.float32)
    out2 = jax.block_until_ready(realnvp_log_prob(x2, packed))
    ref2 = jax.block_until_ready(
        realnvp_log_prob_ref(x2, mask, s_params, t_params))
    assert out2.shape == (B2,)
    assert np.allclose(np.asarray(out2), np.asarray(ref2), rtol=3e-2, atol=3e-2), (
        out2, ref2)

    print("KERNEL_OK")
</pallas_src>

<mosaic_0001>
module attributes {stable_mosaic.version = 11 : i64} {
  func.func @realnvp_logprob_kernel(%arg0: i32, %arg1: memref<3x128xf32, #tpu.memory_space<vmem>>, %arg2: memref<6x128x2xf32, #tpu.memory_space<vmem>>, %arg3: memref<6x128x1xf32, #tpu.memory_space<vmem>>, %arg4: memref<6x128x128xbf16, #tpu.memory_space<vmem>>, %arg5: memref<6x128x1xf32, #tpu.memory_space<vmem>>, %arg6: memref<6x8x128xbf16, #tpu.memory_space<vmem>>, %arg7: memref<6x8x1xf32, #tpu.memory_space<vmem>>, %arg8: memref<1x128xf32, #tpu.memory_space<vmem>>) attributes {dimension_semantics = [#tpu.dimension_semantics<parallel>], iteration_bounds = array<i64: 1>, scalar_prefetch = 0 : i64, scratch_operands = 0 : i64, tpu.core_type = #tpu.core_type<tc>, window_params = [{transform_indices = @transform_0, window_bounds = array<i64: 3, 128>}, {pipeline_mode = #tpu.pipeline_mode<synchronous>, transform_indices = @transform_1, window_bounds = array<i64: 6, 128, 2>}, {pipeline_mode = #tpu.pipeline_mode<synchronous>, transform_indices = @transform_2, window_bounds = array<i64: 6, 128, 1>}, {pipeline_mode = #tpu.pipeline_mode<synchronous>, transform_indices = @transform_3, window_bounds = array<i64: 6, 128, 128>}, {pipeline_mode = #tpu.pipeline_mode<synchronous>, transform_indices = @transform_4, window_bounds = array<i64: 6, 128, 1>}, {pipeline_mode = #tpu.pipeline_mode<synchronous>, transform_indices = @transform_5, window_bounds = array<i64: 6, 8, 128>}, {pipeline_mode = #tpu.pipeline_mode<synchronous>, transform_indices = @transform_6, window_bounds = array<i64: 6, 8, 1>}, {transform_indices = @transform_7, window_bounds = array<i64: 1, 128>}]} {
    %c0 = arith.constant 0 : index
    %c0_0 = arith.constant 0 : index
    %0 = vector.load %arg1[%c0, %c0_0] : memref<3x128xf32, #tpu.memory_space<vmem>>, vector<3x128xf32>
    %1 = vector.extract_strided_slice %0 {offsets = [0, 0], sizes = [1, 128], strides = [1, 1]} : vector<3x128xf32> to vector<1x128xf32>
    %2 = vector.extract_strided_slice %0 {offsets = [1, 0], sizes = [1, 128], strides = [1, 1]} : vector<3x128xf32> to vector<1x128xf32>
    %3 = vector.extract_strided_slice %0 {offsets = [2, 0], sizes = [1, 128], strides = [1, 1]} : vector<3x128xf32> to vector<1x128xf32>
    %c5 = arith.constant 5 : index
    %c0_1 = arith.constant 0 : index
    %c0_2 = arith.constant 0 : index
    %4 = vector.load %arg2[%c5, %c0_1, %c0_2] : memref<6x128x2xf32, #tpu.memory_space<vmem>>, vector<1x128x2xf32>
    %5 = vector.shape_cast %4 : vector<1x128x2xf32> to vector<128x2xf32>
    %6 = vector.extract_strided_slice %5 {offsets = [0, 0], sizes = [128, 1], strides = [1, 1]} : vector<128x2xf32> to vector<128x1xf32>
    %7 = vector.broadcast %6 : vector<128x1xf32> to vector<128x128xf32>
    %8 = vector.broadcast %1 : vector<1x128xf32> to vector<128x128xf32>
    %9 = arith.mulf %7, %8 : vector<128x128xf32>
    %10 = vector.extract_strided_slice %5 {offsets = [0, 1], sizes = [128, 1], strides = [1, 1]} : vector<128x2xf32> to vector<128x1xf32>
    %11 = vector.broadcast %10 : vector<128x1xf32> to vector<128x128xf32>
    %12 = vector.broadcast %3 : vector<1x128xf32> to vector<128x128xf32>
    %13 = arith.mulf %11, %12 : vector<128x128xf32>
    %14 = arith.addf %9, %13 : vector<128x128xf32>
    %c5_3 = arith.constant 5 : index
    %c0_4 = arith.constant 0 : index
    %c0_5 = arith.constant 0 : index
    %15 = vector.load %arg3[%c5_3, %c0_4, %c0_5] : memref<6x128x1xf32, #tpu.memory_space<vmem>>, vector<1x128x1xf32>
    %16 = vector.shape_cast %15 : vector<1x128x1xf32> to vector<128x1xf32>
    %17 = vector.broadcast %16 : vector<128x1xf32> to vector<128x128xf32>
    %18 = arith.addf %14, %17 : vector<128x128xf32>
    %cst = arith.constant 0.00999999977 : f32
    %19 = vector.broadcast %cst : f32 to vector<128x128xf32>
    %20 = arith.mulf %19, %18 : vector<128x128xf32>
    %21 = arith.maximumf %18, %20 : vector<128x128xf32>
    %22 = arith.truncf %21 : vector<128x128xf32> to vector<128x128xbf16>
    %c5_6 = arith.constant 5 : index
    %c0_7 = arith.constant 0 : index
    %c0_8 = arith.constant 0 : index
    %23 = vector.load %arg4[%c5_6, %c0_7, %c0_8] : memref<6x128x128xbf16, #tpu.memory_space<vmem>>, vector<1x128x128xbf16>
    %24 = vector.shape_cast %23 : vector<1x128x128xbf16> to vector<128x128xbf16>
    %cst_9 = arith.constant dense<0.000000e+00> : vector<128x128xf32>
    %25 = tpu.matmul %24, %22, %cst_9 {dimension_numbers = #tpu.dot_dimension_numbers<[1], [0], [0], [1], [0, 0, 1, 1], [], []>} : vector<128x128xbf16>, vector<128x128xbf16>, vector<128x128xf32> -> vector<128x128xf32>
    %c5_10 = arith.constant 5 : index
    %c0_11 = arith.constant 0 : index
    %c0_12 = arith.constant 0 : index
    %26 = vector.load %arg5[%c5_10, %c0_11, %c0_12] : memref<6x128x1xf32, #tpu.memory_space<vmem>>, vector<1x128x1xf32>
    %27 = vector.shape_cast %26 : vector<1x128x1xf32> to vector<128x1xf32>
    %28 = vector.broadcast %27 : vector<128x1xf32> to vector<128x128xf32>
    %29 = arith.addf %25, %28 : vector<128x128xf32>
    %cst_13 = arith.constant 0.00999999977 : f32
    %30 = vector.broadcast %cst_13 : f32 to vector<128x128xf32>
    %31 = arith.mulf %30, %29 : vector<128x128xf32>
    %32 = arith.maximumf %29, %31 : vector<128x128xf32>
    %33 = arith.truncf %32 : vector<128x128xf32> to vector<128x128xbf16>
    %c5_14 = arith.constant 5 : index
    %c0_15 = arith.constant 0 : index
    %c0_16 = arith.constant 0 : index
    %34 = vector.load %arg6[%c5_14, %c0_15, %c0_16] : memref<6x8x128xbf16, #tpu.memory_space<vmem>>, vector<1x8x128xbf16>
    %35 = vector.shape_cast %34 : vector<1x8x128xbf16> to vector<8x128xbf16>
    %cst_17 = arith.constant dense<0.000000e+00> : vector<8x128xf32>
    %36 = tpu.matmul %35, %33, %cst_17 {dimension_numbers = #tpu.dot_dimension_numbers<[1], [0], [0], [1], [0, 0, 1, 1], [], []>} : vector<8x128xbf16>, vector<128x128xbf16>, vector<8x128xf32> -> vector<8x128xf32>
    %c5_18 = arith.constant 5 : index
    %c0_19 = arith.constant 0 : index
    %c0_20 = arith.constant 0 : index
    %37 = vector.load %arg7[%c5_18, %c0_19, %c0_20] : memref<6x8x1xf32, #tpu.memory_space<vmem>>, vector<1x8x1xf32>
    %38 = vector.shape_cast %37 : vector<1x8x1xf32> to vector<8x1xf32>
    %39 = vector.broadcast %38 : vector<8x1xf32> to vector<8x128xf32>
    %40 = arith.addf %36, %39 : vector<8x128xf32>
    %41 = vector.extract_strided_slice %40 {offsets = [0, 0], sizes = [1, 128], strides = [1, 1]} : vector<8x128xf32> to vector<1x128xf32>
    %42 = math.tanh %41 : vector<1x128xf32>
    %43 = vector.extract_strided_slice %40 {offsets = [1, 0], sizes = [1, 128], strides = [1, 1]} : vector<8x128xf32> to vector<1x128xf32>
    %44 = arith.subf %2, %43 : vector<1x128xf32>
    %cst_21 = arith.constant 0.000000e+00 : f32
    %45 = vector.broadcast %cst_21 : f32 to vector<1x128xf32>
    %46 = arith.subf %45, %42 : vector<1x128xf32>
    %47 = math.exp %46 : vector<1x128xf32>
    %48 = arith.mulf %44, %47 : vector<1x128xf32>
    %cst_22 = arith.constant 0.000000e+00 : f32
    %49 = vector.broadcast %cst_22 : f32 to vector<1x128xf32>
    %50 = arith.subf %49, %42 : vector<1x128xf32>
    %c4 = arith.constant 4 : index
    %c0_23 = arith.constant 0 : index
    %c0_24 = arith.constant 0 : index
    %51 = vector.load %arg2[%c4, %c0_23, %c0_24] : memref<6x128x2xf32, #tpu.memory_space<vmem>>, vector<1x128x2xf32>
    %52 = vector.shape_cast %51 : vector<1x128x2xf32> to vector<128x2xf32>
    %53 = vector.extract_strided_slice %52 {offsets = [0, 0], sizes = [128, 1], strides = [1, 1]} : vector<128x2xf32> to vector<128x1xf32>
    %54 = vector.broadcast %53 : vector<128x1xf32> to vector<128x128xf32>
    %55 = vector.broadcast %48 : vector<1x128xf32> to vector<128x128xf32>
    %56 = arith.mulf %54, %55 : vector<128x128xf32>
    %57 = vector.extract_strided_slice %52 {offsets = [0, 1], sizes = [128, 1], strides = [1, 1]} : vector<128x2xf32> to vector<128x1xf32>
    %58 = vector.broadcast %57 : vector<128x1xf32> to vector<128x128xf32>
    %59 = vector.broadcast %3 : vector<1x128xf32> to vector<128x128xf32>
    %60 = arith.mulf %58, %59 : vector<128x128xf32>
    %61 = arith.addf %56, %60 : vector<128x128xf32>
    %c4_25 = arith.constant 4 : index
    %c0_26 = arith.constant 0 : index
    %c0_27 = arith.constant 0 : index
    %62 = vector.load %arg3[%c4_25, %c0_26, %c0_27] : memref<6x128x1xf32, #tpu.memory_space<vmem>>, vector<1x128x1xf32>
    %63 = vector.shape_cast %62 : vector<1x128x1xf32> to vector<128x1xf32>
    %64 = vector.broadcast %63 : vector<128x1xf32> to vector<128x128xf32>
    %65 = arith.addf %61, %64 : vector<128x128xf32>
    %cst_28 = arith.constant 0.00999999977 : f32
    %66 = vector.broadcast %cst_28 : f32 to vector<128x128xf32>
    %67 = arith.mulf %66, %65 : vector<128x128xf32>
    %68 = arith.maximumf %65, %67 : vector<128x128xf32>
    %69 = arith.truncf %68 : vector<128x128xf32> to vector<128x128xbf16>
    %c4_29 = arith.constant 4 : index
    %c0_30 = arith.constant 0 : index
    %c0_31 = arith.constant 0 : index
    %70 = vector.load %arg4[%c4_29, %c0_30, %c0_31] : memref<6x128x128xbf16, #tpu.memory_space<vmem>>, vector<1x128x128xbf16>
    %71 = vector.shape_cast %70 : vector<1x128x128xbf16> to vector<128x128xbf16>
    %cst_32 = arith.constant dense<0.000000e+00> : vector<128x128xf32>
    %72 = tpu.matmul %71, %69, %cst_32 {dimension_numbers = #tpu.dot_dimension_numbers<[1], [0], [0], [1], [0, 0, 1, 1], [], []>} : vector<128x128xbf16>, vector<128x128xbf16>, vector<128x128xf32> -> vector<128x128xf32>
    %c4_33 = arith.constant 4 : index
    %c0_34 = arith.constant 0 : index
    %c0_35 = arith.constant 0 : index
    %73 = vector.load %arg5[%c4_33, %c0_34, %c0_35] : memref<6x128x1xf32, #tpu.memory_space<vmem>>, vector<1x128x1xf32>
    %74 = vector.shape_cast %73 : vector<1x128x1xf32> to vector<128x1xf32>
    %75 = vector.broadcast %74 : vector<128x1xf32> to vector<128x128xf32>
    %76 = arith.addf %72, %75 : vector<128x128xf32>
    %cst_36 = arith.constant 0.00999999977 : f32
    %77 = vector.broadcast %cst_36 : f32 to vector<128x128xf32>
    %78 = arith.mulf %77, %76 : vector<128x128xf32>
    %79 = arith.maximumf %76, %78 : vector<128x128xf32>
    %80 = arith.truncf %79 : vector<128x128xf32> to vector<128x128xbf16>
    %c4_37 = arith.constant 4 : index
    %c0_38 = arith.constant 0 : index
    %c0_39 = arith.constant 0 : index
    %81 = vector.load %arg6[%c4_37, %c0_38, %c0_39] : memref<6x8x128xbf16, #tpu.memory_space<vmem>>, vector<1x8x128xbf16>
    %82 = vector.shape_cast %81 : vector<1x8x128xbf16> to vector<8x128xbf16>
    %cst_40 = arith.constant dense<0.000000e+00> : vector<8x128xf32>
    %83 = tpu.matmul %82, %80, %cst_40 {dimension_numbers = #tpu.dot_dimension_numbers<[1], [0], [0], [1], [0, 0, 1, 1], [], []>} : vector<8x128xbf16>, vector<128x128xbf16>, vector<8x128xf32> -> vector<8x128xf32>
    %c4_41 = arith.constant 4 : index
    %c0_42 = arith.constant 0 : index
    %c0_43 = arith.constant 0 : index
    %84 = vector.load %arg7[%c4_41, %c0_42, %c0_43] : memref<6x8x1xf32, #tpu.memory_space<vmem>>, vector<1x8x1xf32>
    %85 = vector.shape_cast %84 : vector<1x8x1xf32> to vector<8x1xf32>
    %86 = vector.broadcast %85 : vector<8x1xf32> to vector<8x128xf32>
    %87 = arith.addf %83, %86 : vector<8x128xf32>
    %88 = vector.extract_strided_slice %87 {offsets = [0, 0], sizes = [1, 128], strides = [1, 1]} : vector<8x128xf32> to vector<1x128xf32>
    %89 = math.tanh %88 : vector<1x128xf32>
    %90 = vector.extract_strided_slice %87 {offsets = [1, 0], sizes = [1, 128], strides = [1, 1]} : vector<8x128xf32> to vector<1x128xf32>
    %91 = arith.subf %1, %90 : vector<1x128xf32>
    %cst_44 = arith.constant 0.000000e+00 : f32
    %92 = vector.broadcast %cst_44 : f32 to vector<1x128xf32>
    %93 = arith.subf %92, %89 : vector<1x128xf32>
    %94 = math.exp %93 : vector<1x128xf32>
    %95 = arith.mulf %91, %94 : vector<1x128xf32>
    %96 = arith.subf %50, %89 : vector<1x128xf32>
    %c3 = arith.constant 3 : index
    %c0_45 = arith.constant 0 : index
    %c0_46 = arith.constant 0 : index
    %97 = vector.load %arg2[%c3, %c0_45, %c0_46] : memref<6x128x2xf32, #tpu.memory_space<vmem>>, vector<1x128x2xf32>
    %98 = vector.shape_cast %97 : vector<1x128x2xf32> to vector<128x2xf32>
    %99 = vector.extract_strided_slice %98 {offsets = [0, 0], sizes = [128, 1], strides = [1, 1]} : vector<128x2xf32> to vector<128x1xf32>
    %100 = vector.broadcast %99 : vector<128x1xf32> to vector<128x128xf32>
    %101 = vector.broadcast %95 : vector<1x128xf32> to vector<128x128xf32>
    %102 = arith.mulf %100, %101 : vector<128x128xf32>
    %103 = vector.extract_strided_slice %98 {offsets = [0, 1], sizes = [128, 1], strides = [1, 1]} : vector<128x2xf32> to vector<128x1xf32>
    %104 = vector.broadcast %103 : vector<128x1xf32> to vector<128x128xf32>
    %105 = vector.broadcast %48 : vector<1x128xf32> to vector<128x128xf32>
    %106 = arith.mulf %104, %105 : vector<128x128xf32>
    %107 = arith.addf %102, %106 : vector<128x128xf32>
    %c3_47 = arith.constant 3 : index
    %c0_48 = arith.constant 0 : index
    %c0_49 = arith.constant 0 : index
    %108 = vector.load %arg3[%c3_47, %c0_48, %c0_49] : memref<6x128x1xf32, #tpu.memory_space<vmem>>, vector<1x128x1xf32>
    %109 = vector.shape_cast %108 : vector<1x128x1xf32> to vector<128x1xf32>
    %110 = vector.broadcast %109 : vector<128x1xf32> to vector<128x128xf32>
    %111 = arith.addf %107, %110 : vector<128x128xf32>
    %cst_50 = arith.constant 0.00999999977 : f32
    %112 = vector.broadcast %cst_50 : f32 to vector<128x128xf32>
    %113 = arith.mulf %112, %111 : vector<128x128xf32>
    %114 = arith.maximumf %111, %113 : vector<128x128xf32>
    %115 = arith.truncf %114 : vector<128x128xf32> to vector<128x128xbf16>
    %c3_51 = arith.constant 3 : index
    %c0_52 = arith.constant 0 : index
    %c0_53 = arith.constant 0 : index
    %116 = vector.load %arg4[%c3_51, %c0_52, %c0_53] : memref<6x128x128xbf16, #tpu.memory_space<vmem>>, vector<1x128x128xbf16>
    %117 = vector.shape_cast %116 : vector<1x128x128xbf16> to vector<128x128xbf16>
    %cst_54 = arith.constant dense<0.000000e+00> : vector<128x128xf32>
    %118 = tpu.matmul %117, %115, %cst_54 {dimension_numbers = #tpu.dot_dimension_numbers<[1], [0], [0], [1], [0, 0, 1, 1], [], []>} : vector<128x128xbf16>, vector<128x128xbf16>, vector<128x128xf32> -> vector<128x128xf32>
    %c3_55 = arith.constant 3 : index
    %c0_56 = arith.constant 0 : index
    %c0_57 = arith.constant 0 : index
    %119 = vector.load %arg5[%c3_55, %c0_56, %c0_57] : memref<6x128x1xf32, #tpu.memory_space<vmem>>, vector<1x128x1xf32>
    %120 = vector.shape_cast %119 : vector<1x128x1xf32> to vector<128x1xf32>
    %121 = vector.broadcast %120 : vector<128x1xf32> to vector<128x128xf32>
    %122 = arith.addf %118, %121 : vector<128x128xf32>
    %cst_58 = arith.constant 0.00999999977 : f32
    %123 = vector.broadcast %cst_58 : f32 to vector<128x128xf32>
    %124 = arith.mulf %123, %122 : vector<128x128xf32>
    %125 = arith.maximumf %122, %124 : vector<128x128xf32>
    %126 = arith.truncf %125 : vector<128x128xf32> to vector<128x128xbf16>
    %c3_59 = arith.constant 3 : index
    %c0_60 = arith.constant 0 : index
    %c0_61 = arith.constant 0 : index
    %127 = vector.load %arg6[%c3_59, %c0_60, %c0_61] : memref<6x8x128xbf16, #tpu.memory_space<vmem>>, vector<1x8x128xbf16>
    %128 = vector.shape_cast %127 : vector<1x8x128xbf16> to vector<8x128xbf16>
    %cst_62 = arith.constant dense<0.000000e+00> : vector<8x128xf32>
    %129 = tpu.matmul %128, %126, %cst_62 {dimension_numbers = #tpu.dot_dimension_numbers<[1], [0], [0], [1], [0, 0, 1, 1], [], []>} : vector<8x128xbf16>, vector<128x128xbf16>, vector<8x128xf32> -> vector<8x128xf32>
    %c3_63 = arith.constant 3 : index
    %c0_64 = arith.constant 0 : index
    %c0_65 = arith.constant 0 : index
    %130 = vector.load %arg7[%c3_63, %c0_64, %c0_65] : memref<6x8x1xf32, #tpu.memory_space<vmem>>, vector<1x8x1xf32>
    %131 = vector.shape_cast %130 : vector<1x8x1xf32> to vector<8x1xf32>
    %132 = vector.broadcast %131 : vector<8x1xf32> to vector<8x128xf32>
    %133 = arith.addf %129, %132 : vector<8x128xf32>
    %134 = vector.extract_strided_slice %133 {offsets = [0, 0], sizes = [1, 128], strides = [1, 1]} : vector<8x128xf32> to vector<1x128xf32>
    %135 = math.tanh %134 : vector<1x128xf32>
    %136 = vector.extract_strided_slice %133 {offsets = [1, 0], sizes = [1, 128], strides = [1, 1]} : vector<8x128xf32> to vector<1x128xf32>
    %137 = arith.subf %3, %136 : vector<1x128xf32>
    %cst_66 = arith.constant 0.000000e+00 : f32
    %138 = vector.broadcast %cst_66 : f32 to vector<1x128xf32>
    %139 = arith.subf %138, %135 : vector<1x128xf32>
    %140 = math.exp %139 : vector<1x128xf32>
    %141 = arith.mulf %137, %140 : vector<1x128xf32>
    %142 = arith.subf %96, %135 : vector<1x128xf32>
    %c2 = arith.constant 2 : index
    %c0_67 = arith.constant 0 : index
    %c0_68 = arith.constant 0 : index
    %143 = vector.load %arg2[%c2, %c0_67, %c0_68] : memref<6x128x2xf32, #tpu.memory_space<vmem>>, vector<1x128x2xf32>
    %144 = vector.shape_cast %143 : vector<1x128x2xf32> to vector<128x2xf32>
    %145 = vector.extract_strided_slice %144 {offsets = [0, 0], sizes = [128, 1], strides = [1, 1]} : vector<128x2xf32> to vector<128x1xf32>
    %146 = vector.broadcast %145 : vector<128x1xf32> to vector<128x128xf32>
    %147 = vector.broadcast %95 : vector<1x128xf32> to vector<128x128xf32>
    %148 = arith.mulf %146, %147 : vector<128x128xf32>
    %149 = vector.extract_strided_slice %144 {offsets = [0, 1], sizes = [128, 1], strides = [1, 1]} : vector<128x2xf32> to vector<128x1xf32>
    %150 = vector.broadcast %149 : vector<128x1xf32> to vector<128x128xf32>
    %151 = vector.broadcast %141 : vector<1x128xf32> to vector<128x128xf32>
    %152 = arith.mulf %150, %151 : vector<128x128xf32>
    %153 = arith.addf %148, %152 : vector<128x128xf32>
    %c2_69 = arith.constant 2 : index
    %c0_70 = arith.constant 0 : index
    %c0_71 = arith.constant 0 : index
    %154 = vector.load %arg3[%c2_69, %c0_70, %c0_71] : memref<6x128x1xf32, #tpu.memory_space<vmem>>, vector<1x128x1xf32>
    %155 = vector.shape_cast %154 : vector<1x128x1xf32> to vector<128x1xf32>
    %156 = vector.broadcast %155 : vector<128x1xf32> to vector<128x128xf32>
    %157 = arith.addf %153, %156 : vector<128x128xf32>
    %cst_72 = arith.constant 0.00999999977 : f32
    %158 = vector.broadcast %cst_72 : f32 to vector<128x128xf32>
    %159 = arith.mulf %158, %157 : vector<128x128xf32>
    %160 = arith.maximumf %157, %159 : vector<128x128xf32>
    %161 = arith.truncf %160 : vector<128x128xf32> to vector<128x128xbf16>
    %c2_73 = arith.constant 2 : index
    %c0_74 = arith.constant 0 : index
    %c0_75 = arith.constant 0 : index
    %162 = vector.load %arg4[%c2_73, %c0_74, %c0_75] : memref<6x128x128xbf16, #tpu.memory_space<vmem>>, vector<1x128x128xbf16>
    %163 = vector.shape_cast %162 : vector<1x128x128xbf16> to vector<128x128xbf16>
    %cst_76 = arith.constant dense<0.000000e+00> : vector<128x128xf32>
    %164 = tpu.matmul %163, %161, %cst_76 {dimension_numbers = #tpu.dot_dimension_numbers<[1], [0], [0], [1], [0, 0, 1, 1], [], []>} : vector<128x128xbf16>, vector<128x128xbf16>, vector<128x128xf32> -> vector<128x128xf32>
    %c2_77 = arith.constant 2 : index
    %c0_78 = arith.constant 0 : index
    %c0_79 = arith.constant 0 : index
    %165 = vector.load %arg5[%c2_77, %c0_78, %c0_79] : memref<6x128x1xf32, #tpu.memory_space<vmem>>, vector<1x128x1xf32>
    %166 = vector.shape_cast %165 : vector<1x128x1xf32> to vector<128x1xf32>
    %167 = vector.broadcast %166 : vector<128x1xf32> to vector<128x128xf32>
    %168 = arith.addf %164, %167 : vector<128x128xf32>
    %cst_80 = arith.constant 0.00999999977 : f32
    %169 = vector.broadcast %cst_80 : f32 to vector<128x128xf32>
    %170 = arith.mulf %169, %168 : vector<128x128xf32>
    %171 = arith.maximumf %168, %170 : vector<128x128xf32>
    %172 = arith.truncf %171 : vector<128x128xf32> to vector<128x128xbf16>
    %c2_81 = arith.constant 2 : index
    %c0_82 = arith.constant 0 : index
    %c0_83 = arith.constant 0 : index
    %173 = vector.load %arg6[%c2_81, %c0_82, %c0_83] : memref<6x8x128xbf16, #tpu.memory_space<vmem>>, vector<1x8x128xbf16>
    %174 = vector.shape_cast %173 : vector<1x8x128xbf16> to vector<8x128xbf16>
    %cst_84 = arith.constant dense<0.000000e+00> : vector<8x128xf32>
    %175 = tpu.matmul %174, %172, %cst_84 {dimension_numbers = #tpu.dot_dimension_numbers<[1], [0], [0], [1], [0, 0, 1, 1], [], []>} : vector<8x128xbf16>, vector<128x128xbf16>, vector<8x128xf32> -> vector<8x128xf32>
    %c2_85 = arith.constant 2 : index
    %c0_86 = arith.constant 0 : index
    %c0_87 = arith.constant 0 : index
    %176 = vector.load %arg7[%c2_85, %c0_86, %c0_87] : memref<6x8x1xf32, #tpu.memory_space<vmem>>, vector<1x8x1xf32>
    %177 = vector.shape_cast %176 : vector<1x8x1xf32> to vector<8x1xf32>
    %178 = vector.broadcast %177 : vector<8x1xf32> to vector<8x128xf32>
    %179 = arith.addf %175, %178 : vector<8x128xf32>
    %180 = vector.extract_strided_slice %179 {offsets = [0, 0], sizes = [1, 128], strides = [1, 1]} : vector<8x128xf32> to vector<1x128xf32>
    %181 = math.tanh %180 : vector<1x128xf32>
    %182 = vector.extract_strided_slice %179 {offsets = [1, 0], sizes = [1, 128], strides = [1, 1]} : vector<8x128xf32> to vector<1x128xf32>
    %183 = arith.subf %48, %182 : vector<1x128xf32>
    %cst_88 = arith.constant 0.000000e+00 : f32
    %184 = vector.broadcast %cst_88 : f32 to vector<1x128xf32>
    %185 = arith.subf %184, %181 : vector<1x128xf32>
    %186 = math.exp %185 : vector<1x128xf32>
    %187 = arith.mulf %183, %186 : vector<1x128xf32>
    %188 = arith.subf %142, %181 : vector<1x128xf32>
    %c1 = arith.constant 1 : index
    %c0_89 = arith.constant 0 : index
    %c0_90 = arith.constant 0 : index
    %189 = vector.load %arg2[%c1, %c0_89, %c0_90] : memref<6x128x2xf32, #tpu.memory_space<vmem>>, vector<1x128x2xf32>
    %190 = vector.shape_cast %189 : vector<1x128x2xf32> to vector<128x2xf32>
    %191 = vector.extract_strided_slice %190 {offsets = [0, 0], sizes = [128, 1], strides = [1, 1]} : vector<128x2xf32> to vector<128x1xf32>
    %192 = vector.broadcast %191 : vector<128x1xf32> to vector<128x128xf32>
    %193 = vector.broadcast %187 : vector<1x128xf32> to vector<128x128xf32>
    %194 = arith.mulf %192, %193 : vector<128x128xf32>
    %195 = vector.extract_strided_slice %190 {offsets = [0, 1], sizes = [128, 1], strides = [1, 1]} : vector<128x2xf32> to vector<128x1xf32>
    %196 = vector.broadcast %195 : vector<128x1xf32> to vector<128x128xf32>
    %197 = vector.broadcast %141 : vector<1x128xf32> to vector<128x128xf32>
    %198 = arith.mulf %196, %197 : vector<128x128xf32>
    %199 = arith.addf %194, %198 : vector<128x128xf32>
    %c1_91 = arith.constant 1 : index
    %c0_92 = arith.constant 0 : index
    %c0_93 = arith.constant 0 : index
    %200 = vector.load %arg3[%c1_91, %c0_92, %c0_93] : memref<6x128x1xf32, #tpu.memory_space<vmem>>, vector<1x128x1xf32>
    %201 = vector.shape_cast %200 : vector<1x128x1xf32> to vector<128x1xf32>
    %202 = vector.broadcast %201 : vector<128x1xf32> to vector<128x128xf32>
    %203 = arith.addf %199, %202 : vector<128x128xf32>
    %cst_94 = arith.constant 0.00999999977 : f32
    %204 = vector.broadcast %cst_94 : f32 to vector<128x128xf32>
    %205 = arith.mulf %204, %203 : vector<128x128xf32>
    %206 = arith.maximumf %203, %205 : vector<128x128xf32>
    %207 = arith.truncf %206 : vector<128x128xf32> to vector<128x128xbf16>
    %c1_95 = arith.constant 1 : index
    %c0_96 = arith.constant 0 : index
    %c0_97 = arith.constant 0 : index
    %208 = vector.load %arg4[%c1_95, %c0_96, %c0_97] : memref<6x128x128xbf16, #tpu.memory_space<vmem>>, vector<1x128x128xbf16>
    %209 = vector.shape_cast %208 : vector<1x128x128xbf16> to vector<128x128xbf16>
    %cst_98 = arith.constant dense<0.000000e+00> : vector<128x128xf32>
    %210 = tpu.matmul %209, %207, %cst_98 {dimension_numbers = #tpu.dot_dimension_numbers<[1], [0], [0], [1], [0, 0, 1, 1], [], []>} : vector<128x128xbf16>, vector<128x128xbf16>, vector<128x128xf32> -> vector<128x128xf32>
    %c1_99 = arith.constant 1 : index
    %c0_100 = arith.constant 0 : index
    %c0_101 = arith.constant 0 : index
    %211 = vector.load %arg5[%c1_99, %c0_100, %c0_101] : memref<6x128x1xf32, #tpu.memory_space<vmem>>, vector<1x128x1xf32>
    %212 = vector.shape_cast %211 : vector<1x128x1xf32> to vector<128x1xf32>
    %213 = vector.broadcast %212 : vector<128x1xf32> to vector<128x128xf32>
    %214 = arith.addf %210, %213 : vector<128x128xf32>
    %cst_102 = arith.constant 0.00999999977 : f32
    %215 = vector.broadcast %cst_102 : f32 to vector<128x128xf32>
    %216 = arith.mulf %215, %214 : vector<128x128xf32>
    %217 = arith.maximumf %214, %216 : vector<128x128xf32>
    %218 = arith.truncf %217 : vector<128x128xf32> to vector<128x128xbf16>
    %c1_103 = arith.constant 1 : index
    %c0_104 = arith.constant 0 : index
    %c0_105 = arith.constant 0 : index
    %219 = vector.load %arg6[%c1_103, %c0_104, %c0_105] : memref<6x8x128xbf16, #tpu.memory_space<vmem>>, vector<1x8x128xbf16>
    %220 = vector.shape_cast %219 : vector<1x8x128xbf16> to vector<8x128xbf16>
    %cst_106 = arith.constant dense<0.000000e+00> : vector<8x128xf32>
    %221 = tpu.matmul %220, %218, %cst_106 {dimension_numbers = #tpu.dot_dimension_numbers<[1], [0], [0], [1], [0, 0, 1, 1], [], []>} : vector<8x128xbf16>, vector<128x128xbf16>, vector<8x128xf32> -> vector<8x128xf32>
    %c1_107 = arith.constant 1 : index
    %c0_108 = arith.constant 0 : index
    %c0_109 = arith.constant 0 : index
    %222 = vector.load %arg7[%c1_107, %c0_108, %c0_109] : memref<6x8x1xf32, #tpu.memory_space<vmem>>, vector<1x8x1xf32>
    %223 = vector.shape_cast %222 : vector<1x8x1xf32> to vector<8x1xf32>
    %224 = vector.broadcast %223 : vector<8x1xf32> to vector<8x128xf32>
    %225 = arith.addf %221, %224 : vector<8x128xf32>
    %226 = vector.extract_strided_slice %225 {offsets = [0, 0], sizes = [1, 128], strides = [1, 1]} : vector<8x128xf32> to vector<1x128xf32>
    %227 = math.tanh %226 : vector<1x128xf32>
    %228 = vector.extract_strided_slice %225 {offsets = [1, 0], sizes = [1, 128], strides = [1, 1]} : vector<8x128xf32> to vector<1x128xf32>
    %229 = arith.subf %95, %228 : vector<1x128xf32>
    %cst_110 = arith.constant 0.000000e+00 : f32
    %230 = vector.broadcast %cst_110 : f32 to vector<1x128xf32>
    %231 = arith.subf %230, %227 : vector<1x128xf32>
    %232 = math.exp %231 : vector<1x128xf32>
    %233 = arith.mulf %229, %232 : vector<1x128xf32>
    %234 = arith.subf %188, %227 : vector<1x128xf32>
    %c0_111 = arith.constant 0 : index
    %c0_112 = arith.constant 0 : index
    %c0_113 = arith.constant 0 : index
    %235 = vector.load %arg2[%c0_111, %c0_112, %c0_113] : memref<6x128x2xf32, #tpu.memory_space<vmem>>, vector<1x128x2xf32>
    %236 = vector.shape_cast %235 : vector<1x128x2xf32> to vector<128x2xf32>
    %237 = vector.extract_strided_slice %236 {offsets = [0, 0], sizes = [128, 1], strides = [1, 1]} : vector<128x2xf32> to vector<128x1xf32>
    %238 = vector.broadcast %237 : vector<128x1xf32> to vector<128x128xf32>
    %239 = vector.broadcast %233 : vector<1x128xf32> to vector<128x128xf32>
    %240 = arith.mulf %238, %239 : vector<128x128xf32>
    %241 = vector.extract_strided_slice %236 {offsets = [0, 1], sizes = [128, 1], strides = [1, 1]} : vector<128x2xf32> to vector<128x1xf32>
    %242 = vector.broadcast %241 : vector<128x1xf32> to vector<128x128xf32>
    %243 = vector.broadcast %187 : vector<1x128xf32> to vector<128x128xf32>
    %244 = arith.mulf %242, %243 : vector<128x128xf32>
    %245 = arith.addf %240, %244 : vector<128x128xf32>
    %c0_114 = arith.constant 0 : index
    %c0_115 = arith.constant 0 : index
    %c0_116 = arith.constant 0 : index
    %246 = vector.load %arg3[%c0_114, %c0_115, %c0_116] : memref<6x128x1xf32, #tpu.memory_space<vmem>>, vector<1x128x1xf32>
    %247 = vector.shape_cast %246 : vector<1x128x1xf32> to vector<128x1xf32>
    %248 = vector.broadcast %247 : vector<128x1xf32> to vector<128x128xf32>
    %249 = arith.addf %245, %248 : vector<128x128xf32>
    %cst_117 = arith.constant 0.00999999977 : f32
    %250 = vector.broadcast %cst_117 : f32 to vector<128x128xf32>
    %251 = arith.mulf %250, %249 : vector<128x128xf32>
    %252 = arith.maximumf %249, %251 : vector<128x128xf32>
    %253 = arith.truncf %252 : vector<128x128xf32> to vector<128x128xbf16>
    %c0_118 = arith.constant 0 : index
    %c0_119 = arith.constant 0 : index
    %c0_120 = arith.constant 0 : index
    %254 = vector.load %arg4[%c0_118, %c0_119, %c0_120] : memref<6x128x128xbf16, #tpu.memory_space<vmem>>, vector<1x128x128xbf16>
    %255 = vector.shape_cast %254 : vector<1x128x128xbf16> to vector<128x128xbf16>
    %cst_121 = arith.constant dense<0.000000e+00> : vector<128x128xf32>
    %256 = tpu.matmul %255, %253, %cst_121 {dimension_numbers = #tpu.dot_dimension_numbers<[1], [0], [0], [1], [0, 0, 1, 1], [], []>} : vector<128x128xbf16>, vector<128x128xbf16>, vector<128x128xf32> -> vector<128x128xf32>
    %c0_122 = arith.constant 0 : index
    %c0_123 = arith.constant 0 : index
    %c0_124 = arith.constant 0 : index
    %257 = vector.load %arg5[%c0_122, %c0_123, %c0_124] : memref<6x128x1xf32, #tpu.memory_space<vmem>>, vector<1x128x1xf32>
    %258 = vector.shape_cast %257 : vector<1x128x1xf32> to vector<128x1xf32>
    %259 = vector.broadcast %258 : vector<128x1xf32> to vector<128x128xf32>
    %260 = arith.addf %256, %259 : vector<128x128xf32>
    %cst_125 = arith.constant 0.00999999977 : f32
    %261 = vector.broadcast %cst_125 : f32 to vector<128x128xf32>
    %262 = arith.mulf %261, %260 : vector<128x128xf32>
    %263 = arith.maximumf %260, %262 : vector<128x128xf32>
    %264 = arith.truncf %263 : vector<128x128xf32> to vector<128x128xbf16>
    %c0_126 = arith.constant 0 : index
    %c0_127 = arith.constant 0 : index
    %c0_128 = arith.constant 0 : index
    %265 = vector.load %arg6[%c0_126, %c0_127, %c0_128] : memref<6x8x128xbf16, #tpu.memory_space<vmem>>, vector<1x8x128xbf16>
    %266 = vector.shape_cast %265 : vector<1x8x128xbf16> to vector<8x128xbf16>
    %cst_129 = arith.constant dense<0.000000e+00> : vector<8x128xf32>
    %267 = tpu.matmul %266, %264, %cst_129 {dimension_numbers = #tpu.dot_dimension_numbers<[1], [0], [0], [1], [0, 0, 1, 1], [], []>} : vector<8x128xbf16>, vector<128x128xbf16>, vector<8x128xf32> -> vector<8x128xf32>
    %c0_130 = arith.constant 0 : index
    %c0_131 = arith.constant 0 : index
    %c0_132 = arith.constant 0 : index
    %268 = vector.load %arg7[%c0_130, %c0_131, %c0_132] : memref<6x8x1xf32, #tpu.memory_space<vmem>>, vector<1x8x1xf32>
    %269 = vector.shape_cast %268 : vector<1x8x1xf32> to vector<8x1xf32>
    %270 = vector.broadcast %269 : vector<8x1xf32> to vector<8x128xf32>
    %271 = arith.addf %267, %270 : vector<8x128xf32>
    %272 = vector.extract_strided_slice %271 {offsets = [0, 0], sizes = [1, 128], strides = [1, 1]} : vector<8x128xf32> to vector<1x128xf32>
    %273 = math.tanh %272 : vector<1x128xf32>
    %274 = vector.extract_strided_slice %271 {offsets = [1, 0], sizes = [1, 128], strides = [1, 1]} : vector<8x128xf32> to vector<1x128xf32>
    %275 = arith.subf %141, %274 : vector<1x128xf32>
    %cst_133 = arith.constant 0.000000e+00 : f32
    %276 = vector.broadcast %cst_133 : f32 to vector<1x128xf32>
    %277 = arith.subf %276, %273 : vector<1x128xf32>
    %278 = math.exp %277 : vector<1x128xf32>
    %279 = arith.mulf %275, %278 : vector<1x128xf32>
    %280 = arith.subf %234, %273 : vector<1x128xf32>
    %281 = arith.mulf %233, %233 : vector<1x128xf32>
    %282 = arith.mulf %187, %187 : vector<1x128xf32>
    %283 = arith.addf %281, %282 : vector<1x128xf32>
    %284 = arith.mulf %279, %279 : vector<1x128xf32>
    %285 = arith.addf %283, %284 : vector<1x128xf32>
    %cst_134 = arith.constant -5.000000e-01 : f32
    %286 = vector.broadcast %cst_134 : f32 to vector<1x128xf32>
    %287 = arith.mulf %286, %285 : vector<1x128xf32>
    %cst_135 = arith.constant 2.75681567 : f32
    %288 = vector.broadcast %cst_135 : f32 to vector<1x128xf32>
    %289 = arith.subf %287, %288 : vector<1x128xf32>
    %290 = arith.addf %289, %280 : vector<1x128xf32>
    %c0_136 = arith.constant 0 : index
    %c0_137 = arith.constant 0 : index
    %291 = vector.load %arg8[%c0_136, %c0_137] : memref<1x128xf32, #tpu.memory_space<vmem>>, vector<1x128xf32>
    tpu.vector_store %arg8[%c0_136, %c0_137], %290 {strides = array<i32>} : memref<1x128xf32, #tpu.memory_space<vmem>>, vector<1x128xf32>,
    return
  }
  func.func @transform_0(%arg0: i32) -> (i32, i32) {
    %c0_i32 = arith.constant 0 : i32
    %c0_i32_0 = arith.constant 0 : i32
    return %c0_i32, %arg0 : i32, i32
  }
  func.func @transform_1(%arg0: i32) -> (i32, i32, i32) {
    %c0_i32 = arith.constant 0 : i32
    %c0_i32_0 = arith.constant 0 : i32
    %c0_i32_1 = arith.constant 0 : i32
    %c0_i32_2 = arith.constant 0 : i32
    return %c0_i32, %c0_i32_0, %c0_i32_1 : i32, i32, i32
  }
  func.func @transform_2(%arg0: i32) -> (i32, i32, i32) {
    %c0_i32 = arith.constant 0 : i32
    %c0_i32_0 = arith.constant 0 : i32
    %c0_i32_1 = arith.constant 0 : i32
    %c0_i32_2 = arith.constant 0 : i32
    return %c0_i32, %c0_i32_0, %c0_i32_1 : i32, i32, i32
  }
  func.func @transform_3(%arg0: i32) -> (i32, i32, i32) {
    %c0_i32 = arith.constant 0 : i32
    %c0_i32_0 = arith.constant 0 : i32
    %c0_i32_1 = arith.constant 0 : i32
    %c0_i32_2 = arith.constant 0 : i32
    return %c0_i32, %c0_i32_0, %c0_i32_1 : i32, i32, i32
  }
  func.func @transform_4(%arg0: i32) -> (i32, i32, i32) {
    %c0_i32 = arith.constant 0 : i32
    %c0_i32_0 = arith.constant 0 : i32
    %c0_i32_1 = arith.constant 0 : i32
    %c0_i32_2 = arith.constant 0 : i32
    return %c0_i32, %c0_i32_0, %c0_i32_1 : i32, i32, i32
  }
  func.func @transform_5(%arg0: i32) -> (i32, i32, i32) {
    %c0_i32 = arith.constant 0 : i32
    %c0_i32_0 = arith.constant 0 : i32
    %c0_i32_1 = arith.constant 0 : i32
    %c0_i32_2 = arith.constant 0 : i32
    return %c0_i32, %c0_i32_0, %c0_i32_1 : i32, i32, i32
  }
  func.func @transform_6(%arg0: i32) -> (i32, i32, i32) {
    %c0_i32 = arith.constant 0 : i32
    %c0_i32_0 = arith.constant 0 : i32
    %c0_i32_1 = arith.constant 0 : i32
    %c0_i32_2 = arith.constant 0 : i32
    return %c0_i32, %c0_i32_0, %c0_i32_1 : i32, i32, i32
  }
  func.func @transform_7(%arg0: i32) -> (i32, i32) {
    %c0_i32 = arith.constant 0 : i32
    %c0_i32_0 = arith.constant 0 : i32
    return %c0_i32, %arg0 : i32, i32
  }
}

</mosaic_0001>

<llo_original>
// kernel: tpu_custom_call.1
$region0: #{tpu_custom_call.1}
  #allocation0 [shape = 'u32[]', space=smem, size = 0x4, offset = 0x4, fixed_abs, tag = 'smem constant byte address 0x4 - core index']
  #allocation1 [shape = 'u32[144,128]{1,0:T(1,128)}', space=vmem, size = 0x12000, scoped, tag = 'internal scratch']
  %s0 = inlined_call_operand.vmem [shape: f32[3,128], index: 0, kind: input, shape index: {}]
  %s1 = inlined_call_operand.vmem [shape: f32[6,128,2], index: 1, kind: input, shape index: {}]
  %s2 = inlined_call_operand.vmem [shape: f32[6,128,1], index: 2, kind: input, shape index: {}]
  %s3 = inlined_call_operand.vmem [shape: bf16[6,128,128], index: 3, kind: input, shape index: {}]
  %s4 = inlined_call_operand.vmem [shape: f32[6,128,1], index: 4, kind: input, shape index: {}]
  %s5 = inlined_call_operand.vmem [shape: bf16[6,8,128], index: 5, kind: input, shape index: {}]
  %s6 = inlined_call_operand.vmem [shape: f32[6,8,1], index: 6, kind: input, shape index: {}]
  %s7 = inlined_call_operand.hbm [shape: f32[1,128], index: 7, kind: output, shape index: {}]
  %s8 = sld [smem:[#allocation0]]
  $region38: #{tpu_custom_call.1} parent=0
    _
  %s10 = ssub.s32 1, %s8
  %s11 = scalar_select 0, %s10, %s8
  $region1: #{tpu_custom_call.1} parent=0
    #allocation2 [shape = 'u8[512]{0}', space=vmem, size = 0x400, scoped, tag = 'output window, operand 0, single buffered']
    #allocation3 [shape = 's32[1]{0}', space=sflag, size = 0x4, scoped, tag = 'scoped memory for tpu_custom_call.1']
    %12 = vsyncpa [#allocation3], 0
    // Predicated region
    $region2: #{tpu_custom_call.1} parent=1 // pred_check
      _
    $region3: #{tpu_custom_call.1} parent=1 // pred_check_branch
      %14 = sbr.rel (0) target = $region5
    $region4: #{tpu_custom_call.1} parent=1 // pred_region
      _
    $region5: #{tpu_custom_call.1} parent=1 // pred_fallthru
      _
    // Predicated region
    $region6: #{tpu_custom_call.1} parent=1 // pred_check
      _
    $region7: #{tpu_custom_call.1} parent=1 // pred_check_branch
      %16 = sbr.rel (0) target = $region9
    $region8: #{tpu_custom_call.1} parent=1 // pred_region
      _
    $region9: #{tpu_custom_call.1} parent=1 // pred_fallthru
      _
    // Predicated region
    $region10: #{tpu_custom_call.1} parent=1 // pred_check
      _
    $region11: #{tpu_custom_call.1} parent=1 // pred_check_branch
      %18 = sbr.rel (0) target = $region13
    $region12: #{tpu_custom_call.1} parent=1 // pred_region
      _
    $region13: #{tpu_custom_call.1} parent=1 // pred_fallthru
      _
    // Predicated region
    $region14: #{tpu_custom_call.1} parent=1 // pred_check
      _
    $region15: #{tpu_custom_call.1} parent=1 // pred_check_branch
      %20 = sbr.rel (0) target = $region17
    $region16: #{tpu_custom_call.1} parent=1 // pred_region
      _
    $region17: #{tpu_custom_call.1} parent=1 // pred_fallthru
      _
    // Predicated region
    $region18: #{tpu_custom_call.1} parent=1 // pred_check
      _
    $region19: #{tpu_custom_call.1} parent=1 // pred_check_branch
      %22 = sbr.rel (0) target = $region21
    $region20: #{tpu_custom_call.1} parent=1 // pred_region
      _
    $region21: #{tpu_custom_call.1} parent=1 // pred_fallthru
      _
    // Predicated region
    $region22: #{tpu_custom_call.1} parent=1 // pred_check
      _
    $region23: #{tpu_custom_call.1} parent=1 // pred_check_branch
      %24 = sbr.rel (0) target = $region25
    $region24: #{tpu_custom_call.1} parent=1 // pred_region
      _
    $region25: #{tpu_custom_call.1} parent=1 // pred_fallthru
      _
    // Predicated region
    $region26: #{tpu_custom_call.1} parent=1 // pred_check
      _
    $region27: #{tpu_custom_call.1} parent=1 // pred_check_branch
      %26 = sbr.rel (0) target = $region29
    $region28: #{tpu_custom_call.1} parent=1 // pred_region
      _
    $region29: #{tpu_custom_call.1} parent=1 // pred_fallthru
      _
    %v28 = vld [vmem:[%s0] sm:$0x7]
    %s29 = scalar_lea.vmem %s1, 640
    %v30 = vld [vmem:[%s29] sm:$0xff]
    %v31 = vld [vmem:[%s29 + $0x8] sm:$0xff]
    %v32 = vld [vmem:[%s29 + $0x10] sm:$0xff]
    %v33 = vld [vmem:[%s29 + $0x18] sm:$0xff]
    %v34 = vld [vmem:[%s29 + $0x20] sm:$0xff]
    %v35 = vld [vmem:[%s29 + $0x28] sm:$0xff]
    %v36 = vld [vmem:[%s29 + $0x30] sm:$0xff]
    %v37 = vld [vmem:[%s29 + $0x38] sm:$0xff]
    %v38 = vld [vmem:[%s29 + $0x40] sm:$0xff]
    %v39 = vld [vmem:[%s29 + $0x48] sm:$0xff]
    %v40 = vld [vmem:[%s29 + $0x50] sm:$0xff]
    %v41 = vld [vmem:[%s29 + $0x58] sm:$0xff]
    %v42 = vld [vmem:[%s29 + $0x60] sm:$0xff]
    %v43 = vld [vmem:[%s29 + $0x68] sm:$0xff]
    %v44 = vld [vmem:[%s29 + $0x70] sm:$0xff]
    %v45 = vld [vmem:[%s29 + $0x78] sm:$0xff]
    %47 = vset.pattern.permute.xlu0 0
    %48 = vperm.xlu0 %47, %v30
    %v49 = vpop.permute.xlu0 %48
    %52 = vset.pattern.permute.xlu0 0
    %53 = vperm.xlu0 %52, %v31
    %v54 = vpop.permute.xlu0 %53
    %57 = vset.pattern.permute.xlu0 0
    %58 = vperm.xlu0 %57, %v32
    %v59 = vpop.permute.xlu0 %58
    %62 = vset.pattern.permute.xlu0 0
    %63 = vperm.xlu0 %62, %v33
    %v64 = vpop.permute.xlu0 %63
    %67 = vset.pattern.permute.xlu0 0
    %68 = vperm.xlu0 %67, %v34
    %v69 = vpop.permute.xlu0 %68
    %72 = vset.pattern.permute.xlu0 0
    %73 = vperm.xlu0 %72, %v35
    %v74 = vpop.permute.xlu0 %73
    %77 = vset.pattern.permute.xlu0 0
    %78 = vperm.xlu0 %77, %v36
    %v79 = vpop.permute.xlu0 %78
    %82 = vset.pattern.permute.xlu0 0
    %83 = vperm.xlu0 %82, %v37
    %v84 = vpop.permute.xlu0 %83
    %87 = vset.pattern.permute.xlu0 0
    %88 = vperm.xlu0 %87, %v38
    %v89 = vpop.permute.xlu0 %88
    %92 = vset.pattern.permute.xlu0 0
    %93 = vperm.xlu0 %92, %v39
    %v94 = vpop.permute.xlu0 %93
    %97 = vset.pattern.permute.xlu0 0
    %98 = vperm.xlu0 %97, %v40
    %v99 = vpop.permute.xlu0 %98
    %102 = vset.pattern.permute.xlu0 0
    %103 = vperm.xlu0 %102, %v41
    %v104 = vpop.permute.xlu0 %103
    %107 = vset.pattern.permute.xlu0 0
    %108 = vperm.xlu0 %107, %v42
    %v109 = vpop.permute.xlu0 %108
    %112 = vset.pattern.permute.xlu0 0
    %113 = vperm.xlu0 %112, %v43
    %v114 = vpop.permute.xlu0 %113
    %117 = vset.pattern.permute.xlu0 0
    %118 = vperm.xlu0 %117, %v44
    %v119 = vpop.permute.xlu0 %118
    %122 = vset.pattern.permute.xlu0 0
    %123 = vperm.xlu0 %122, %v45
    %v124 = vpop.permute.xlu0 %123
    %v126 = vlaneseq
    %v127 = vshrl.u32 %v126, 7
    %v128 = vsub.s32 0, %v127
    %v129 = vrot.slane %v28, %v128
    %v130 = vmul.f32 %v49, %v129
    %v131 = vmul.f32 %v54, %v129
    %v132 = vmul.f32 %v59, %v129
    %v133 = vmul.f32 %v64, %v129
    %v134 = vmul.f32 %v69, %v129
    %v135 = vmul.f32 %v74, %v129
    %v136 = vmul.f32 %v79, %v129
    %v137 = vmul.f32 %v84, %v129
    %v138 = vmul.f32 %v89, %v129
    %v139 = vmul.f32 %v94, %v129
    %v140 = vmul.f32 %v99, %v129
    %v141 = vmul.f32 %v104, %v129
    %v142 = vmul.f32 %v109, %v129
    %v143 = vmul.f32 %v114, %v129
    %v144 = vmul.f32 %v119, %v129
    %v145 = vmul.f32 %v124, %v129
    %146 = vset.pattern.permute.xlu0 1
    %147 = vperm.xlu0 %146, %v30
    %v148 = vpop.permute.xlu0 %147
    %150 = vset.pattern.permute.xlu0 1
    %151 = vperm.xlu0 %150, %v31
    %v152 = vpop.permute.xlu0 %151
    %154 = vset.pattern.permute.xlu0 1
    %155 = vperm.xlu0 %154, %v32
    %v156 = vpop.permute.xlu0 %155
    %158 = vset.pattern.permute.xlu0 1
    %159 = vperm.xlu0 %158, %v33
    %v160 = vpop.permute.xlu0 %159
    %162 = vset.pattern.permute.xlu0 1
    %163 = vperm.xlu0 %162, %v34
    %v164 = vpop.permute.xlu0 %163
    %166 = vset.pattern.permute.xlu0 1
    %167 = vperm.xlu0 %166, %v35
    %v168 = vpop.permute.xlu0 %167
    %170 = vset.pattern.permute.xlu0 1
    %171 = vperm.xlu0 %170, %v36
    %v172 = vpop.permute.xlu0 %171
    %174 = vset.pattern.permute.xlu0 1
    %175 = vperm.xlu0 %174, %v37
    %v176 = vpop.permute.xlu0 %175
    %178 = vset.pattern.permute.xlu0 1
    %179 = vperm.xlu0 %178, %v38
    %v180 = vpop.permute.xlu0 %179
    %182 = vset.pattern.permute.xlu0 1
    %183 = vperm.xlu0 %182, %v39
    %v184 = vpop.permute.xlu0 %183
    %186 = vset.pattern.permute.xlu0 1
    %187 = vperm.xlu0 %186, %v40
    %v188 = vpop.permute.xlu0 %187
    %190 = vset.pattern.permute.xlu0 1
    %191 = vperm.xlu0 %190, %v41
    %v192 = vpop.permute.xlu0 %191
    %194 = vset.pattern.permute.xlu0 1
    %195 = vperm.xlu0 %194, %v42
    %v196 = vpop.permute.xlu0 %195
    %198 = vset.pattern.permute.xlu0 1
    %199 = vperm.xlu0 %198, %v43
    %v200 = vpop.permute.xlu0 %199
    %202 = vset.pattern.permute.xlu0 1
    %203 = vperm.xlu0 %202, %v44
    %v204 = vpop.permute.xlu0 %203
    %206 = vset.pattern.permute.xlu0 1
    %207 = vperm.xlu0 %206, %v45
    %v208 = vpop.permute.xlu0 %207
    %v210 = vlaneseq
    %v211 = vshrl.u32 %v210, 7
    %v212 = vsub.s32 2, %v211
    %v213 = vrot.slane %v28, %v212
    %v214 = vmul.f32 %v148, %v213
    %v215 = vmul.f32 %v152, %v213
    %v216 = vmul.f32 %v156, %v213
    %v217 = vmul.f32 %v160, %v213
    %v218 = vmul.f32 %v164, %v213
    %v219 = vmul.f32 %v168, %v213
    %v220 = vmul.f32 %v172, %v213
    %v221 = vmul.f32 %v176, %v213
    %v222 = vmul.f32 %v180, %v213
    %v223 = vmul.f32 %v184, %v213
    %v224 = vmul.f32 %v188, %v213
    %v225 = vmul.f32 %v192, %v213
    %v226 = vmul.f32 %v196, %v213
    %v227 = vmul.f32 %v200, %v213
    %v228 = vmul.f32 %v204, %v213
    %v229 = vmul.f32 %v208, %v213
    %v230 = vadd.f32 %v130, %v214
    %v231 = vadd.f32 %v131, %v215
    %v232 = vadd.f32 %v132, %v216
    %v233 = vadd.f32 %v133, %v217
    %v234 = vadd.f32 %v134, %v218
    %v235 = vadd.f32 %v135, %v219
    %v236 = vadd.f32 %v136, %v220
    %v237 = vadd.f32 %v137, %v221
    %v238 = vadd.f32 %v138, %v222
    %v239 = vadd.f32 %v139, %v223
    %v240 = vadd.f32 %v140, %v224
    %v241 = vadd.f32 %v141, %v225
    %v242 = vadd.f32 %v142, %v226
    %v243 = vadd.f32 %v143, %v227
    %v244 = vadd.f32 %v144, %v228
    %v245 = vadd.f32 %v145, %v229
    %s246 = scalar_lea.vmem %s2, 640
    %v247 = vld [vmem:[%s246] sm:$0xff]
    %v248 = vld [vmem:[%s246 + $0x8] sm:$0xff]
    %v249 = vld [vmem:[%s246 + $0x10] sm:$0xff]
    %v250 = vld [vmem:[%s246 + $0x18] sm:$0xff]
    %v251 = vld [vmem:[%s246 + $0x20] sm:$0xff]
    %v252 = vld [vmem:[%s246 + $0x28] sm:$0xff]
    %v253 = vld [vmem:[%s246 + $0x30] sm:$0xff]
    %v254 = vld [vmem:[%s246 + $0x38] sm:$0xff]
    %v255 = vld [vmem:[%s246 + $0x40] sm:$0xff]
    %v256 = vld [vmem:[%s246 + $0x48] sm:$0xff]
    %v257 = vld [vmem:[%s246 + $0x50] sm:$0xff]
    %v258 = vld [vmem:[%s246 + $0x58] sm:$0xff]
    %v259 = vld [vmem:[%s246 + $0x60] sm:$0xff]
    %v260 = vld [vmem:[%s246 + $0x68] sm:$0xff]
    %v261 = vld [vmem:[%s246 + $0x70] sm:$0xff]
    %v262 = vld [vmem:[%s246 + $0x78] sm:$0xff]
    %264 = vset.pattern.permute.xlu0 0
    %265 = vperm.xlu0 %264, %v247
    %v266 = vpop.permute.xlu0 %265
    %269 = vset.pattern.permute.xlu0 0
    %270 = vperm.xlu0 %269, %v248
    %v271 = vpop.permute.xlu0 %270
    %274 = vset.pattern.permute.xlu0 0
    %275 = vperm.xlu0 %274, %v249
    %v276 = vpop.permute.xlu0 %275
    %279 = vset.pattern.permute.xlu0 0
    %280 = vperm.xlu0 %279, %v250
    %v281 = vpop.permute.xlu0 %280
    %284 = vset.pattern.permute.xlu0 0
    %285 = vperm.xlu0 %284, %v251
    %v286 = vpop.permute.xlu0 %285
    %289 = vset.pattern.permute.xlu0 0
    %290 = vperm.xlu0 %289, %v252
    %v291 = vpop.permute.xlu0 %290
    %294 = vset.pattern.permute.xlu0 0
    %295 = vperm.xlu0 %294, %v253
    %v296 = vpop.permute.xlu0 %295
    %299 = vset.pattern.permute.xlu0 0
    %300 = vperm.xlu0 %299, %v254
    %v301 = vpop.permute.xlu0 %300
    %304 = vset.pattern.permute.xlu0 0
    %305 = vperm.xlu0 %304, %v255
    %v306 = vpop.permute.xlu0 %305
    %309 = vset.pattern.permute.xlu0 0
    %310 = vperm.xlu0 %309, %v256
    %v311 = vpop.permute.xlu0 %310
    %314 = vset.pattern.permute.xlu0 0
    %315 = vperm.xlu0 %314, %v257
    %v316 = vpop.permute.xlu0 %315
    %319 = vset.pattern.permute.xlu0 0
    %320 = vperm.xlu0 %319, %v258
    %v321 = vpop.permute.xlu0 %320
    %324 = vset.pattern.permute.xlu0 0
    %325 = vperm.xlu0 %324, %v259
    %v326 = vpop.permute.xlu0 %325
    %329 = vset.pattern.permute.xlu0 0
    %330 = vperm.xlu0 %329, %v260
    %v331 = vpop.permute.xlu0 %330
    %334 = vset.pattern.permute.xlu0 0
    %335 = vperm.xlu0 %334, %v261
    %v336 = vpop.permute.xlu0 %335
    %339 = vset.pattern.permute.xlu0 0
    %340 = vperm.xlu0 %339, %v262
    %v341 = vpop.permute.xlu0 %340
    %v343 = vadd.f32 %v230, %v266
    %v344 = vadd.f32 %v231, %v271
    %v345 = vadd.f32 %v232, %v276
    %v346 = vadd.f32 %v233, %v281
    %v347 = vadd.f32 %v234, %v286
    %v348 = vadd.f32 %v235, %v291
    %v349 = vadd.f32 %v236, %v296
    %v350 = vadd.f32 %v237, %v301
    %v351 = vadd.f32 %v238, %v306
    %v352 = vadd.f32 %v239, %v311
    %v353 = vadd.f32 %v240, %v316
    %v354 = vadd.f32 %v241, %v321
    %v355 = vadd.f32 %v242, %v326
    %v356 = vadd.f32 %v243, %v331
    %v357 = vadd.f32 %v244, %v336
    %v358 = vadd.f32 %v245, %v341
    %v359 = vmul.f32 %v343, 0.01
    %v360 = vmul.f32 %v344, 0.01
    %v361 = vmul.f32 %v345, 0.01
    %v362 = vmul.f32 %v346, 0.01
    %v363 = vmul.f32 %v347, 0.01
    %v364 = vmul.f32 %v348, 0.01
    %v365 = vmul.f32 %v349, 0.01
    %v366 = vmul.f32 %v350, 0.01
    %v367 = vmul.f32 %v351, 0.01
    %v368 = vmul.f32 %v352, 0.01
    %v369 = vmul.f32 %v353, 0.01
    %v370 = vmul.f32 %v354, 0.01
    %v371 = vmul.f32 %v355, 0.01
    %v372 = vmul.f32 %v356, 0.01
    %v373 = vmul.f32 %v357, 0.01
    %v374 = vmul.f32 %v358, 0.01
    %v375 = vmax.f32 %v343, %v359
    %v376 = vmax.f32 %v344, %v360
    %v377 = vmax.f32 %v345, %v361
    %v378 = vmax.f32 %v346, %v362
    %v379 = vmax.f32 %v347, %v363
    %v380 = vmax.f32 %v348, %v364
    %v381 = vmax.f32 %v349, %v365
    %v382 = vmax.f32 %v350, %v366
    %v383 = vmax.f32 %v351, %v367
    %v384 = vmax.f32 %v352, %v368
    %v385 = vmax.f32 %v353, %v369
    %v386 = vmax.f32 %v354, %v370
    %v387 = vmax.f32 %v355, %v371
    %v388 = vmax.f32 %v356, %v372
    %v389 = vmax.f32 %v357, %v373
    %v390 = vmax.f32 %v358, %v374
    %v391 = vpack.c.bf16 %v376, %v375
    %v392 = vpack.c.bf16 %v378, %v377
    %v393 = vpack.c.bf16 %v380, %v379
    %v394 = vpack.c.bf16 %v382, %v381
    %v395 = vpack.c.bf16 %v384, %v383
    %v396 = vpack.c.bf16 %v386, %v385
    %v397 = vpack.c.bf16 %v388, %v387
    %v398 = vpack.c.bf16 %v390, %v389
    %s399 = scalar_lea.vmem %s3, 320
    %v400 = vld [vmem:[%s399] sm:$0xf]
    %v401 = vld [vmem:[%s399 + $0x4] sm:$0xf]
    %v402 = vld [vmem:[%s399 + $0x8] sm:$0xf]
    %v403 = vld [vmem:[%s399 + $0xc] sm:$0xf]
    %v404 = vld [vmem:[%s399 + $0x10] sm:$0xf]
    %v405 = vld [vmem:[%s399 + $0x14] sm:$0xf]
    %v406 = vld [vmem:[%s399 + $0x18] sm:$0xf]
    %v407 = vld [vmem:[%s399 + $0x1c] sm:$0xf]
    %v408 = vld [vmem:[%s399 + $0x20] sm:$0xf]
    %v409 = vld [vmem:[%s399 + $0x24] sm:$0xf]
    %v410 = vld [vmem:[%s399 + $0x28] sm:$0xf]
    %v411 = vld [vmem:[%s399 + $0x2c] sm:$0xf]
    %v412 = vld [vmem:[%s399 + $0x30] sm:$0xf]
    %v413 = vld [vmem:[%s399 + $0x34] sm:$0xf]
    %v414 = vld [vmem:[%s399 + $0x38] sm:$0xf]
    %v415 = vld [vmem:[%s399 + $0x3c] sm:$0xf]
    %s416 = scalar_lea.vmem %s4, 640
    %v417 = vld [vmem:[%s416] sm:$0xff]
    %v418 = vld [vmem:[%s416 + $0x8] sm:$0xff]
    %v419 = vld [vmem:[%s416 + $0x10] sm:$0xff]
    %v420 = vld [vmem:[%s416 + $0x18] sm:$0xff]
    %v421 = vld [vmem:[%s416 + $0x20] sm:$0xff]
    %v422 = vld [vmem:[%s416 + $0x28] sm:$0xff]
    %v423 = vld [vmem:[%s416 + $0x30] sm:$0xff]
    %v424 = vld [vmem:[%s416 + $0x38] sm:$0xff]
    %v425 = vld [vmem:[%s416 + $0x40] sm:$0xff]
    %v426 = vld [vmem:[%s416 + $0x48] sm:$0xff]
    %v427 = vld [vmem:[%s416 + $0x50] sm:$0xff]
    %v428 = vld [vmem:[%s416 + $0x58] sm:$0xff]
    %v429 = vld [vmem:[%s416 + $0x60] sm:$0xff]
    %v430 = vld [vmem:[%s416 + $0x68] sm:$0xff]
    %v431 = vld [vmem:[%s416 + $0x70] sm:$0xff]
    %v432 = vld [vmem:[%s416 + $0x78] sm:$0xff]
    %434 = vset.pattern.permute.xlu0 0
    %435 = vperm.xlu0 %434, %v417
    %v436 = vpop.permute.xlu0 %435
    %439 = vset.pattern.permute.xlu0 0
    %440 = vperm.xlu0 %439, %v418
    %v441 = vpop.permute.xlu0 %440
    %444 = vset.pattern.permute.xlu0 0
    %445 = vperm.xlu0 %444, %v419
    %v446 = vpop.permute.xlu0 %445
    %449 = vset.pattern.permute.xlu0 0
    %450 = vperm.xlu0 %449, %v420
    %v451 = vpop.permute.xlu0 %450
    %454 = vset.pattern.permute.xlu0 0
    %455 = vperm.xlu0 %454, %v421
    %v456 = vpop.permute.xlu0 %455
    %459 = vset.pattern.permute.xlu0 0
    %460 = vperm.xlu0 %459, %v422
    %v461 = vpop.permute.xlu0 %460
    %464 = vset.pattern.permute.xlu0 0
    %465 = vperm.xlu0 %464, %v423
    %v466 = vpop.permute.xlu0 %465
    %469 = vset.pattern.permute.xlu0 0
    %470 = vperm.xlu0 %469, %v424
    %v471 = vpop.permute.xlu0 %470
    %474 = vset.pattern.permute.xlu0 0
    %475 = vperm.xlu0 %474, %v425
    %v476 = vpop.permute.xlu0 %475
    %479 = vset.pattern.permute.xlu0 0
    %480 = vperm.xlu0 %479, %v426
    %v481 = vpop.permute.xlu0 %480
    %484 = vset.pattern.permute.xlu0 0
    %485 = vperm.xlu0 %484, %v427
    %v486 = vpop.permute.xlu0 %485
    %489 = vset.pattern.permute.xlu0 0
    %490 = vperm.xlu0 %489, %v428
    %v491 = vpop.permute.xlu0 %490
    %494 = vset.pattern.permute.xlu0 0
    %495 = vperm.xlu0 %494, %v429
    %v496 = vpop.permute.xlu0 %495
    %499 = vset.pattern.permute.xlu0 0
    %500 = vperm.xlu0 %499, %v430
    %v501 = vpop.permute.xlu0 %500
    %504 = vset.pattern.permute.xlu0 0
    %505 = vperm.xlu0 %504, %v431
    %v506 = vpop.permute.xlu0 %505
    %509 = vset.pattern.permute.xlu0 0
    %510 = vperm.xlu0 %509, %v432
    %v511 = vpop.permute.xlu0 %510
    %v529 = vunpack.c.l.b16 %v400
    %v530 = vunpack.c.l.b16 %v401
    %v531 = vunpack.c.l.b16 %v402
    %v532 = vunpack.c.l.b16 %v403
    %v533 = vunpack.c.l.b16 %v404
    %v534 = vunpack.c.l.b16 %v405
    %v535 = vunpack.c.l.b16 %v406
    %v536 = vunpack.c.l.b16 %v407
    %v537 = vunpack.c.l.b16 %v408
    %v538 = vunpack.c.l.b16 %v409
    %v539 = vunpack.c.l.b16 %v410
    %v540 = vunpack.c.l.b16 %v411
    %v541 = vunpack.c.l.b16 %v412
    %v542 = vunpack.c.l.b16 %v413
    %v543 = vunpack.c.l.b16 %v414
    %v544 = vunpack.c.l.b16 %v415
    %v545 = vpack.c.b16 %v530, %v529
    %v546 = vpack.c.b16 %v532, %v531
    %v547 = vpack.c.b16 %v534, %v533
    %v548 = vpack.c.b16 %v536, %v535
    %v549 = vpack.c.b16 %v538, %v537
    %v550 = vpack.c.b16 %v540, %v539
    %v551 = vpack.c.b16 %v542, %v541
    %v552 = vpack.c.b16 %v544, %v543
    %561 = vmatprep.subr.bf16.mxu0 0
    %562 = vmatpush1.bf16.msra.mxu0 %v398
    %563 = vmatprep.subr.bf16.mxu0 0
    %564 = vmatpush1.bf16.msra.mxu0 %v397
    %565 = vmatprep.subr.bf16.mxu0 0
    %566 = vmatpush1.bf16.msra.mxu0 %v396
    %567 = vmatprep.subr.bf16.mxu0 0
    %568 = vmatpush1.bf16.msra.mxu0 %v395
    %569 = vmatprep.subr.bf16.mxu0 0
    %570 = vmatpush1.bf16.msra.mxu0 %v394
    %571 = vmatprep.subr.bf16.mxu0 0
    %572 = vmatpush1.bf16.msra.mxu0 %v393
    %573 = vmatprep.subr.bf16.mxu0 0
    %574 = vmatpush1.bf16.msra.mxu0 %v392
    %575 = vmatprep.subr.bf16.mxu0 0
    %576 = vmatpush1.bf16.msra.mxu0 %v391
    %577 = vmatprep.subr.bf16.mxu0 0
    %578 = vmatpush2.bf16.msra.mxu0 0
    %579 = vmatprep.subr.bf16.mxu0 0
    %580 = vmatpush2.bf16.msra.mxu0 0
    %581 = vmatprep.subr.bf16.mxu0 0
    %582 = vmatpush2.bf16.msra.mxu0 0
    %583 = vmatprep.subr.bf16.mxu0 0
    %584 = vmatpush2.bf16.msra.mxu0 0
    %585 = vmatprep.subr.bf16.mxu0 0
    %586 = vmatpush2.bf16.msra.mxu0 0
    %587 = vmatprep.subr.bf16.mxu0 0
    %588 = vmatpush2.bf16.msra.mxu0 0
    %589 = vmatprep.subr.bf16.mxu0 0
    %590 = vmatpush2.bf16.msra.mxu0 0
    %591 = vmatprep.subr.bf16.mxu0 0
    %592 = vmatpush2.bf16.msra.mxu0 0
    %593 = vmatprep.mubr.bf16.mxu0 0
    %594 = vmatmul.mubr.bf16.gmra.mxu0 %v545
    %v595 = vpop.f32.mrf.mxu0
    %v596 = vadd.f32 %v436, %v595
    %v597 = vpop.f32.mrf.mxu0
    %v598 = vpop.f32.mrf.mxu0
    %v599 = vadd.f32 %v441, %v598
    %v600 = vpop.f32.mrf.mxu0
    %601 = vmatprep.mubr.bf16.mxu0 0
    %602 = vmatmul.mubr.bf16.gmra.mxu0 %v546
    %v603 = vpop.f32.mrf.mxu0
    %v604 = vadd.f32 %v446, %v603
    %v605 = vpop.f32.mrf.mxu0
    %v606 = vpop.f32.mrf.mxu0
    %v607 = vadd.f32 %v451, %v606
    %v608 = vpop.f32.mrf.mxu0
    %609 = vmatprep.mubr.bf16.mxu0 0
    %610 = vmatmul.mubr.bf16.gmra.mxu0 %v547
    %v611 = vpop.f32.mrf.mxu0
    %v612 = vadd.f32 %v456, %v611
    %v613 = vpop.f32.mrf.mxu0
    %v614 = vpop.f32.mrf.mxu0
    %v615 = vadd.f32 %v461, %v614
    %v616 = vpop.f32.mrf.mxu0
    %617 = vmatprep.mubr.bf16.mxu0 0
    %618 = vmatmul.mubr.bf16.gmra.mxu0 %v548
    %v619 = vpop.f32.mrf.mxu0
    %v620 = vadd.f32 %v466, %v619
    %v621 = vpop.f32.mrf.mxu0
    %v622 = vpop.f32.mrf.mxu0
    %v623 = vadd.f32 %v471, %v622
    %v624 = vpop.f32.mrf.mxu0
    %625 = vmatprep.mubr.bf16.mxu0 0
    %626 = vmatmul.mubr.bf16.gmra.mxu0 %v549
    %v627 = vpop.f32.mrf.mxu0
    %v628 = vadd.f32 %v476, %v627
    %v629 = vpop.f32.mrf.mxu0
    %v630 = vpop.f32.mrf.mxu0
    %v631 = vadd.f32 %v481, %v630
    %v632 = vpop.f32.mrf.mxu0
    %633 = vmatprep.mubr.bf16.mxu0 0
    %634 = vmatmul.mubr.bf16.gmra.mxu0 %v550
    %v635 = vpop.f32.mrf.mxu0
    %v636 = vadd.f32 %v486, %v635
    %v637 = vpop.f32.mrf.mxu0
    %v638 = vpop.f32.mrf.mxu0
    %v639 = vadd.f32 %v491, %v638
    %v640 = vpop.f32.mrf.mxu0
    %641 = vmatprep.mubr.bf16.mxu0 0
    %642 = vmatmul.mubr.bf16.gmra.mxu0 %v551
    %v643 = vpop.f32.mrf.mxu0
    %v644 = vadd.f32 %v496, %v643
    %v645 = vpop.f32.mrf.mxu0
    %v646 = vpop.f32.mrf.mxu0
    %v647 = vadd.f32 %v501, %v646
    %v648 = vpop.f32.mrf.mxu0
    %649 = vmatprep.mubr.bf16.mxu0 0
    %650 = vmatmul.mubr.bf16.gmra.mxu0 %v552
    %v651 = vpop.f32.mrf.mxu0
    %v652 = vadd.f32 %v506, %v651
    %v653 = vpop.f32.mrf.mxu0
    %v654 = vpop.f32.mrf.mxu0
    %v655 = vadd.f32 %v511, %v654
    %v656 = vpop.f32.mrf.mxu0
    %657 = vdwg.mxu0
    %v658 = vmul.f32 %v596, 0.01
    %v659 = vmul.f32 %v599, 0.01
    %v660 = vmul.f32 %v604, 0.01
    %v661 = vmul.f32 %v607, 0.01
    %v662 = vmul.f32 %v612, 0.01
    %v663 = vmul.f32 %v615, 0.01
    %v664 = vmul.f32 %v620, 0.01
    %v665 = vmul.f32 %v623, 0.01
    %v666 = vmul.f32 %v628, 0.01
    %v667 = vmul.f32 %v631, 0.01
    %v668 = vmul.f32 %v636, 0.01
    %v669 = vmul.f32 %v639, 0.01
    %v670 = vmul.f32 %v644, 0.01
    %v671 = vmul.f32 %v647, 0.01
    %v672 = vmul.f32 %v652, 0.01
    %v673 = vmul.f32 %v655, 0.01
    %v674 = vmax.f32 %v596, %v658
    %v675 = vmax.f32 %v599, %v659
    %v676 = vmax.f32 %v604, %v660
    %v677 = vmax.f32 %v607, %v661
    %v678 = vmax.f32 %v612, %v662
    %v679 = vmax.f32 %v615, %v663
    %v680 = vmax.f32 %v620, %v664
    %v681 = vmax.f32 %v623, %v665
    %v682 = vmax.f32 %v628, %v666
    %v683 = vmax.f32 %v631, %v667
    %v684 = vmax.f32 %v636, %v668
    %v685 = vmax.f32 %v639, %v669
    %v686 = vmax.f32 %v644, %v670
    %v687 = vmax.f32 %v647, %v671
    %v688 = vmax.f32 %v652, %v672
    %v689 = vmax.f32 %v655, %v673
    %v690 = vpack.c.bf16 %v675, %v674
    %v691 = vpack.c.bf16 %v677, %v676
    %v692 = vpack.c.bf16 %v679, %v678
    %v693 = vpack.c.bf16 %v681, %v680
    %v694 = vpack.c.bf16 %v683, %v682
    %v695 = vpack.c.bf16 %v685, %v684
    %v696 = vpack.c.bf16 %v687, %v686
    %v697 = vpack.c.bf16 %v689, %v688
    %s698 = scalar_lea.vmem %s5, 20
    %v699 = vld [vmem:[%s698] sm:$0xf]
    %s700 = scalar_lea.vmem %s6, 40
    %v701 = vld [vmem:[%s700] sm:$0xff]
    %703 = vset.pattern.permute.xlu0 0
    %704 = vperm.xlu0 %703, %v701
    %v705 = vpop.permute.xlu0 %704
    %707 = vmatprep.subr.bf16.mxu0 0
    %708 = vmatpush1.bf16.msra.mxu0 %v697
    %709 = vmatprep.subr.bf16.mxu0 0
    %710 = vmatpush1.bf16.msra.mxu0 %v696
    %711 = vmatprep.subr.bf16.mxu0 0
    %712 = vmatpush1.bf16.msra.mxu0 %v695
    %713 = vmatprep.subr.bf16.mxu0 0
    %714 = vmatpush1.bf16.msra.mxu0 %v694
    %715 = vmatprep.subr.bf16.mxu0 0
    %716 = vmatpush1.bf16.msra.mxu0 %v693
    %717 = vmatprep.subr.bf16.mxu0 0
    %718 = vmatpush1.bf16.msra.mxu0 %v692
    %719 = vmatprep.subr.bf16.mxu0 0
    %720 = vmatpush1.bf16.msra.mxu0 %v691
    %721 = vmatprep.subr.bf16.mxu0 0
    %722 = vmatpush1.bf16.msra.mxu0 %v690
    %723 = vmatprep.subr.bf16.mxu0 0
    %724 = vmatpush2.bf16.msra.mxu0 0
    %725 = vmatprep.subr.bf16.mxu0 0
    %726 = vmatpush2.bf16.msra.mxu0 0
    %727 = vmatprep.subr.bf16.mxu0 0
    %728 = vmatpush2.bf16.msra.mxu0 0
    %729 = vmatprep.subr.bf16.mxu0 0
    %730 = vmatpush2.bf16.msra.mxu0 0
    %731 = vmatprep.subr.bf16.mxu0 0
    %732 = vmatpush2.bf16.msra.mxu0 0
    %733 = vmatprep.subr.bf16.mxu0 0
    %734 = vmatpush2.bf16.msra.mxu0 0
    %735 = vmatprep.subr.bf16.mxu0 0
    %736 = vmatpush2.bf16.msra.mxu0 0
    %737 = vmatprep.subr.bf16.mxu0 0
    %738 = vmatpush2.bf16.msra.mxu0 0
    %739 = vmatprep.mubr.bf16.mxu0 0
    %740 = vmatmul.mubr.bf16.gmra.mxu0 %v699
    %v741 = vpop.f32.mrf.mxu0
    %v742 = vadd.f32 %v705, %v741
    %v743 = vpop.f32.mrf.mxu0
    %v744 = vpop.f32.mrf.mxu0
    %v745 = vpop.f32.mrf.mxu0
    %746 = vdwg.mxu0
    %v747 = vtanh.pop %v742
    %v748 = vsub.f32 %v28, %v742
    %v749 = vsub.f32 0.0, %v747
    %v750 = vmul.f32 %v749, 1.442695
    %v751 = vpow.pop %v750
    %v753 = vrot.slane %v751, 7
    %v755 = vmul.f32 %v748, %v753
    %s756 = scalar_lea.vmem %s1, 512
    %v757 = vld [vmem:[%s756] sm:$0xff]
    %v758 = vld [vmem:[%s756 + $0x8] sm:$0xff]
    %v759 = vld [vmem:[%s756 + $0x10] sm:$0xff]
    %v760 = vld [vmem:[%s756 + $0x18] sm:$0xff]
    %v761 = vld [vmem:[%s756 + $0x20] sm:$0xff]
    %v762 = vld [vmem:[%s756 + $0x28] sm:$0xff]
    %v763 = vld [vmem:[%s756 + $0x30] sm:$0xff]
    %v764 = vld [vmem:[%s756 + $0x38] sm:$0xff]
    %v765 = vld [vmem:[%s756 + $0x40] sm:$0xff]
    %v766 = vld [vmem:[%s756 + $0x48] sm:$0xff]
    %v767 = vld [vmem:[%s756 + $0x50] sm:$0xff]
    %v768 = vld [vmem:[%s756 + $0x58] sm:$0xff]
    %v769 = vld [vmem:[%s756 + $0x60] sm:$0xff]
    %v770 = vld [vmem:[%s756 + $0x68] sm:$0xff]
    %v771 = vld [vmem:[%s756 + $0x70] sm:$0xff]
    %v772 = vld [vmem:[%s756 + $0x78] sm:$0xff]
    %774 = vset.pattern.permute.xlu0 0
    %775 = vperm.xlu0 %774, %v757
    %v776 = vpop.permute.xlu0 %775
    %779 = vset.pattern.permute.xlu0 0
    %780 = vperm.xlu0 %779, %v758
    %v781 = vpop.permute.xlu0 %780
    %784 = vset.pattern.permute.xlu0 0
    %785 = vperm.xlu0 %784, %v759
    %v786 = vpop.permute.xlu0 %785
    %789 = vset.pattern.permute.xlu0 0
    %790 = vperm.xlu0 %789, %v760
    %v791 = vpop.permute.xlu0 %790
    %794 = vset.pattern.permute.xlu0 0
    %795 = vperm.xlu0 %794, %v761
    %v796 = vpop.permute.xlu0 %795
    %799 = vset.pattern.permute.xlu0 0
    %800 = vperm.xlu0 %799, %v762
    %v801 = vpop.permute.xlu0 %800
    %804 = vset.pattern.permute.xlu0 0
    %805 = vperm.xlu0 %804, %v763
    %v806 = vpop.permute.xlu0 %805
    %809 = vset.pattern.permute.xlu0 0
    %810 = vperm.xlu0 %809, %v764
    %v811 = vpop.permute.xlu0 %810
    %814 = vset.pattern.permute.xlu0 0
    %815 = vperm.xlu0 %814, %v765
    %v816 = vpop.permute.xlu0 %815
    %819 = vset.pattern.permute.xlu0 0
    %820 = vperm.xlu0 %819, %v766
    %v821 = vpop.permute.xlu0 %820
    %824 = vset.pattern.permute.xlu0 0
    %825 = vperm.xlu0 %824, %v767
    %v826 = vpop.permute.xlu0 %825
    %829 = vset.pattern.permute.xlu0 0
    %830 = vperm.xlu0 %829, %v768
    %v831 = vpop.permute.xlu0 %830
    %834 = vset.pattern.permute.xlu0 0
    %835 = vperm.xlu0 %834, %v769
    %v836 = vpop.permute.xlu0 %835
    %839 = vset.pattern.permute.xlu0 0
    %840 = vperm.xlu0 %839, %v770
    %v841 = vpop.permute.xlu0 %840
    %844 = vset.pattern.permute.xlu0 0
    %845 = vperm.xlu0 %844, %v771
    %v846 = vpop.permute.xlu0 %845
    %849 = vset.pattern.permute.xlu0 0
    %850 = vperm.xlu0 %849, %v772
    %v851 = vpop.permute.xlu0 %850
    %v853 = vlaneseq
    %v854 = vshrl.u32 %v853, 7
    %v855 = vsub.s32 1, %v854
    %v856 = vrot.slane %v755, %v855
    %v857 = vmul.f32 %v776, %v856
    %v858 = vmul.f32 %v781, %v856
    %v859 = vmul.f32 %v786, %v856
    %v860 = vmul.f32 %v791, %v856
    %v861 = vmul.f32 %v796, %v856
    %v862 = vmul.f32 %v801, %v856
    %v863 = vmul.f32 %v806, %v856
    %v864 = vmul.f32 %v811, %v856
    %v865 = vmul.f32 %v816, %v856
    %v866 = vmul.f32 %v821, %v856
    %v867 = vmul.f32 %v826, %v856
    %v868 = vmul.f32 %v831, %v856
    %v869 = vmul.f32 %v836, %v856
    %v870 = vmul.f32 %v841, %v856
    %v871 = vmul.f32 %v846, %v856
    %v872 = vmul.f32 %v851, %v856
    %873 = vset.pattern.permute.xlu0 1
    %874 = vperm.xlu0 %873, %v757
    %v875 = vpop.permute.xlu0 %874
    %877 = vset.pattern.permute.xlu0 1
    %878 = vperm.xlu0 %877, %v758
    %v879 = vpop.permute.xlu0 %878
    %881 = vset.pattern.permute.xlu0 1
    %882 = vperm.xlu0 %881, %v759
    %v883 = vpop.permute.xlu0 %882
    %885 = vset.pattern.permute.xlu0 1
    %886 = vperm.xlu0 %885, %v760
    %v887 = vpop.permute.xlu0 %886
    %889 = vset.pattern.permute.xlu0 1
    %890 = vperm.xlu0 %889, %v761
    %v891 = vpop.permute.xlu0 %890
    %893 = vset.pattern.permute.xlu0 1
    %894 = vperm.xlu0 %893, %v762
    %v895 = vpop.permute.xlu0 %894
    %897 = vset.pattern.permute.xlu0 1
    %898 = vperm.xlu0 %897, %v763
    %v899 = vpop.permute.xlu0 %898
    %901 = vset.pattern.permute.xlu0 1
    %902 = vperm.xlu0 %901, %v764
    %v903 = vpop.permute.xlu0 %902
    %905 = vset.pattern.permute.xlu0 1
    %906 = vperm.xlu0 %905, %v765
    %v907 = vpop.permute.xlu0 %906
    %909 = vset.pattern.permute.xlu0 1
    %910 = vperm.xlu0 %909, %v766
    %v911 = vpop.permute.xlu0 %910
    %913 = vset.pattern.permute.xlu0 1
    %914 = vperm.xlu0 %913, %v767
    %v915 = vpop.permute.xlu0 %914
    %917 = vset.pattern.permute.xlu0 1
    %918 = vperm.xlu0 %917, %v768
    %v919 = vpop.permute.xlu0 %918
    %921 = vset.pattern.permute.xlu0 1
    %922 = vperm.xlu0 %921, %v769
    %v923 = vpop.permute.xlu0 %922
    %925 = vset.pattern.permute.xlu0 1
    %926 = vperm.xlu0 %925, %v770
    %v927 = vpop.permute.xlu0 %926
    %929 = vset.pattern.permute.xlu0 1
    %930 = vperm.xlu0 %929, %v771
    %v931 = vpop.permute.xlu0 %930
    %933 = vset.pattern.permute.xlu0 1
    %934 = vperm.xlu0 %933, %v772
    %v935 = vpop.permute.xlu0 %934
    %v937 = vmul.f32 %v875, %v213
    %v938 = vmul.f32 %v879, %v213
    %v939 = vmul.f32 %v883, %v213
    %v940 = vmul.f32 %v887, %v213
    %v941 = vmul.f32 %v891, %v213
    %v942 = vmul.f32 %v895, %v213
    %v943 = vmul.f32 %v899, %v213
    %v944 = vmul.f32 %v903, %v213
    %v945 = vmul.f32 %v907, %v213
    %v946 = vmul.f32 %v911, %v213
    %v947 = vmul.f32 %v915, %v213
    %v948 = vmul.f32 %v919, %v213
    %v949 = vmul.f32 %v923, %v213
    %v950 = vmul.f32 %v927, %v213
    %v951 = vmul.f32 %v931, %v213
    %v952 = vmul.f32 %v935, %v213
    %v953 = vadd.f32 %v857, %v937
    %v954 = vadd.f32 %v858, %v938
    %v955 = vadd.f32 %v859, %v939
    %v956 = vadd.f32 %v860, %v940
    %v957 = vadd.f32 %v861, %v941
    %v958 = vadd.f32 %v862, %v942
    %v959 = vadd.f32 %v863, %v943
    %v960 = vadd.f32 %v864, %v944
    %v961 = vadd.f32 %v865, %v945
    %v962 = vadd.f32 %v866, %v946
    %v963 = vadd.f32 %v867, %v947
    %v964 = vadd.f32 %v868, %v948
    %v965 = vadd.f32 %v869, %v949
    %v966 = vadd.f32 %v870, %v950
    %v967 = vadd.f32 %v871, %v951
    %v968 = vadd.f32 %v872, %v952
    %s969 = scalar_lea.vmem %s2, 512
    %v970 = vld [vmem:[%s969] sm:$0xff]
    %v971 = vld [vmem:[%s969 + $0x8] sm:$0xff]
    %v972 = vld [vmem:[%s969 + $0x10] sm:$0xff]
    %v973 = vld [vmem:[%s969 + $0x18] sm:$0xff]
    %v974 = vld [vmem:[%s969 + $0x20] sm:$0xff]
    %v975 = vld [vmem:[%s969 + $0x28] sm:$0xff]
    %v976 = vld [vmem:[%s969 + $0x30] sm:$0xff]
    %v977 = vld [vmem:[%s969 + $0x38] sm:$0xff]
    %v978 = vld [vmem:[%s969 + $0x40] sm:$0xff]
    %v979 = vld [vmem:[%s969 + $0x48] sm:$0xff]
    %v980 = vld [vmem:[%s969 + $0x50] sm:$0xff]
    %v981 = vld [vmem:[%s969 + $0x58] sm:$0xff]
    %v982 = vld [vmem:[%s969 + $0x60] sm:$0xff]
    %v983 = vld [vmem:[%s969 + $0x68] sm:$0xff]
    %v984 = vld [vmem:[%s969 + $0x70] sm:$0xff]
    %v985 = vld [vmem:[%s969 + $0x78] sm:$0xff]
    %987 = vset.pattern.permute.xlu0 0
    %988 = vperm.xlu0 %987, %v970
    %v989 = vpop.permute.xlu0 %988
    %992 = vset.pattern.permute.xlu0 0
    %993 = vperm.xlu0 %992, %v971
    %v994 = vpop.permute.xlu0 %993
    %997 = vset.pattern.permute.xlu0 0
    %998 = vperm.xlu0 %997, %v972
    %v999 = vpop.permute.xlu0 %998
    %1002 = vset.pattern.permute.xlu0 0
    %1003 = vperm.xlu0 %1002, %v973
    %v1004 = vpop.permute.xlu0 %1003
    %1007 = vset.pattern.permute.xlu0 0
    %1008 = vperm.xlu0 %1007, %v974
    %v1009 = vpop.permute.xlu0 %1008
    %1012 = vset.pattern.permute.xlu0 0
    %1013 = vperm.xlu0 %1012, %v975
    %v1014 = vpop.permute.xlu0 %1013
    %1017 = vset.pattern.permute.xlu0 0
    %1018 = vperm.xlu0 %1017, %v976
    %v1019 = vpop.permute.xlu0 %1018
    %1022 = vset.pattern.permute.xlu0 0
    %1023 = vperm.xlu0 %1022, %v977
    %v1024 = vpop.permute.xlu0 %1023
    %1027 = vset.pattern.permute.xlu0 0
    %1028 = vperm.xlu0 %1027, %v978
    %v1029 = vpop.permute.xlu0 %1028
    %1032 = vset.pattern.permute.xlu0 0
    %1033 = vperm.xlu0 %1032, %v979
    %v1034 = vpop.permute.xlu0 %1033
    %1037 = vset.pattern.permute.xlu0 0
    %1038 = vperm.xlu0 %1037, %v980
    %v1039 = vpop.permute.xlu0 %1038
    %1042 = vset.pattern.permute.xlu0 0
    %1043 = vperm.xlu0 %1042, %v981
    %v1044 = vpop.permute.xlu0 %1043
    %1047 = vset.pattern.permute.xlu0 0
    %1048 = vperm.xlu0 %1047, %v982
    %v1049 = vpop.permute.xlu0 %1048
    %1052 = vset.pattern.permute.xlu0 0
    %1053 = vperm.xlu0 %1052, %v983
    %v1054 = vpop.permute.xlu0 %1053
    %1057 = vset.pattern.permute.xlu0 0
    %1058 = vperm.xlu0 %1057, %v984
    %v1059 = vpop.permute.xlu0 %1058
    %1062 = vset.pattern.permute.xlu0 0
    %1063 = vperm.xlu0 %1062, %v985
    %v1064 = vpop.permute.xlu0 %1063
    %v1066 = vadd.f32 %v953, %v989
    %v1067 = vadd.f32 %v954, %v994
    %v1068 = vadd.f32 %v955, %v999
    %v1069 = vadd.f32 %v956, %v1004
    %v1070 = vadd.f32 %v957, %v1009
    %v1071 = vadd.f32 %v958, %v1014
    %v1072 = vadd.f32 %v959, %v1019
    %v1073 = vadd.f32 %v960, %v1024
    %v1074 = vadd.f32 %v961, %v1029
    %v1075 = vadd.f32 %v962, %v1034
    %v1076 = vadd.f32 %v963, %v1039
    %v1077 = vadd.f32 %v964, %v1044
    %v1078 = vadd.f32 %v965, %v1049
    %v1079 = vadd.f32 %v966, %v1054
    %v1080 = vadd.f32 %v967, %v1059
    %v1081 = vadd.f32 %v968, %v1064
    %v1082 = vmul.f32 %v1066, 0.01
    %v1083 = vmul.f32 %v1067, 0.01
    %v1084 = vmul.f32 %v1068, 0.01
    %v1085 = vmul.f32 %v1069, 0.01
    %v1086 = vmul.f32 %v1070, 0.01
    %v1087 = vmul.f32 %v1071, 0.01
    %v1088 = vmul.f32 %v1072, 0.01
    %v1089 = vmul.f32 %v1073, 0.01
    %v1090 = vmul.f32 %v1074, 0.01
    %v1091 = vmul.f32 %v1075, 0.01
    %v1092 = vmul.f32 %v1076, 0.01
    %v1093 = vmul.f32 %v1077, 0.01
    %v1094 = vmul.f32 %v1078, 0.01
    %v1095 = vmul.f32 %v1079, 0.01
    %v1096 = vmul.f32 %v1080, 0.01
    %v1097 = vmul.f32 %v1081, 0.01
    %v1098 = vmax.f32 %v1066, %v1082
    %v1099 = vmax.f32 %v1067, %v1083
    %v1100 = vmax.f32 %v1068, %v1084
    %v1101 = vmax.f32 %v1069, %v1085
    %v1102 = vmax.f32 %v1070, %v1086
    %v1103 = vmax.f32 %v1071, %v1087
    %v1104 = vmax.f32 %v1072, %v1088
    %v1105 = vmax.f32 %v1073, %v1089
    %v1106 = vmax.f32 %v1074, %v1090
    %v1107 = vmax.f32 %v1075, %v1091
    %v1108 = vmax.f32 %v1076, %v1092
    %v1109 = vmax.f32 %v1077, %v1093
    %v1110 = vmax.f32 %v1078, %v1094
    %v1111 = vmax.f32 %v1079, %v1095
    %v1112 = vmax.f32 %v1080, %v1096
    %v1113 = vmax.f32 %v1081, %v1097
    %v1114 = vpack.c.bf16 %v1099, %v1098
    %v1115 = vpack.c.bf16 %v1101, %v1100
    %v1116 = vpack.c.bf16 %v1103, %v1102
    %v1117 = vpack.c.bf16 %v1105, %v1104
    %v1118 = vpack.c.bf16 %v1107, %v1106
    %v1119 = vpack.c.bf16 %v1109, %v1108
    %v1120 = vpack.c.bf16 %v1111, %v1110
    %v1121 = vpack.c.bf16 %v1113, %v1112
    %s1122 = scalar_lea.vmem %s3, 256
    %v1123 = vld [vmem:[%s1122] sm:$0xf]
    %v1124 = vld [vmem:[%s1122 + $0x4] sm:$0xf]
    %v1125 = vld [vmem:[%s1122 + $0x8] sm:$0xf]
    %v1126 = vld [vmem:[%s1122 + $0xc] sm:$0xf]
    %v1127 = vld [vmem:[%s1122 + $0x10] sm:$0xf]
    %v1128 = vld [vmem:[%s1122 + $0x14] sm:$0xf]
    %v1129 = vld [vmem:[%s1122 + $0x18] sm:$0xf]
    %v1130 = vld [vmem:[%s1122 + $0x1c] sm:$0xf]
    %v1131 = vld [vmem:[%s1122 + $0x20] sm:$0xf]
    %v1132 = vld [vmem:[%s1122 + $0x24] sm:$0xf]
    %v1133 = vld [vmem:[%s1122 + $0x28] sm:$0xf]
    %v1134 = vld [vmem:[%s1122 + $0x2c] sm:$0xf]
    %v1135 = vld [vmem:[%s1122 + $0x30] sm:$0xf]
    %v1136 = vld [vmem:[%s1122 + $0x34] sm:$0xf]
    %v1137 = vld [vmem:[%s1122 + $0x38] sm:$0xf]
    %v1138 = vld [vmem:[%s1122 + $0x3c] sm:$0xf]
    %s1139 = scalar_lea.vmem %s4, 512
    %v1140 = vld [vmem:[%s1139] sm:$0xff]
    %v1141 = vld [vmem:[%s1139 + $0x8] sm:$0xff]
    %v1142 = vld [vmem:[%s1139 + $0x10] sm:$0xff]
    %v1143 = vld [vmem:[%s1139 + $0x18] sm:$0xff]
    %v1144 = vld [vmem:[%s1139 + $0x20] sm:$0xff]
    %v1145 = vld [vmem:[%s1139 + $0x28] sm:$0xff]
    %v1146 = vld [vmem:[%s1139 + $0x30] sm:$0xff]
    %v1147 = vld [vmem:[%s1139 + $0x38] sm:$0xff]
    %v1148 = vld [vmem:[%s1139 + $0x40] sm:$0xff]
    %v1149 = vld [vmem:[%s1139 + $0x48] sm:$0xff]
    %v1150 = vld [vmem:[%s1139 + $0x50] sm:$0xff]
    %v1151 = vld [vmem:[%s1139 + $0x58] sm:$0xff]
    %v1152 = vld [vmem:[%s1139 + $0x60] sm:$0xff]
    %v1153 = vld [vmem:[%s1139 + $0x68] sm:$0xff]
    %v1154 = vld [vmem:[%s1139 + $0x70] sm:$0xff]
    %v1155 = vld [vmem:[%s1139 + $0x78] sm:$0xff]
    %1157 = vset.pattern.permute.xlu0 0
    %1158 = vperm.xlu0 %1157, %v1140
    %v1159 = vpop.permute.xlu0 %1158
    %1162 = vset.pattern.permute.xlu0 0
    %1163 = vperm.xlu0 %1162, %v1141
    %v1164 = vpop.permute.xlu0 %1163
    %1167 = vset.pattern.permute.xlu0 0
    %1168 = vperm.xlu0 %1167, %v1142
    %v1169 = vpop.permute.xlu0 %1168
    %1172 = vset.pattern.permute.xlu0 0
    %1173 = vperm.xlu0 %1172, %v1143
    %v1174 = vpop.permute.xlu0 %1173
    %1177 = vset.pattern.permute.xlu0 0
    %1178 = vperm.xlu0 %1177, %v1144
    %v1179 = vpop.permute.xlu0 %1178
    %1182 = vset.pattern.permute.xlu0 0
    %1183 = vperm.xlu0 %1182, %v1145
    %v1184 = vpop.permute.xlu0 %1183
    %1187 = vset.pattern.permute.xlu0 0
    %1188 = vperm.xlu0 %1187, %v1146
    %v1189 = vpop.permute.xlu0 %1188
    %1192 = vset.pattern.permute.xlu0 0
    %1193 = vperm.xlu0 %1192, %v1147
    %v1194 = vpop.permute.xlu0 %1193
    %1197 = vset.pattern.permute.xlu0 0
    %1198 = vperm.xlu0 %1197, %v1148
    %v1199 = vpop.permute.xlu0 %1198
    %1202 = vset.pattern.permute.xlu0 0
    %1203 = vperm.xlu0 %1202, %v1149
    %v1204 = vpop.permute.xlu0 %1203
    %1207 = vset.pattern.permute.xlu0 0
    %1208 = vperm.xlu0 %1207, %v1150
    %v1209 = vpop.permute.xlu0 %1208
    %1212 = vset.pattern.permute.xlu0 0
    %1213 = vperm.xlu0 %1212, %v1151
    %v1214 = vpop.permute.xlu0 %1213
    %1217 = vset.pattern.permute.xlu0 0
    %1218 = vperm.xlu0 %1217, %v1152
    %v1219 = vpop.permute.xlu0 %1218
    %1222 = vset.pattern.permute.xlu0 0
    %1223 = vperm.xlu0 %1222, %v1153
    %v1224 = vpop.permute.xlu0 %1223
    %1227 = vset.pattern.permute.xlu0 0
    %1228 = vperm.xlu0 %1227, %v1154
    %v1229 = vpop.permute.xlu0 %1228
    %1232 = vset.pattern.permute.xlu0 0
    %1233 = vperm.xlu0 %1232, %v1155
    %v1234 = vpop.permute.xlu0 %1233
    %v1252 = vunpack.c.l.b16 %v1123
    %v1253 = vunpack.c.l.b16 %v1124
    %v1254 = vunpack.c.l.b16 %v1125
    %v1255 = vunpack.c.l.b16 %v1126
    %v1256 = vunpack.c.l.b16 %v1127
    %v1257 = vunpack.c.l.b16 %v1128
    %v1258 = vunpack.c.l.b16 %v1129
    %v1259 = vunpack.c.l.b16 %v1130
    %v1260 = vunpack.c.l.b16 %v1131
    %v1261 = vunpack.c.l.b16 %v1132
    %v1262 = vunpack.c.l.b16 %v1133
    %v1263 = vunpack.c.l.b16 %v1134
    %v1264 = vunpack.c.l.b16 %v1135
    %v1265 = vunpack.c.l.b16 %v1136
    %v1266 = vunpack.c.l.b16 %v1137
    %v1267 = vunpack.c.l.b16 %v1138
    %v1268 = vpack.c.b16 %v1253, %v1252
    %v1269 = vpack.c.b16 %v1255, %v1254
    %v1270 = vpack.c.b16 %v1257, %v1256
    %v1271 = vpack.c.b16 %v1259, %v1258
    %v1272 = vpack.c.b16 %v1261, %v1260
    %v1273 = vpack.c.b16 %v1263, %v1262
    %v1274 = vpack.c.b16 %v1265, %v1264
    %v1275 = vpack.c.b16 %v1267, %v1266
    %1284 = vmatprep.subr.bf16.mxu0 0
    %1285 = vmatpush1.bf16.msra.mxu0 %v1121
    %1286 = vmatprep.subr.bf16.mxu0 0
    %1287 = vmatpush1.bf16.msra.mxu0 %v1120
    %1288 = vmatprep.subr.bf16.mxu0 0
    %1289 = vmatpush1.bf16.msra.mxu0 %v1119
    %1290 = vmatprep.subr.bf16.mxu0 0
    %1291 = vmatpush1.bf16.msra.mxu0 %v1118
    %1292 = vmatprep.subr.bf16.mxu0 0
    %1293 = vmatpush1.bf16.msra.mxu0 %v1117
    %1294 = vmatprep.subr.bf16.mxu0 0
    %1295 = vmatpush1.bf16.msra.mxu0 %v1116
    %1296 = vmatprep.subr.bf16.mxu0 0
    %1297 = vmatpush1.bf16.msra.mxu0 %v1115
    %1298 = vmatprep.subr.bf16.mxu0 0
    %1299 = vmatpush1.bf16.msra.mxu0 %v1114
    %1300 = vmatprep.subr.bf16.mxu0 0
    %1301 = vmatpush2.bf16.msra.mxu0 0
    %1302 = vmatprep.subr.bf16.mxu0 0
    %1303 = vmatpush2.bf16.msra.mxu0 0
    %1304 = vmatprep.subr.bf16.mxu0 0
    %1305 = vmatpush2.bf16.msra.mxu0 0
    %1306 = vmatprep.subr.bf16.mxu0 0
    %1307 = vmatpush2.bf16.msra.mxu0 0
    %1308 = vmatprep.subr.bf16.mxu0 0
    %1309 = vmatpush2.bf16.msra.mxu0 0
    %1310 = vmatprep.subr.bf16.mxu0 0
    %1311 = vmatpush2.bf16.msra.mxu0 0
    %1312 = vmatprep.subr.bf16.mxu0 0
    %1313 = vmatpush2.bf16.msra.mxu0 0
    %1314 = vmatprep.subr.bf16.mxu0 0
    %1315 = vmatpush2.bf16.msra.mxu0 0
    %1316 = vmatprep.mubr.bf16.mxu0 0
    %1317 = vmatmul.mubr.bf16.gmra.mxu0 %v1268
    %v1318 = vpop.f32.mrf.mxu0
    %v1319 = vadd.f32 %v1159, %v1318
    %v1320 = vpop.f32.mrf.mxu0
    %v1321 = vpop.f32.mrf.mxu0
    %v1322 = vadd.f32 %v1164, %v1321
    %v1323 = vpop.f32.mrf.mxu0
    %1324 = vmatprep.mubr.bf16.mxu0 0
    %1325 = vmatmul.mubr.bf16.gmra.mxu0 %v1269
    %v1326 = vpop.f32.mrf.mxu0
    %v1327 = vadd.f32 %v1169, %v1326
    %v1328 = vpop.f32.mrf.mxu0
    %v1329 = vpop.f32.mrf.mxu0
    %v1330 = vadd.f32 %v1174, %v1329
    %v1331 = vpop.f32.mrf.mxu0
    %1332 = vmatprep.mubr.bf16.mxu0 0
    %1333 = vmatmul.mubr.bf16.gmra.mxu0 %v1270
    %v1334 = vpop.f32.mrf.mxu0
    %v1335 = vadd.f32 %v1179, %v1334
    %v1336 = vpop.f32.mrf.mxu0
    %v1337 = vpop.f32.mrf.mxu0
    %v1338 = vadd.f32 %v1184, %v1337
    %v1339 = vpop.f32.mrf.mxu0
    %1340 = vmatprep.mubr.bf16.mxu0 0
    %1341 = vmatmul.mubr.bf16.gmra.mxu0 %v1271
    %v1342 = vpop.f32.mrf.mxu0
    %v1343 = vadd.f32 %v1189, %v1342
    %v1344 = vpop.f32.mrf.mxu0
    %v1345 = vpop.f32.mrf.mxu0
    %v1346 = vadd.f32 %v1194, %v1345
    %v1347 = vpop.f32.mrf.mxu0
    %1348 = vmatprep.mubr.bf16.mxu0 0
    %1349 = vmatmul.mubr.bf16.gmra.mxu0 %v1272
    %v1350 = vpop.f32.mrf.mxu0
    %v1351 = vadd.f32 %v1199, %v1350
    %v1352 = vpop.f32.mrf.mxu0
    %v1353 = vpop.f32.mrf.mxu0
    %v1354 = vadd.f32 %v1204, %v1353
    %v1355 = vpop.f32.mrf.mxu0
    %1356 = vmatprep.mubr.bf16.mxu0 0
    %1357 = vmatmul.mubr.bf16.gmra.mxu0 %v1273
    %v1358 = vpop.f32.mrf.mxu0
    %v1359 = vadd.f32 %v1209, %v1358
    %v1360 = vpop.f32.mrf.mxu0
    %v1361 = vpop.f32.mrf.mxu0
    %v1362 = vadd.f32 %v1214, %v1361
    %v1363 = vpop.f32.mrf.mxu0
    %1364 = vmatprep.mubr.bf16.mxu0 0
    %1365 = vmatmul.mubr.bf16.gmra.mxu0 %v1274
    %v1366 = vpop.f32.mrf.mxu0
    %v1367 = vadd.f32 %v1219, %v1366
    %v1368 = vpop.f32.mrf.mxu0
    %v1369 = vpop.f32.mrf.mxu0
    %v1370 = vadd.f32 %v1224, %v1369
    %v1371 = vpop.f32.mrf.mxu0
    %1372 = vmatprep.mubr.bf16.mxu0 0
    %1373 = vmatmul.mubr.bf16.gmra.mxu0 %v1275
    %v1374 = vpop.f32.mrf.mxu0
    %v1375 = vadd.f32 %v1229, %v1374
    %v1376 = vpop.f32.mrf.mxu0
    %v1377 = vpop.f32.mrf.mxu0
    %v1378 = vadd.f32 %v1234, %v1377
    %v1379 = vpop.f32.mrf.mxu0
    %1380 = vdwg.mxu0
    %v1381 = vmul.f32 %v1319, 0.01
    %v1382 = vmul.f32 %v1322, 0.01
    %v1383 = vmul.f32 %v1327, 0.01
    %v1384 = vmul.f32 %v1330, 0.01
    %v1385 = vmul.f32 %v1335, 0.01
    %v1386 = vmul.f32 %v1338, 0.01
    %v1387 = vmul.f32 %v1343, 0.01
    %v1388 = vmul.f32 %v1346, 0.01
    %v1389 = vmul.f32 %v1351, 0.01
    %v1390 = vmul.f32 %v1354, 0.01
    %v1391 = vmul.f32 %v1359, 0.01
    %v1392 = vmul.f32 %v1362, 0.01
    %v1393 = vmul.f32 %v1367, 0.01
    %v1394 = vmul.f32 %v1370, 0.01
    %v1395 = vmul.f32 %v1375, 0.01
    %v1396 = vmul.f32 %v1378, 0.01
    %v1397 = vmax.f32 %v1319, %v1381
    %v1398 = vmax.f32 %v1322, %v1382
    %v1399 = vmax.f32 %v1327, %v1383
    %v1400 = vmax.f32 %v1330, %v1384
    %v1401 = vmax.f32 %v1335, %v1385
    %v1402 = vmax.f32 %v1338, %v1386
    %v1403 = vmax.f32 %v1343, %v1387
    %v1404 = vmax.f32 %v1346, %v1388
    %v1405 = vmax.f32 %v1351, %v1389
    %v1406 = vmax.f32 %v1354, %v1390
    %v1407 = vmax.f32 %v1359, %v1391
    %v1408 = vmax.f32 %v1362, %v1392
    %v1409 = vmax.f32 %v1367, %v1393
    %v1410 = vmax.f32 %v1370, %v1394
    %v1411 = vmax.f32 %v1375, %v1395
    %v1412 = vmax.f32 %v1378, %v1396
    %v1413 = vpack.c.bf16 %v1398, %v1397
    %v1414 = vpack.c.bf16 %v1400, %v1399
    %v1415 = vpack.c.bf16 %v1402, %v1401
    %v1416 = vpack.c.bf16 %v1404, %v1403
    %v1417 = vpack.c.bf16 %v1406, %v1405
    %v1418 = vpack.c.bf16 %v1408, %v1407
    %v1419 = vpack.c.bf16 %v1410, %v1409
    %v1420 = vpack.c.bf16 %v1412, %v1411
    %s1421 = scalar_lea.vmem %s5, 16
    %v1422 = vld [vmem:[%s1421] sm:$0xf]
    %s1423 = scalar_lea.vmem %s6, 32
    %v1424 = vld [vmem:[%s1423] sm:$0xff]
    %1426 = vset.pattern.permute.xlu0 0
    %1427 = vperm.xlu0 %1426, %v1424
    %v1428 = vpop.permute.xlu0 %1427
    %1430 = vmatprep.subr.bf16.mxu0 0
    %1431 = vmatpush1.bf16.msra.mxu0 %v1420
    %1432 = vmatprep.subr.bf16.mxu0 0
    %1433 = vmatpush1.bf16.msra.mxu0 %v1419
    %1434 = vmatprep.subr.bf16.mxu0 0
    %1435 = vmatpush1.bf16.msra.mxu0 %v1418
    %1436 = vmatprep.subr.bf16.mxu0 0
    %1437 = vmatpush1.bf16.msra.mxu0 %v1417
    %1438 = vmatprep.subr.bf16.mxu0 0
    %1439 = vmatpush1.bf16.msra.mxu0 %v1416
    %1440 = vmatprep.subr.bf16.mxu0 0
    %1441 = vmatpush1.bf16.msra.mxu0 %v1415
    %1442 = vmatprep.subr.bf16.mxu0 0
    %1443 = vmatpush1.bf16.msra.mxu0 %v1414
    %1444 = vmatprep.subr.bf16.mxu0 0
    %1445 = vmatpush1.bf16.msra.mxu0 %v1413
    %1446 = vmatprep.subr.bf16.mxu0 0
    %1447 = vmatpush2.bf16.msra.mxu0 0
    %1448 = vmatprep.subr.bf16.mxu0 0
    %1449 = vmatpush2.bf16.msra.mxu0 0
    %1450 = vmatprep.subr.bf16.mxu0 0
    %1451 = vmatpush2.bf16.msra.mxu0 0
    %1452 = vmatprep.subr.bf16.mxu0 0
    %1453 = vmatpush2.bf16.msra.mxu0 0
    %1454 = vmatprep.subr.bf16.mxu0 0
    %1455 = vmatpush2.bf16.msra.mxu0 0
    %1456 = vmatprep.subr.bf16.mxu0 0
    %1457 = vmatpush2.bf16.msra.mxu0 0
    %1458 = vmatprep.subr.bf16.mxu0 0
    %1459 = vmatpush2.bf16.msra.mxu0 0
    %1460 = vmatprep.subr.bf16.mxu0 0
    %1461 = vmatpush2.bf16.msra.mxu0 0
    %1462 = vmatprep.mubr.bf16.mxu0 0
    %1463 = vmatmul.mubr.bf16.gmra.mxu0 %v1422
    %v1464 = vpop.f32.mrf.mxu0
    %v1465 = vadd.f32 %v1428, %v1464
    %v1466 = vpop.f32.mrf.mxu0
    %v1467 = vpop.f32.mrf.mxu0
    %v1468 = vpop.f32.mrf.mxu0
    %1469 = vdwg.mxu0
    %v1470 = vtanh.pop %v1465
    %v1472 = vrot.slane %v1465, 1
    %v1474 = vsub.f32 %v28, %v1472
    %v1475 = vsub.f32 0.0, %v1470
    %v1476 = vmul.f32 %v1475, 1.442695
    %v1477 = vpow.pop %v1476
    %v1478 = vmul.f32 %v1474, %v1477
    %v1479 = vsub.f32 %v749, %v1470
    %s1480 = scalar_lea.vmem %s1, 384
    %v1481 = vld [vmem:[%s1480] sm:$0xff]
    %v1482 = vld [vmem:[%s1480 + $0x8] sm:$0xff]
    %v1483 = vld [vmem:[%s1480 + $0x10] sm:$0xff]
    %v1484 = vld [vmem:[%s1480 + $0x18] sm:$0xff]
    %v1485 = vld [vmem:[%s1480 + $0x20] sm:$0xff]
    %v1486 = vld [vmem:[%s1480 + $0x28] sm:$0xff]
    %v1487 = vld [vmem:[%s1480 + $0x30] sm:$0xff]
    %v1488 = vld [vmem:[%s1480 + $0x38] sm:$0xff]
    %v1489 = vld [vmem:[%s1480 + $0x40] sm:$0xff]
    %v1490 = vld [vmem:[%s1480 + $0x48] sm:$0xff]
    %v1491 = vld [vmem:[%s1480 + $0x50] sm:$0xff]
    %v1492 = vld [vmem:[%s1480 + $0x58] sm:$0xff]
    %v1493 = vld [vmem:[%s1480 + $0x60] sm:$0xff]
    %v1494 = vld [vmem:[%s1480 + $0x68] sm:$0xff]
    %v1495 = vld [vmem:[%s1480 + $0x70] sm:$0xff]
    %v1496 = vld [vmem:[%s1480 + $0x78] sm:$0xff]
    %1498 = vset.pattern.permute.xlu0 0
    %1499 = vperm.xlu0 %1498, %v1481
    %v1500 = vpop.permute.xlu0 %1499
    %1503 = vset.pattern.permute.xlu0 0
    %1504 = vperm.xlu0 %1503, %v1482
    %v1505 = vpop.permute.xlu0 %1504
    %1508 = vset.pattern.permute.xlu0 0
    %1509 = vperm.xlu0 %1508, %v1483
    %v1510 = vpop.permute.xlu0 %1509
    %1513 = vset.pattern.permute.xlu0 0
    %1514 = vperm.xlu0 %1513, %v1484
    %v1515 = vpop.permute.xlu0 %1514
    %1518 = vset.pattern.permute.xlu0 0
    %1519 = vperm.xlu0 %1518, %v1485
    %v1520 = vpop.permute.xlu0 %1519
    %1523 = vset.pattern.permute.xlu0 0
    %1524 = vperm.xlu0 %1523, %v1486
    %v1525 = vpop.permute.xlu0 %1524
    %1528 = vset.pattern.permute.xlu0 0
    %1529 = vperm.xlu0 %1528, %v1487
    %v1530 = vpop.permute.xlu0 %1529
    %1533 = vset.pattern.permute.xlu0 0
    %1534 = vperm.xlu0 %1533, %v1488
    %v1535 = vpop.permute.xlu0 %1534
    %1538 = vset.pattern.permute.xlu0 0
    %1539 = vperm.xlu0 %1538, %v1489
    %v1540 = vpop.permute.xlu0 %1539
    %1543 = vset.pattern.permute.xlu0 0
    %1544 = vperm.xlu0 %1543, %v1490
    %v1545 = vpop.permute.xlu0 %1544
    %1548 = vset.pattern.permute.xlu0 0
    %1549 = vperm.xlu0 %1548, %v1491
    %v1550 = vpop.permute.xlu0 %1549
    %1553 = vset.pattern.permute.xlu0 0
    %1554 = vperm.xlu0 %1553, %v1492
    %v1555 = vpop.permute.xlu0 %1554
    %1558 = vset.pattern.permute.xlu0 0
    %1559 = vperm.xlu0 %1558, %v1493
    %v1560 = vpop.permute.xlu0 %1559
    %1563 = vset.pattern.permute.xlu0 0
    %1564 = vperm.xlu0 %1563, %v1494
    %v1565 = vpop.permute.xlu0 %1564
    %1568 = vset.pattern.permute.xlu0 0
    %1569 = vperm.xlu0 %1568, %v1495
    %v1570 = vpop.permute.xlu0 %1569
    %1573 = vset.pattern.permute.xlu0 0
    %1574 = vperm.xlu0 %1573, %v1496
    %v1575 = vpop.permute.xlu0 %1574
    %v1577 = vlaneseq
    %v1578 = vshrl.u32 %v1577, 7
    %v1579 = vsub.s32 0, %v1578
    %v1580 = vrot.slane %v1478, %v1579
    %v1581 = vmul.f32 %v1500, %v1580
    %v1582 = vmul.f32 %v1505, %v1580
    %v1583 = vmul.f32 %v1510, %v1580
    %v1584 = vmul.f32 %v1515, %v1580
    %v1585 = vmul.f32 %v1520, %v1580
    %v1586 = vmul.f32 %v1525, %v1580
    %v1587 = vmul.f32 %v1530, %v1580
    %v1588 = vmul.f32 %v1535, %v1580
    %v1589 = vmul.f32 %v1540, %v1580
    %v1590 = vmul.f32 %v1545, %v1580
    %v1591 = vmul.f32 %v1550, %v1580
    %v1592 = vmul.f32 %v1555, %v1580
    %v1593 = vmul.f32 %v1560, %v1580
    %v1594 = vmul.f32 %v1565, %v1580
    %v1595 = vmul.f32 %v1570, %v1580
    %v1596 = vmul.f32 %v1575, %v1580
    %1597 = vset.pattern.permute.xlu0 1
    %1598 = vperm.xlu0 %1597, %v1481
    %v1599 = vpop.permute.xlu0 %1598
    %1601 = vset.pattern.permute.xlu0 1
    %1602 = vperm.xlu0 %1601, %v1482
    %v1603 = vpop.permute.xlu0 %1602
    %1605 = vset.pattern.permute.xlu0 1
    %1606 = vperm.xlu0 %1605, %v1483
    %v1607 = vpop.permute.xlu0 %1606
    %1609 = vset.pattern.permute.xlu0 1
    %1610 = vperm.xlu0 %1609, %v1484
    %v1611 = vpop.permute.xlu0 %1610
    %1613 = vset.pattern.permute.xlu0 1
    %1614 = vperm.xlu0 %1613, %v1485
    %v1615 = vpop.permute.xlu0 %1614
    %1617 = vset.pattern.permute.xlu0 1
    %1618 = vperm.xlu0 %1617, %v1486
    %v1619 = vpop.permute.xlu0 %1618
    %1621 = vset.pattern.permute.xlu0 1
    %1622 = vperm.xlu0 %1621, %v1487
    %v1623 = vpop.permute.xlu0 %1622
    %1625 = vset.pattern.permute.xlu0 1
    %1626 = vperm.xlu0 %1625, %v1488
    %v1627 = vpop.permute.xlu0 %1626
    %1629 = vset.pattern.permute.xlu0 1
    %1630 = vperm.xlu0 %1629, %v1489
    %v1631 = vpop.permute.xlu0 %1630
    %1633 = vset.pattern.permute.xlu0 1
    %1634 = vperm.xlu0 %1633, %v1490
    %v1635 = vpop.permute.xlu0 %1634
    %1637 = vset.pattern.permute.xlu0 1
    %1638 = vperm.xlu0 %1637, %v1491
    %v1639 = vpop.permute.xlu0 %1638
    %1641 = vset.pattern.permute.xlu0 1
    %1642 = vperm.xlu0 %1641, %v1492
    %v1643 = vpop.permute.xlu0 %1642
    %1645 = vset.pattern.permute.xlu0 1
    %1646 = vperm.xlu0 %1645, %v1493
    %v1647 = vpop.permute.xlu0 %1646
    %1649 = vset.pattern.permute.xlu0 1
    %1650 = vperm.xlu0 %1649, %v1494
    %v1651 = vpop.permute.xlu0 %1650
    %1653 = vset.pattern.permute.xlu0 1
    %1654 = vperm.xlu0 %1653, %v1495
    %v1655 = vpop.permute.xlu0 %1654
    %1657 = vset.pattern.permute.xlu0 1
    %1658 = vperm.xlu0 %1657, %v1496
    %v1659 = vpop.permute.xlu0 %1658
    %v1661 = vmul.f32 %v1599, %v856
    %v1662 = vmul.f32 %v1603, %v856
    %v1663 = vmul.f32 %v1607, %v856
    %v1664 = vmul.f32 %v1611, %v856
    %v1665 = vmul.f32 %v1615, %v856
    %v1666 = vmul.f32 %v1619, %v856
    %v1667 = vmul.f32 %v1623, %v856
    %v1668 = vmul.f32 %v1627, %v856
    %v1669 = vmul.f32 %v1631, %v856
    %v1670 = vmul.f32 %v1635, %v856
    %v1671 = vmul.f32 %v1639, %v856
    %v1672 = vmul.f32 %v1643, %v856
    %v1673 = vmul.f32 %v1647, %v856
    %v1674 = vmul.f32 %v1651, %v856
    %v1675 = vmul.f32 %v1655, %v856
    %v1676 = vmul.f32 %v1659, %v856
    %v1677 = vadd.f32 %v1581, %v1661
    %v1678 = vadd.f32 %v1582, %v1662
    %v1679 = vadd.f32 %v1583, %v1663
    %v1680 = vadd.f32 %v1584, %v1664
    %v1681 = vadd.f32 %v1585, %v1665
    %v1682 = vadd.f32 %v1586, %v1666
    %v1683 = vadd.f32 %v1587, %v1667
    %v1684 = vadd.f32 %v1588, %v1668
    %v1685 = vadd.f32 %v1589, %v1669
    %v1686 = vadd.f32 %v1590, %v1670
    %v1687 = vadd.f32 %v1591, %v1671
    %v1688 = vadd.f32 %v1592, %v1672
    %v1689 = vadd.f32 %v1593, %v1673
    %v1690 = vadd.f32 %v1594, %v1674
    %v1691 = vadd.f32 %v1595, %v1675
    %v1692 = vadd.f32 %v1596, %v1676
    %s1693 = scalar_lea.vmem %s2, 384
    %v1694 = vld [vmem:[%s1693] sm:$0xff]
    %v1695 = vld [vmem:[%s1693 + $0x8] sm:$0xff]
    %v1696 = vld [vmem:[%s1693 + $0x10] sm:$0xff]
    %v1697 = vld [vmem:[%s1693 + $0x18] sm:$0xff]
    %v1698 = vld [vmem:[%s1693 + $0x20] sm:$0xff]
    %v1699 = vld [vmem:[%s1693 + $0x28] sm:$0xff]
    %v1700 = vld [vmem:[%s1693 + $0x30] sm:$0xff]
    %v1701 = vld [vmem:[%s1693 + $0x38] sm:$0xff]
    %v1702 = vld [vmem:[%s1693 + $0x40] sm:$0xff]
    %v1703 = vld [vmem:[%s1693 + $0x48] sm:$0xff]
    %v1704 = vld [vmem:[%s1693 + $0x50] sm:$0xff]
    %v1705 = vld [vmem:[%s1693 + $0x58] sm:$0xff]
    %v1706 = vld [vmem:[%s1693 + $0x60] sm:$0xff]
    %v1707 = vld [vmem:[%s1693 + $0x68] sm:$0xff]
    %v1708 = vld [vmem:[%s1693 + $0x70] sm:$0xff]
    %v1709 = vld [vmem:[%s1693 + $0x78] sm:$0xff]
    %1711 = vset.pattern.permute.xlu0 0
    %1712 = vperm.xlu0 %1711, %v1694
    %v1713 = vpop.permute.xlu0 %1712
    %1716 = vset.pattern.permute.xlu0 0
    %1717 = vperm.xlu0 %1716, %v1695
    %v1718 = vpop.permute.xlu0 %1717
    %1721 = vset.pattern.permute.xlu0 0
    %1722 = vperm.xlu0 %1721, %v1696
    %v1723 = vpop.permute.xlu0 %1722
    %1726 = vset.pattern.permute.xlu0 0
    %1727 = vperm.xlu0 %1726, %v1697
    %v1728 = vpop.permute.xlu0 %1727
    %1731 = vset.pattern.permute.xlu0 0
    %1732 = vperm.xlu0 %1731, %v1698
    %v1733 = vpop.permute.xlu0 %1732
    %1736 = vset.pattern.permute.xlu0 0
    %1737 = vperm.xlu0 %1736, %v1699
    %v1738 = vpop.permute.xlu0 %1737
    %1741 = vset.pattern.permute.xlu0 0
    %1742 = vperm.xlu0 %1741, %v1700
    %v1743 = vpop.permute.xlu0 %1742
    %1746 = vset.pattern.permute.xlu0 0
    %1747 = vperm.xlu0 %1746, %v1701
    %v1748 = vpop.permute.xlu0 %1747
    %1751 = vset.pattern.permute.xlu0 0
    %1752 = vperm.xlu0 %1751, %v1702
    %v1753 = vpop.permute.xlu0 %1752
    %1756 = vset.pattern.permute.xlu0 0
    %1757 = vperm.xlu0 %1756, %v1703
    %v1758 = vpop.permute.xlu0 %1757
    %1761 = vset.pattern.permute.xlu0 0
    %1762 = vperm.xlu0 %1761, %v1704
    %v1763 = vpop.permute.xlu0 %1762
    %1766 = vset.pattern.permute.xlu0 0
    %1767 = vperm.xlu0 %1766, %v1705
    %v1768 = vpop.permute.xlu0 %1767
    %1771 = vset.pattern.permute.xlu0 0
    %1772 = vperm.xlu0 %1771, %v1706
    %v1773 = vpop.permute.xlu0 %1772
    %1776 = vset.pattern.permute.xlu0 0
    %1777 = vperm.xlu0 %1776, %v1707
    %v1778 = vpop.permute.xlu0 %1777
    %1781 = vset.pattern.permute.xlu0 0
    %1782 = vperm.xlu0 %1781, %v1708
    %v1783 = vpop.permute.xlu0 %1782
    %1786 = vset.pattern.permute.xlu0 0
    %1787 = vperm.xlu0 %1786, %v1709
    %v1788 = vpop.permute.xlu0 %1787
    %v1790 = vadd.f32 %v1677, %v1713
    %v1791 = vadd.f32 %v1678, %v1718
    %v1792 = vadd.f32 %v1679, %v1723
    %v1793 = vadd.f32 %v1680, %v1728
    %v1794 = vadd.f32 %v1681, %v1733
    %v1795 = vadd.f32 %v1682, %v1738
    %v1796 = vadd.f32 %v1683, %v1743
    %v1797 = vadd.f32 %v1684, %v1748
    %v1798 = vadd.f32 %v1685, %v1753
    %v1799 = vadd.f32 %v1686, %v1758
    %v1800 = vadd.f32 %v1687, %v1763
    %v1801 = vadd.f32 %v1688, %v1768
    %v1802 = vadd.f32 %v1689, %v1773
    %v1803 = vadd.f32 %v1690, %v1778
    %v1804 = vadd.f32 %v1691, %v1783
    %v1805 = vadd.f32 %v1692, %v1788
    %v1806 = vmul.f32 %v1790, 0.01
    %v1807 = vmul.f32 %v1791, 0.01
    %v1808 = vmul.f32 %v1792, 0.01
    %v1809 = vmul.f32 %v1793, 0.01
    %v1810 = vmul.f32 %v1794, 0.01
    %v1811 = vmul.f32 %v1795, 0.01
    %v1812 = vmul.f32 %v1796, 0.01
    %v1813 = vmul.f32 %v1797, 0.01
    %v1814 = vmul.f32 %v1798, 0.01
    %v1815 = vmul.f32 %v1799, 0.01
    %v1816 = vmul.f32 %v1800, 0.01
    %v1817 = vmul.f32 %v1801, 0.01
    %v1818 = vmul.f32 %v1802, 0.01
    %v1819 = vmul.f32 %v1803, 0.01
    %v1820 = vmul.f32 %v1804, 0.01
    %v1821 = vmul.f32 %v1805, 0.01
    %v1822 = vmax.f32 %v1790, %v1806
    %v1823 = vmax.f32 %v1791, %v1807
    %v1824 = vmax.f32 %v1792, %v1808
    %v1825 = vmax.f32 %v1793, %v1809
    %v1826 = vmax.f32 %v1794, %v1810
    %v1827 = vmax.f32 %v1795, %v1811
    %v1828 = vmax.f32 %v1796, %v1812
    %v1829 = vmax.f32 %v1797, %v1813
    %v1830 = vmax.f32 %v1798, %v1814
    %v1831 = vmax.f32 %v1799, %v1815
    %v1832 = vmax.f32 %v1800, %v1816
    %v1833 = vmax.f32 %v1801, %v1817
    %v1834 = vmax.f32 %v1802, %v1818
    %v1835 = vmax.f32 %v1803, %v1819
    %v1836 = vmax.f32 %v1804, %v1820
    %v1837 = vmax.f32 %v1805, %v1821
    %v1838 = vpack.c.bf16 %v1823, %v1822
    %v1839 = vpack.c.bf16 %v1825, %v1824
    %v1840 = vpack.c.bf16 %v1827, %v1826
    %v1841 = vpack.c.bf16 %v1829, %v1828
    %v1842 = vpack.c.bf16 %v1831, %v1830
    %v1843 = vpack.c.bf16 %v1833, %v1832
    %v1844 = vpack.c.bf16 %v1835, %v1834
    %v1845 = vpack.c.bf16 %v1837, %v1836
    %s1846 = scalar_lea.vmem %s3, 192
    %v1847 = vld [vmem:[%s1846] sm:$0xf]
    %v1848 = vld [vmem:[%s1846 + $0x4] sm:$0xf]
    %v1849 = vld [vmem:[%s1846 + $0x8] sm:$0xf]
    %v1850 = vld [vmem:[%s1846 + $0xc] sm:$0xf]
    %v1851 = vld [vmem:[%s1846 + $0x10] sm:$0xf]
    %v1852 = vld [vmem:[%s1846 + $0x14] sm:$0xf]
    %v1853 = vld [vmem:[%s1846 + $0x18] sm:$0xf]
    %v1854 = vld [vmem:[%s1846 + $0x1c] sm:$0xf]
    %v1855 = vld [vmem:[%s1846 + $0x20] sm:$0xf]
    %v1856 = vld [vmem:[%s1846 + $0x24] sm:$0xf]
    %v1857 = vld [vmem:[%s1846 + $0x28] sm:$0xf]
    %v1858 = vld [vmem:[%s1846 + $0x2c] sm:$0xf]
    %v1859 = vld [vmem:[%s1846 + $0x30] sm:$0xf]
    %v1860 = vld [vmem:[%s1846 + $0x34] sm:$0xf]
    %v1861 = vld [vmem:[%s1846 + $0x38] sm:$0xf]
    %v1862 = vld [vmem:[%s1846 + $0x3c] sm:$0xf]
    %s1863 = scalar_lea.vmem %s4, 384
    %v1864 = vld [vmem:[%s1863] sm:$0xff]
    %v1865 = vld [vmem:[%s1863 + $0x8] sm:$0xff]
    %v1866 = vld [vmem:[%s1863 + $0x10] sm:$0xff]
    %v1867 = vld [vmem:[%s1863 + $0x18] sm:$0xff]
    %v1868 = vld [vmem:[%s1863 + $0x20] sm:$0xff]
    %v1869 = vld [vmem:[%s1863 + $0x28] sm:$0xff]
    %v1870 = vld [vmem:[%s1863 + $0x30] sm:$0xff]
    %v1871 = vld [vmem:[%s1863 + $0x38] sm:$0xff]
    %v1872 = vld [vmem:[%s1863 + $0x40] sm:$0xff]
    %v1873 = vld [vmem:[%s1863 + $0x48] sm:$0xff]
    %v1874 = vld [vmem:[%s1863 + $0x50] sm:$0xff]
    %v1875 = vld [vmem:[%s1863 + $0x58] sm:$0xff]
    %v1876 = vld [vmem:[%s1863 + $0x60] sm:$0xff]
    %v1877 = vld [vmem:[%s1863 + $0x68] sm:$0xff]
    %v1878 = vld [vmem:[%s1863 + $0x70] sm:$0xff]
    %v1879 = vld [vmem:[%s1863 + $0x78] sm:$0xff]
    %1881 = vset.pattern.permute.xlu0 0
    %1882 = vperm.xlu0 %1881, %v1864
    %v1883 = vpop.permute.xlu0 %1882
    %1886 = vset.pattern.permute.xlu0 0
    %1887 = vperm.xlu0 %1886, %v1865
    %v1888 = vpop.permute.xlu0 %1887
    %1891 = vset.pattern.permute.xlu0 0
    %1892 = vperm.xlu0 %1891, %v1866
    %v1893 = vpop.permute.xlu0 %1892
    %1896 = vset.pattern.permute.xlu0 0
    %1897 = vperm.xlu0 %1896, %v1867
    %v1898 = vpop.permute.xlu0 %1897
    %1901 = vset.pattern.permute.xlu0 0
    %1902 = vperm.xlu0 %1901, %v1868
    %v1903 = vpop.permute.xlu0 %1902
    %1906 = vset.pattern.permute.xlu0 0
    %1907 = vperm.xlu0 %1906, %v1869
    %v1908 = vpop.permute.xlu0 %1907
    %1911 = vset.pattern.permute.xlu0 0
    %1912 = vperm.xlu0 %1911, %v1870
    %v1913 = vpop.permute.xlu0 %1912
    %1916 = vset.pattern.permute.xlu0 0
    %1917 = vperm.xlu0 %1916, %v1871
    %v1918 = vpop.permute.xlu0 %1917
    %1921 = vset.pattern.permute.xlu0 0
    %1922 = vperm.xlu0 %1921, %v1872
    %v1923 = vpop.permute.xlu0 %1922
    %1926 = vset.pattern.permute.xlu0 0
    %1927 = vperm.xlu0 %1926, %v1873
    %v1928 = vpop.permute.xlu0 %1927
    %1931 = vset.pattern.permute.xlu0 0
    %1932 = vperm.xlu0 %1931, %v1874
    %v1933 = vpop.permute.xlu0 %1932
    %1936 = vset.pattern.permute.xlu0 0
    %1937 = vperm.xlu0 %1936, %v1875
    %v1938 = vpop.permute.xlu0 %1937
    %1941 = vset.pattern.permute.xlu0 0
    %1942 = vperm.xlu0 %1941, %v1876
    %v1943 = vpop.permute.xlu0 %1942
    %1946 = vset.pattern.permute.xlu0 0
    %1947 = vperm.xlu0 %1946, %v1877
    %v1948 = vpop.permute.xlu0 %1947
    %1951 = vset.pattern.permute.xlu0 0
    %1952 = vperm.xlu0 %1951, %v1878
    %v1953 = vpop.permute.xlu0 %1952
    %1956 = vset.pattern.permute.xlu0 0
    %1957 = vperm.xlu0 %1956, %v1879
    %v1958 = vpop.permute.xlu0 %1957
    %v1976 = vunpack.c.l.b16 %v1847
    %v1977 = vunpack.c.l.b16 %v1848
    %v1978 = vunpack.c.l.b16 %v1849
    %v1979 = vunpack.c.l.b16 %v1850
    %v1980 = vunpack.c.l.b16 %v1851
    %v1981 = vunpack.c.l.b16 %v1852
    %v1982 = vunpack.c.l.b16 %v1853
    %v1983 = vunpack.c.l.b16 %v1854
    %v1984 = vunpack.c.l.b16 %v1855
    %v1985 = vunpack.c.l.b16 %v1856
    %v1986 = vunpack.c.l.b16 %v1857
    %v1987 = vunpack.c.l.b16 %v1858
    %v1988 = vunpack.c.l.b16 %v1859
    %v1989 = vunpack.c.l.b16 %v1860
    %v1990 = vunpack.c.l.b16 %v1861
    %v1991 = vunpack.c.l.b16 %v1862
    %v1992 = vpack.c.b16 %v1977, %v1976
    %v1993 = vpack.c.b16 %v1979, %v1978
    %v1994 = vpack.c.b16 %v1981, %v1980
    %v1995 = vpack.c.b16 %v1983, %v1982
    %v1996 = vpack.c.b16 %v1985, %v1984
    %v1997 = vpack.c.b16 %v1987, %v1986
    %v1998 = vpack.c.b16 %v1989, %v1988
    %v1999 = vpack.c.b16 %v1991, %v1990
    %2008 = vmatprep.subr.bf16.mxu0 0
    %2009 = vmatpush1.bf16.msra.mxu0 %v1845
    %2010 = vmatprep.subr.bf16.mxu0 0
    %2011 = vmatpush1.bf16.msra.mxu0 %v1844
    %2012 = vmatprep.subr.bf16.mxu0 0
    %2013 = vmatpush1.bf16.msra.mxu0 %v1843
    %2014 = vmatprep.subr.bf16.mxu0 0
    %2015 = vmatpush1.bf16.msra.mxu0 %v1842
    %2016 = vmatprep.subr.bf16.mxu0 0
    %2017 = vmatpush1.bf16.msra.mxu0 %v1841
    %2018 = vmatprep.subr.bf16.mxu0 0
    %2019 = vmatpush1.bf16.msra.mxu0 %v1840
    %2020 = vmatprep.subr.bf16.mxu0 0
    %2021 = vmatpush1.bf16.msra.mxu0 %v1839
    %2022 = vmatprep.subr.bf16.mxu0 0
    %2023 = vmatpush1.bf16.msra.mxu0 %v1838
    %2024 = vmatprep.subr.bf16.mxu0 0
    %2025 = vmatpush2.bf16.msra.mxu0 0
    %2026 = vmatprep.subr.bf16.mxu0 0
    %2027 = vmatpush2.bf16.msra.mxu0 0
    %2028 = vmatprep.subr.bf16.mxu0 0
    %2029 = vmatpush2.bf16.msra.mxu0 0
    %2030 = vmatprep.subr.bf16.mxu0 0
    %2031 = vmatpush2.bf16.msra.mxu0 0
    %2032 = vmatprep.subr.bf16.mxu0 0
    %2033 = vmatpush2.bf16.msra.mxu0 0
    %2034 = vmatprep.subr.bf16.mxu0 0
    %2035 = vmatpush2.bf16.msra.mxu0 0
    %2036 = vmatprep.subr.bf16.mxu0 0
    %2037 = vmatpush2.bf16.msra.mxu0 0
    %2038 = vmatprep.subr.bf16.mxu0 0
    %2039 = vmatpush2.bf16.msra.mxu0 0
    %2040 = vmatprep.mubr.bf16.mxu0 0
    %2041 = vmatmul.mubr.bf16.gmra.mxu0 %v1992
    %v2042 = vpop.f32.mrf.mxu0
    %v2043 = vadd.f32 %v1883, %v2042
    %v2044 = vpop.f32.mrf.mxu0
    %v2045 = vpop.f32.mrf.mxu0
    %v2046 = vadd.f32 %v1888, %v2045
    %v2047 = vpop.f32.mrf.mxu0
    %2048 = vmatprep.mubr.bf16.mxu0 0
    %2049 = vmatmul.mubr.bf16.gmra.mxu0 %v1993
    %v2050 = vpop.f32.mrf.mxu0
    %v2051 = vadd.f32 %v1893, %v2050
    %v2052 = vpop.f32.mrf.mxu0
    %v2053 = vpop.f32.mrf.mxu0
    %v2054 = vadd.f32 %v1898, %v2053
    %v2055 = vpop.f32.mrf.mxu0
    %2056 = vmatprep.mubr.bf16.mxu0 0
    %2057 = vmatmul.mubr.bf16.gmra.mxu0 %v1994
    %v2058 = vpop.f32.mrf.mxu0
    %v2059 = vadd.f32 %v1903, %v2058
    %v2060 = vpop.f32.mrf.mxu0
    %v2061 = vpop.f32.mrf.mxu0
    %v2062 = vadd.f32 %v1908, %v2061
    %v2063 = vpop.f32.mrf.mxu0
    %2064 = vmatprep.mubr.bf16.mxu0 0
    %2065 = vmatmul.mubr.bf16.gmra.mxu0 %v1995
    %v2066 = vpop.f32.mrf.mxu0
    %v2067 = vadd.f32 %v1913, %v2066
    %v2068 = vpop.f32.mrf.mxu0
    %v2069 = vpop.f32.mrf.mxu0
    %v2070 = vadd.f32 %v1918, %v2069
    %v2071 = vpop.f32.mrf.mxu0
    %2072 = vmatprep.mubr.bf16.mxu0 0
    %2073 = vmatmul.mubr.bf16.gmra.mxu0 %v1996
    %v2074 = vpop.f32.mrf.mxu0
    %v2075 = vadd.f32 %v1923, %v2074
    %v2076 = vpop.f32.mrf.mxu0
    %v2077 = vpop.f32.mrf.mxu0
    %v2078 = vadd.f32 %v1928, %v2077
    %v2079 = vpop.f32.mrf.mxu0
    %2080 = vmatprep.mubr.bf16.mxu0 0
    %2081 = vmatmul.mubr.bf16.gmra.mxu0 %v1997
    %v2082 = vpop.f32.mrf.mxu0
    %v2083 = vadd.f32 %v1933, %v2082
    %v2084 = vpop.f32.mrf.mxu0
    %v2085 = vpop.f32.mrf.mxu0
    %v2086 = vadd.f32 %v1938, %v2085
    %v2087 = vpop.f32.mrf.mxu0
    %2088 = vmatprep.mubr.bf16.mxu0 0
    %2089 = vmatmul.mubr.bf16.gmra.mxu0 %v1998
    %v2090 = vpop.f32.mrf.mxu0
    %v2091 = vadd.f32 %v1943, %v2090
    %v2092 = vpop.f32.mrf.mxu0
    %v2093 = vpop.f32.mrf.mxu0
    %v2094 = vadd.f32 %v1948, %v2093
    %v2095 = vpop.f32.mrf.mxu0
    %2096 = vmatprep.mubr.bf16.mxu0 0
    %2097 = vmatmul.mubr.bf16.gmra.mxu0 %v1999
    %v2098 = vpop.f32.mrf.mxu0
    %v2099 = vadd.f32 %v1953, %v2098
    %v2100 = vpop.f32.mrf.mxu0
    %v2101 = vpop.f32.mrf.mxu0
    %v2102 = vadd.f32 %v1958, %v2101
    %v2103 = vpop.f32.mrf.mxu0
    %2104 = vdwg.mxu0
    %v2105 = vmul.f32 %v2043, 0.01
    %v2106 = vmul.f32 %v2046, 0.01
    %v2107 = vmul.f32 %v2051, 0.01
    %v2108 = vmul.f32 %v2054, 0.01
    %v2109 = vmul.f32 %v2059, 0.01
    %v2110 = vmul.f32 %v2062, 0.01
    %v2111 = vmul.f32 %v2067, 0.01
    %v2112 = vmul.f32 %v2070, 0.01
    %v2113 = vmul.f32 %v2075, 0.01
    %v2114 = vmul.f32 %v2078, 0.01
    %v2115 = vmul.f32 %v2083, 0.01
    %v2116 = vmul.f32 %v2086, 0.01
    %v2117 = vmul.f32 %v2091, 0.01
    %v2118 = vmul.f32 %v2094, 0.01
    %v2119 = vmul.f32 %v2099, 0.01
    %v2120 = vmul.f32 %v2102, 0.01
    %v2121 = vmax.f32 %v2043, %v2105
    %v2122 = vmax.f32 %v2046, %v2106
    %v2123 = vmax.f32 %v2051, %v2107
    %v2124 = vmax.f32 %v2054, %v2108
    %v2125 = vmax.f32 %v2059, %v2109
    %v2126 = vmax.f32 %v2062, %v2110
    %v2127 = vmax.f32 %v2067, %v2111
    %v2128 = vmax.f32 %v2070, %v2112
    %v2129 = vmax.f32 %v2075, %v2113
    %v2130 = vmax.f32 %v2078, %v2114
    %v2131 = vmax.f32 %v2083, %v2115
    %v2132 = vmax.f32 %v2086, %v2116
    %v2133 = vmax.f32 %v2091, %v2117
    %v2134 = vmax.f32 %v2094, %v2118
    %v2135 = vmax.f32 %v2099, %v2119
    %v2136 = vmax.f32 %v2102, %v2120
    %v2137 = vpack.c.bf16 %v2122, %v2121
    %v2138 = vpack.c.bf16 %v2124, %v2123
    %v2139 = vpack.c.bf16 %v2126, %v2125
    %v2140 = vpack.c.bf16 %v2128, %v2127
    %v2141 = vpack.c.bf16 %v2130, %v2129
    %v2142 = vpack.c.bf16 %v2132, %v2131
    %v2143 = vpack.c.bf16 %v2134, %v2133
    %v2144 = vpack.c.bf16 %v2136, %v2135
    %s2145 = scalar_lea.vmem %s5, 12
    %v2146 = vld [vmem:[%s2145] sm:$0xf]
    %s2147 = scalar_lea.vmem %s6, 24
    %v2148 = vld [vmem:[%s2147] sm:$0xff]
    %2150 = vset.pattern.permute.xlu0 0
    %2151 = vperm.xlu0 %2150, %v2148
    %v2152 = vpop.permute.xlu0 %2151
    %2154 = vmatprep.subr.bf16.mxu0 0
    %2155 = vmatpush1.bf16.msra.mxu0 %v2144
    %2156 = vmatprep.subr.bf16.mxu0 0
    %2157 = vmatpush1.bf16.msra.mxu0 %v2143
    %2158 = vmatprep.subr.bf16.mxu0 0
    %2159 = vmatpush1.bf16.msra.mxu0 %v2142
    %2160 = vmatprep.subr.bf16.mxu0 0
    %2161 = vmatpush1.bf16.msra.mxu0 %v2141
    %2162 = vmatprep.subr.bf16.mxu0 0
    %2163 = vmatpush1.bf16.msra.mxu0 %v2140
    %2164 = vmatprep.subr.bf16.mxu0 0
    %2165 = vmatpush1.bf16.msra.mxu0 %v2139
    %2166 = vmatprep.subr.bf16.mxu0 0
    %2167 = vmatpush1.bf16.msra.mxu0 %v2138
    %2168 = vmatprep.subr.bf16.mxu0 0
    %2169 = vmatpush1.bf16.msra.mxu0 %v2137
    %2170 = vmatprep.subr.bf16.mxu0 0
    %2171 = vmatpush2.bf16.msra.mxu0 0
    %2172 = vmatprep.subr.bf16.mxu0 0
    %2173 = vmatpush2.bf16.msra.mxu0 0
    %2174 = vmatprep.subr.bf16.mxu0 0
    %2175 = vmatpush2.bf16.msra.mxu0 0
    %2176 = vmatprep.subr.bf16.mxu0 0
    %2177 = vmatpush2.bf16.msra.mxu0 0
    %2178 = vmatprep.subr.bf16.mxu0 0
    %2179 = vmatpush2.bf16.msra.mxu0 0
    %2180 = vmatprep.subr.bf16.mxu0 0
    %2181 = vmatpush2.bf16.msra.mxu0 0
    %2182 = vmatprep.subr.bf16.mxu0 0
    %2183 = vmatpush2.bf16.msra.mxu0 0
    %2184 = vmatprep.subr.bf16.mxu0 0
    %2185 = vmatpush2.bf16.msra.mxu0 0
    %2186 = vmatprep.mubr.bf16.mxu0 0
    %2187 = vmatmul.mubr.bf16.gmra.mxu0 %v2146
    %v2188 = vpop.f32.mrf.mxu0
    %v2189 = vadd.f32 %v2152, %v2188
    %v2190 = vpop.f32.mrf.mxu0
    %v2191 = vpop.f32.mrf.mxu0
    %v2192 = vpop.f32.mrf.mxu0
    %2193 = vdwg.mxu0
    %v2194 = vtanh.pop %v2189
    %v2196 = vrot.slane %v2189, 7
    %v2198 = vsub.f32 %v28, %v2196
    %v2199 = vsub.f32 0.0, %v2194
    %v2200 = vmul.f32 %v2199, 1.442695
    %v2201 = vpow.pop %v2200
    %v2203 = vrot.slane %v2201, 6
    %v2205 = vmul.f32 %v2198, %v2203
    %v2206 = vsub.f32 %v1479, %v2194
    %s2207 = scalar_lea.vmem %s1, 256
    %v2208 = vld [vmem:[%s2207] sm:$0xff]
    %v2209 = vld [vmem:[%s2207 + $0x8] sm:$0xff]
    %v2210 = vld [vmem:[%s2207 + $0x10] sm:$0xff]
    %v2211 = vld [vmem:[%s2207 + $0x18] sm:$0xff]
    %v2212 = vld [vmem:[%s2207 + $0x20] sm:$0xff]
    %v2213 = vld [vmem:[%s2207 + $0x28] sm:$0xff]
    %v2214 = vld [vmem:[%s2207 + $0x30] sm:$0xff]
    %v2215 = vld [vmem:[%s2207 + $0x38] sm:$0xff]
    %v2216 = vld [vmem:[%s2207 + $0x40] sm:$0xff]
    %v2217 = vld [vmem:[%s2207 + $0x48] sm:$0xff]
    %v2218 = vld [vmem:[%s2207 + $0x50] sm:$0xff]
    %v2219 = vld [vmem:[%s2207 + $0x58] sm:$0xff]
    %v2220 = vld [vmem:[%s2207 + $0x60] sm:$0xff]
    %v2221 = vld [vmem:[%s2207 + $0x68] sm:$0xff]
    %v2222 = vld [vmem:[%s2207 + $0x70] sm:$0xff]
    %v2223 = vld [vmem:[%s2207 + $0x78] sm:$0xff]
    %2225 = vset.pattern.permute.xlu0 0
    %2226 = vperm.xlu0 %2225, %v2208
    %v2227 = vpop.permute.xlu0 %2226
    %2230 = vset.pattern.permute.xlu0 0
    %2231 = vperm.xlu0 %2230, %v2209
    %v2232 = vpop.permute.xlu0 %2231
    %2235 = vset.pattern.permute.xlu0 0
    %2236 = vperm.xlu0 %2235, %v2210
    %v2237 = vpop.permute.xlu0 %2236
    %2240 = vset.pattern.permute.xlu0 0
    %2241 = vperm.xlu0 %2240, %v2211
    %v2242 = vpop.permute.xlu0 %2241
    %2245 = vset.pattern.permute.xlu0 0
    %2246 = vperm.xlu0 %2245, %v2212
    %v2247 = vpop.permute.xlu0 %2246
    %2250 = vset.pattern.permute.xlu0 0
    %2251 = vperm.xlu0 %2250, %v2213
    %v2252 = vpop.permute.xlu0 %2251
    %2255 = vset.pattern.permute.xlu0 0
    %2256 = vperm.xlu0 %2255, %v2214
    %v2257 = vpop.permute.xlu0 %2256
    %2260 = vset.pattern.permute.xlu0 0
    %2261 = vperm.xlu0 %2260, %v2215
    %v2262 = vpop.permute.xlu0 %2261
    %2265 = vset.pattern.permute.xlu0 0
    %2266 = vperm.xlu0 %2265, %v2216
    %v2267 = vpop.permute.xlu0 %2266
    %2270 = vset.pattern.permute.xlu0 0
    %2271 = vperm.xlu0 %2270, %v2217
    %v2272 = vpop.permute.xlu0 %2271
    %2275 = vset.pattern.permute.xlu0 0
    %2276 = vperm.xlu0 %2275, %v2218
    %v2277 = vpop.permute.xlu0 %2276
    %2280 = vset.pattern.permute.xlu0 0
    %2281 = vperm.xlu0 %2280, %v2219
    %v2282 = vpop.permute.xlu0 %2281
    %2285 = vset.pattern.permute.xlu0 0
    %2286 = vperm.xlu0 %2285, %v2220
    %v2287 = vpop.permute.xlu0 %2286
    %2290 = vset.pattern.permute.xlu0 0
    %2291 = vperm.xlu0 %2290, %v2221
    %v2292 = vpop.permute.xlu0 %2291
    %2295 = vset.pattern.permute.xlu0 0
    %2296 = vperm.xlu0 %2295, %v2222
    %v2297 = vpop.permute.xlu0 %2296
    %2300 = vset.pattern.permute.xlu0 0
    %2301 = vperm.xlu0 %2300, %v2223
    %v2302 = vpop.permute.xlu0 %2301
    %v2304 = vmul.f32 %v2227, %v1580
    %v2305 = vmul.f32 %v2232, %v1580
    %v2306 = vmul.f32 %v2237, %v1580
    %v2307 = vmul.f32 %v2242, %v1580
    %v2308 = vmul.f32 %v2247, %v1580
    %v2309 = vmul.f32 %v2252, %v1580
    %v2310 = vmul.f32 %v2257, %v1580
    %v2311 = vmul.f32 %v2262, %v1580
    %v2312 = vmul.f32 %v2267, %v1580
    %v2313 = vmul.f32 %v2272, %v1580
    %v2314 = vmul.f32 %v2277, %v1580
    %v2315 = vmul.f32 %v2282, %v1580
    %v2316 = vmul.f32 %v2287, %v1580
    %v2317 = vmul.f32 %v2292, %v1580
    %v2318 = vmul.f32 %v2297, %v1580
    %v2319 = vmul.f32 %v2302, %v1580
    %2320 = vset.pattern.permute.xlu0 1
    %2321 = vperm.xlu0 %2320, %v2208
    %v2322 = vpop.permute.xlu0 %2321
    %2324 = vset.pattern.permute.xlu0 1
    %2325 = vperm.xlu0 %2324, %v2209
    %v2326 = vpop.permute.xlu0 %2325
    %2328 = vset.pattern.permute.xlu0 1
    %2329 = vperm.xlu0 %2328, %v2210
    %v2330 = vpop.permute.xlu0 %2329
    %2332 = vset.pattern.permute.xlu0 1
    %2333 = vperm.xlu0 %2332, %v2211
    %v2334 = vpop.permute.xlu0 %2333
    %2336 = vset.pattern.permute.xlu0 1
    %2337 = vperm.xlu0 %2336, %v2212
    %v2338 = vpop.permute.xlu0 %2337
    %2340 = vset.pattern.permute.xlu0 1
    %2341 = vperm.xlu0 %2340, %v2213
    %v2342 = vpop.permute.xlu0 %2341
    %2344 = vset.pattern.permute.xlu0 1
    %2345 = vperm.xlu0 %2344, %v2214
    %v2346 = vpop.permute.xlu0 %2345
    %2348 = vset.pattern.permute.xlu0 1
    %2349 = vperm.xlu0 %2348, %v2215
    %v2350 = vpop.permute.xlu0 %2349
    %2352 = vset.pattern.permute.xlu0 1
    %2353 = vperm.xlu0 %2352, %v2216
    %v2354 = vpop.permute.xlu0 %2353
    %2356 = vset.pattern.permute.xlu0 1
    %2357 = vperm.xlu0 %2356, %v2217
    %v2358 = vpop.permute.xlu0 %2357
    %2360 = vset.pattern.permute.xlu0 1
    %2361 = vperm.xlu0 %2360, %v2218
    %v2362 = vpop.permute.xlu0 %2361
    %2364 = vset.pattern.permute.xlu0 1
    %2365 = vperm.xlu0 %2364, %v2219
    %v2366 = vpop.permute.xlu0 %2365
    %2368 = vset.pattern.permute.xlu0 1
    %2369 = vperm.xlu0 %2368, %v2220
    %v2370 = vpop.permute.xlu0 %2369
    %2372 = vset.pattern.permute.xlu0 1
    %2373 = vperm.xlu0 %2372, %v2221
    %v2374 = vpop.permute.xlu0 %2373
    %2376 = vset.pattern.permute.xlu0 1
    %2377 = vperm.xlu0 %2376, %v2222
    %v2378 = vpop.permute.xlu0 %2377
    %2380 = vset.pattern.permute.xlu0 1
    %2381 = vperm.xlu0 %2380, %v2223
    %v2382 = vpop.permute.xlu0 %2381
    %v2384 = vlaneseq
    %v2385 = vshrl.u32 %v2384, 7
    %v2386 = vsub.s32 2, %v2385
    %v2387 = vrot.slane %v2205, %v2386
    %v2388 = vmul.f32 %v2322, %v2387
    %v2389 = vmul.f32 %v2326, %v2387
    %v2390 = vmul.f32 %v2330, %v2387
    %v2391 = vmul.f32 %v2334, %v2387
    %v2392 = vmul.f32 %v2338, %v2387
    %v2393 = vmul.f32 %v2342, %v2387
    %v2394 = vmul.f32 %v2346, %v2387
    %v2395 = vmul.f32 %v2350, %v2387
    %v2396 = vmul.f32 %v2354, %v2387
    %v2397 = vmul.f32 %v2358, %v2387
    %v2398 = vmul.f32 %v2362, %v2387
    %v2399 = vmul.f32 %v2366, %v2387
    %v2400 = vmul.f32 %v2370, %v2387
    %v2401 = vmul.f32 %v2374, %v2387
    %v2402 = vmul.f32 %v2378, %v2387
    %v2403 = vmul.f32 %v2382, %v2387
    %v2404 = vadd.f32 %v2304, %v2388
    %v2405 = vadd.f32 %v2305, %v2389
    %v2406 = vadd.f32 %v2306, %v2390
    %v2407 = vadd.f32 %v2307, %v2391
    %v2408 = vadd.f32 %v2308, %v2392
    %v2409 = vadd.f32 %v2309, %v2393
    %v2410 = vadd.f32 %v2310, %v2394
    %v2411 = vadd.f32 %v2311, %v2395
    %v2412 = vadd.f32 %v2312, %v2396
    %v2413 = vadd.f32 %v2313, %v2397
    %v2414 = vadd.f32 %v2314, %v2398
    %v2415 = vadd.f32 %v2315, %v2399
    %v2416 = vadd.f32 %v2316, %v2400
    %v2417 = vadd.f32 %v2317, %v2401
    %v2418 = vadd.f32 %v2318, %v2402
    %v2419 = vadd.f32 %v2319, %v2403
    %s2420 = scalar_lea.vmem %s2, 256
    %v2421 = vld [vmem:[%s2420] sm:$0xff]
    %v2422 = vld [vmem:[%s2420 + $0x8] sm:$0xff]
    %v2423 = vld [vmem:[%s2420 + $0x10] sm:$0xff]
    %v2424 = vld [vmem:[%s2420 + $0x18] sm:$0xff]
    %v2425 = vld [vmem:[%s2420 + $0x20] sm:$0xff]
    %v2426 = vld [vmem:[%s2420 + $0x28] sm:$0xff]
    %v2427 = vld [vmem:[%s2420 + $0x30] sm:$0xff]
    %v2428 = vld [vmem:[%s2420 + $0x38] sm:$0xff]
    %v2429 = vld [vmem:[%s2420 + $0x40] sm:$0xff]
    %v2430 = vld [vmem:[%s2420 + $0x48] sm:$0xff]
    %v2431 = vld [vmem:[%s2420 + $0x50] sm:$0xff]
    %v2432 = vld [vmem:[%s2420 + $0x58] sm:$0xff]
    %v2433 = vld [vmem:[%s2420 + $0x60] sm:$0xff]
    %v2434 = vld [vmem:[%s2420 + $0x68] sm:$0xff]
    %v2435 = vld [vmem:[%s2420 + $0x70] sm:$0xff]
    %v2436 = vld [vmem:[%s2420 + $0x78] sm:$0xff]
    %2438 = vset.pattern.permute.xlu0 0
    %2439 = vperm.xlu0 %2438, %v2421
    %v2440 = vpop.permute.xlu0 %2439
    %2443 = vset.pattern.permute.xlu0 0
    %2444 = vperm.xlu0 %2443, %v2422
    %v2445 = vpop.permute.xlu0 %2444
    %2448 = vset.pattern.permute.xlu0 0
    %2449 = vperm.xlu0 %2448, %v2423
    %v2450 = vpop.permute.xlu0 %2449
    %2453 = vset.pattern.permute.xlu0 0
    %2454 = vperm.xlu0 %2453, %v2424
    %v2455 = vpop.permute.xlu0 %2454
    %2458 = vset.pattern.permute.xlu0 0
    %2459 = vperm.xlu0 %2458, %v2425
    %v2460 = vpop.permute.xlu0 %2459
    %2463 = vset.pattern.permute.xlu0 0
    %2464 = vperm.xlu0 %2463, %v2426
    %v2465 = vpop.permute.xlu0 %2464
    %2468 = vset.pattern.permute.xlu0 0
    %2469 = vperm.xlu0 %2468, %v2427
    %v2470 = vpop.permute.xlu0 %2469
    %2473 = vset.pattern.permute.xlu0 0
    %2474 = vperm.xlu0 %2473, %v2428
    %v2475 = vpop.permute.xlu0 %2474
    %2478 = vset.pattern.permute.xlu0 0
    %2479 = vperm.xlu0 %2478, %v2429
    %v2480 = vpop.permute.xlu0 %2479
    %2483 = vset.pattern.permute.xlu0 0
    %2484 = vperm.xlu0 %2483, %v2430
    %v2485 = vpop.permute.xlu0 %2484
    %2488 = vset.pattern.permute.xlu0 0
    %2489 = vperm.xlu0 %2488, %v2431
    %v2490 = vpop.permute.xlu0 %2489
    %2493 = vset.pattern.permute.xlu0 0
    %2494 = vperm.xlu0 %2493, %v2432
    %v2495 = vpop.permute.xlu0 %2494
    %2498 = vset.pattern.permute.xlu0 0
    %2499 = vperm.xlu0 %2498, %v2433
    %v2500 = vpop.permute.xlu0 %2499
    %2503 = vset.pattern.permute.xlu0 0
    %2504 = vperm.xlu0 %2503, %v2434
    %v2505 = vpop.permute.xlu0 %2504
    %2508 = vset.pattern.permute.xlu0 0
    %2509 = vperm.xlu0 %2508, %v2435
    %v2510 = vpop.permute.xlu0 %2509
    %2513 = vset.pattern.permute.xlu0 0
    %2514 = vperm.xlu0 %2513, %v2436
    %v2515 = vpop.permute.xlu0 %2514
    %v2517 = vadd.f32 %v2404, %v2440
    %v2518 = vadd.f32 %v2405, %v2445
    %v2519 = vadd.f32 %v2406, %v2450
    %v2520 = vadd.f32 %v2407, %v2455
    %v2521 = vadd.f32 %v2408, %v2460
    %v2522 = vadd.f32 %v2409, %v2465
    %v2523 = vadd.f32 %v2410, %v2470
    %v2524 = vadd.f32 %v2411, %v2475
    %v2525 = vadd.f32 %v2412, %v2480
    %v2526 = vadd.f32 %v2413, %v2485
    %v2527 = vadd.f32 %v2414, %v2490
    %v2528 = vadd.f32 %v2415, %v2495
    %v2529 = vadd.f32 %v2416, %v2500
    %v2530 = vadd.f32 %v2417, %v2505
    %v2531 = vadd.f32 %v2418, %v2510
    %v2532 = vadd.f32 %v2419, %v2515
    %v2533 = vmul.f32 %v2517, 0.01
    %v2534 = vmul.f32 %v2518, 0.01
    %v2535 = vmul.f32 %v2519, 0.01
    %v2536 = vmul.f32 %v2520, 0.01
    %v2537 = vmul.f32 %v2521, 0.01
    %v2538 = vmul.f32 %v2522, 0.01
    %v2539 = vmul.f32 %v2523, 0.01
    %v2540 = vmul.f32 %v2524, 0.01
    %v2541 = vmul.f32 %v2525, 0.01
    %v2542 = vmul.f32 %v2526, 0.01
    %v2543 = vmul.f32 %v2527, 0.01
    %v2544 = vmul.f32 %v2528, 0.01
    %v2545 = vmul.f32 %v2529, 0.01
    %v2546 = vmul.f32 %v2530, 0.01
    %v2547 = vmul.f32 %v2531, 0.01
    %v2548 = vmul.f32 %v2532, 0.01
    %v2549 = vmax.f32 %v2517, %v2533
    %v2550 = vmax.f32 %v2518, %v2534
    %v2551 = vmax.f32 %v2519, %v2535
    %v2552 = vmax.f32 %v2520, %v2536
    %v2553 = vmax.f32 %v2521, %v2537
    %v2554 = vmax.f32 %v2522, %v2538
    %v2555 = vmax.f32 %v2523, %v2539
    %v2556 = vmax.f32 %v2524, %v2540
    %v2557 = vmax.f32 %v2525, %v2541
    %v2558 = vmax.f32 %v2526, %v2542
    %v2559 = vmax.f32 %v2527, %v2543
    %v2560 = vmax.f32 %v2528, %v2544
    %v2561 = vmax.f32 %v2529, %v2545
    %v2562 = vmax.f32 %v2530, %v2546
    %v2563 = vmax.f32 %v2531, %v2547
    %v2564 = vmax.f32 %v2532, %v2548
    %v2565 = vpack.c.bf16 %v2550, %v2549
    %v2566 = vpack.c.bf16 %v2552, %v2551
    %v2567 = vpack.c.bf16 %v2554, %v2553
    %v2568 = vpack.c.bf16 %v2556, %v2555
    %v2569 = vpack.c.bf16 %v2558, %v2557
    %v2570 = vpack.c.bf16 %v2560, %v2559
    %v2571 = vpack.c.bf16 %v2562, %v2561
    %v2572 = vpack.c.bf16 %v2564, %v2563
    %s2573 = scalar_lea.vmem %s3, 128
    %v2574 = vld [vmem:[%s2573] sm:$0xf]
    %v2575 = vld [vmem:[%s2573 + $0x4] sm:$0xf]
    %v2576 = vld [vmem:[%s2573 + $0x8] sm:$0xf]
    %v2577 = vld [vmem:[%s2573 + $0xc] sm:$0xf]
    %v2578 = vld [vmem:[%s2573 + $0x10] sm:$0xf]
    %v2579 = vld [vmem:[%s2573 + $0x14] sm:$0xf]
    %v2580 = vld [vmem:[%s2573 + $0x18] sm:$0xf]
    %v2581 = vld [vmem:[%s2573 + $0x1c] sm:$0xf]
    %v2582 = vld [vmem:[%s2573 + $0x20] sm:$0xf]
    %v2583 = vld [vmem:[%s2573 + $0x24] sm:$0xf]
    %v2584 = vld [vmem:[%s2573 + $0x28] sm:$0xf]
    %v2585 = vld [vmem:[%s2573 + $0x2c] sm:$0xf]
    %v2586 = vld [vmem:[%s2573 + $0x30] sm:$0xf]
    %v2587 = vld [vmem:[%s2573 + $0x34] sm:$0xf]
    %v2588 = vld [vmem:[%s2573 + $0x38] sm:$0xf]
    %v2589 = vld [vmem:[%s2573 + $0x3c] sm:$0xf]
    %s2590 = scalar_lea.vmem %s4, 256
    %v2591 = vld [vmem:[%s2590] sm:$0xff]
    %v2592 = vld [vmem:[%s2590 + $0x8] sm:$0xff]
    %v2593 = vld [vmem:[%s2590 + $0x10] sm:$0xff]
    %v2594 = vld [vmem:[%s2590 + $0x18] sm:$0xff]
    %v2595 = vld [vmem:[%s2590 + $0x20] sm:$0xff]
    %v2596 = vld [vmem:[%s2590 + $0x28] sm:$0xff]
    %v2597 = vld [vmem:[%s2590 + $0x30] sm:$0xff]
    %v2598 = vld [vmem:[%s2590 + $0x38] sm:$0xff]
    %v2599 = vld [vmem:[%s2590 + $0x40] sm:$0xff]
    %v2600 = vld [vmem:[%s2590 + $0x48] sm:$0xff]
    %v2601 = vld [vmem:[%s2590 + $0x50] sm:$0xff]
    %v2602 = vld [vmem:[%s2590 + $0x58] sm:$0xff]
    %v2603 = vld [vmem:[%s2590 + $0x60] sm:$0xff]
    %v2604 = vld [vmem:[%s2590 + $0x68] sm:$0xff]
    %v2605 = vld [vmem:[%s2590 + $0x70] sm:$0xff]
    %v2606 = vld [vmem:[%s2590 + $0x78] sm:$0xff]
    %2608 = vset.pattern.permute.xlu0 0
    %2609 = vperm.xlu0 %2608, %v2591
    %v2610 = vpop.permute.xlu0 %2609
    %2613 = vset.pattern.permute.xlu0 0
    %2614 = vperm.xlu0 %2613, %v2592
    %v2615 = vpop.permute.xlu0 %2614
    %2618 = vset.pattern.permute.xlu0 0
    %2619 = vperm.xlu0 %2618, %v2593
    %v2620 = vpop.permute.xlu0 %2619
    %2623 = vset.pattern.permute.xlu0 0
    %2624 = vperm.xlu0 %2623, %v2594
    %v2625 = vpop.permute.xlu0 %2624
    %2628 = vset.pattern.permute.xlu0 0
    %2629 = vperm.xlu0 %2628, %v2595
    %v2630 = vpop.permute.xlu0 %2629
    %2633 = vset.pattern.permute.xlu0 0
    %2634 = vperm.xlu0 %2633, %v2596
    %v2635 = vpop.permute.xlu0 %2634
    %2638 = vset.pattern.permute.xlu0 0
    %2639 = vperm.xlu0 %2638, %v2597
    %v2640 = vpop.permute.xlu0 %2639
    %2643 = vset.pattern.permute.xlu0 0
    %2644 = vperm.xlu0 %2643, %v2598
    %v2645 = vpop.permute.xlu0 %2644
    %2648 = vset.pattern.permute.xlu0 0
    %2649 = vperm.xlu0 %2648, %v2599
    %v2650 = vpop.permute.xlu0 %2649
    %2653 = vset.pattern.permute.xlu0 0
    %2654 = vperm.xlu0 %2653, %v2600
    %v2655 = vpop.permute.xlu0 %2654
    %2658 = vset.pattern.permute.xlu0 0
    %2659 = vperm.xlu0 %2658, %v2601
    %v2660 = vpop.permute.xlu0 %2659
    %2663 = vset.pattern.permute.xlu0 0
    %2664 = vperm.xlu0 %2663, %v2602
    %v2665 = vpop.permute.xlu0 %2664
    %2668 = vset.pattern.permute.xlu0 0
    %2669 = vperm.xlu0 %2668, %v2603
    %v2670 = vpop.permute.xlu0 %2669
    %2673 = vset.pattern.permute.xlu0 0
    %2674 = vperm.xlu0 %2673, %v2604
    %v2675 = vpop.permute.xlu0 %2674
    %2678 = vset.pattern.permute.xlu0 0
    %2679 = vperm.xlu0 %2678, %v2605
    %v2680 = vpop.permute.xlu0 %2679
    %2683 = vset.pattern.permute.xlu0 0
    %2684 = vperm.xlu0 %2683, %v2606
    %v2685 = vpop.permute.xlu0 %2684
    %v2703 = vunpack.c.l.b16 %v2574
    %v2704 = vunpack.c.l.b16 %v2575
    %v2705 = vunpack.c.l.b16 %v2576
    %v2706 = vunpack.c.l.b16 %v2577
    %v2707 = vunpack.c.l.b16 %v2578
    %v2708 = vunpack.c.l.b16 %v2579
    %v2709 = vunpack.c.l.b16 %v2580
    %v2710 = vunpack.c.l.b16 %v2581
    %v2711 = vunpack.c.l.b16 %v2582
    %v2712 = vunpack.c.l.b16 %v2583
    %v2713 = vunpack.c.l.b16 %v2584
    %v2714 = vunpack.c.l.b16 %v2585
    %v2715 = vunpack.c.l.b16 %v2586
    %v2716 = vunpack.c.l.b16 %v2587
    %v2717 = vunpack.c.l.b16 %v2588
    %v2718 = vunpack.c.l.b16 %v2589
    %v2719 = vpack.c.b16 %v2704, %v2703
    %v2720 = vpack.c.b16 %v2706, %v2705
    %v2721 = vpack.c.b16 %v2708, %v2707
    %v2722 = vpack.c.b16 %v2710, %v2709
    %v2723 = vpack.c.b16 %v2712, %v2711
    %v2724 = vpack.c.b16 %v2714, %v2713
    %v2725 = vpack.c.b16 %v2716, %v2715
    %v2726 = vpack.c.b16 %v2718, %v2717
    %2735 = vmatprep.subr.bf16.mxu0 0
    %2736 = vmatpush1.bf16.msra.mxu0 %v2572
    %2737 = vmatprep.subr.bf16.mxu0 0
    %2738 = vmatpush1.bf16.msra.mxu0 %v2571
    %2739 = vmatprep.subr.bf16.mxu0 0
    %2740 = vmatpush1.bf16.msra.mxu0 %v2570
    %2741 = vmatprep.subr.bf16.mxu0 0
    %2742 = vmatpush1.bf16.msra.mxu0 %v2569
    %2743 = vmatprep.subr.bf16.mxu0 0
    %2744 = vmatpush1.bf16.msra.mxu0 %v2568
    %2745 = vmatprep.subr.bf16.mxu0 0
    %2746 = vmatpush1.bf16.msra.mxu0 %v2567
    %2747 = vmatprep.subr.bf16.mxu0 0
    %2748 = vmatpush1.bf16.msra.mxu0 %v2566
    %2749 = vmatprep.subr.bf16.mxu0 0
    %2750 = vmatpush1.bf16.msra.mxu0 %v2565
    %2751 = vmatprep.subr.bf16.mxu0 0
    %2752 = vmatpush2.bf16.msra.mxu0 0
    %2753 = vmatprep.subr.bf16.mxu0 0
    %2754 = vmatpush2.bf16.msra.mxu0 0
    %2755 = vmatprep.subr.bf16.mxu0 0
    %2756 = vmatpush2.bf16.msra.mxu0 0
    %2757 = vmatprep.subr.bf16.mxu0 0
    %2758 = vmatpush2.bf16.msra.mxu0 0
    %2759 = vmatprep.subr.bf16.mxu0 0
    %2760 = vmatpush2.bf16.msra.mxu0 0
    %2761 = vmatprep.subr.bf16.mxu0 0
    %2762 = vmatpush2.bf16.msra.mxu0 0
    %2763 = vmatprep.subr.bf16.mxu0 0
    %2764 = vmatpush2.bf16.msra.mxu0 0
    %2765 = vmatprep.subr.bf16.mxu0 0
    %2766 = vmatpush2.bf16.msra.mxu0 0
    %2767 = vmatprep.mubr.bf16.mxu0 0
    %2768 = vmatmul.mubr.bf16.gmra.mxu0 %v2719
    %v2769 = vpop.f32.mrf.mxu0
    %v2770 = vadd.f32 %v2610, %v2769
    %v2771 = vpop.f32.mrf.mxu0
    %v2772 = vpop.f32.mrf.mxu0
    %v2773 = vadd.f32 %v2615, %v2772
    %v2774 = vpop.f32.mrf.mxu0
    %2775 = vmatprep.mubr.bf16.mxu0 0
    %2776 = vmatmul.mubr.bf16.gmra.mxu0 %v2720
    %v2777 = vpop.f32.mrf.mxu0
    %v2778 = vadd.f32 %v2620, %v2777
    %v2779 = vpop.f32.mrf.mxu0
    %v2780 = vpop.f32.mrf.mxu0
    %v2781 = vadd.f32 %v2625, %v2780
    %v2782 = vpop.f32.mrf.mxu0
    %2783 = vmatprep.mubr.bf16.mxu0 0
    %2784 = vmatmul.mubr.bf16.gmra.mxu0 %v2721
    %v2785 = vpop.f32.mrf.mxu0
    %v2786 = vadd.f32 %v2630, %v2785
    %v2787 = vpop.f32.mrf.mxu0
    %v2788 = vpop.f32.mrf.mxu0
    %v2789 = vadd.f32 %v2635, %v2788
    %v2790 = vpop.f32.mrf.mxu0
    %2791 = vmatprep.mubr.bf16.mxu0 0
    %2792 = vmatmul.mubr.bf16.gmra.mxu0 %v2722
    %v2793 = vpop.f32.mrf.mxu0
    %v2794 = vadd.f32 %v2640, %v2793
    %v2795 = vpop.f32.mrf.mxu0
    %v2796 = vpop.f32.mrf.mxu0
    %v2797 = vadd.f32 %v2645, %v2796
    %v2798 = vpop.f32.mrf.mxu0
    %2799 = vmatprep.mubr.bf16.mxu0 0
    %2800 = vmatmul.mubr.bf16.gmra.mxu0 %v2723
    %v2801 = vpop.f32.mrf.mxu0
    %v2802 = vadd.f32 %v2650, %v2801
    %v2803 = vpop.f32.mrf.mxu0
    %v2804 = vpop.f32.mrf.mxu0
    %v2805 = vadd.f32 %v2655, %v2804
    %v2806 = vpop.f32.mrf.mxu0
    %2807 = vmatprep.mubr.bf16.mxu0 0
    %2808 = vmatmul.mubr.bf16.gmra.mxu0 %v2724
    %v2809 = vpop.f32.mrf.mxu0
    %v2810 = vadd.f32 %v2660, %v2809
    %v2811 = vpop.f32.mrf.mxu0
    %v2812 = vpop.f32.mrf.mxu0
    %v2813 = vadd.f32 %v2665, %v2812
    %v2814 = vpop.f32.mrf.mxu0
    %2815 = vmatprep.mubr.bf16.mxu0 0
    %2816 = vmatmul.mubr.bf16.gmra.mxu0 %v2725
    %v2817 = vpop.f32.mrf.mxu0
    %v2818 = vadd.f32 %v2670, %v2817
    %v2819 = vpop.f32.mrf.mxu0
    %v2820 = vpop.f32.mrf.mxu0
    %v2821 = vadd.f32 %v2675, %v2820
    %v2822 = vpop.f32.mrf.mxu0
    %2823 = vmatprep.mubr.bf16.mxu0 0
    %2824 = vmatmul.mubr.bf16.gmra.mxu0 %v2726
    %v2825 = vpop.f32.mrf.mxu0
    %v2826 = vadd.f32 %v2680, %v2825
    %v2827 = vpop.f32.mrf.mxu0
    %v2828 = vpop.f32.mrf.mxu0
    %v2829 = vadd.f32 %v2685, %v2828
    %v2830 = vpop.f32.mrf.mxu0
    %2831 = vdwg.mxu0
    %v2832 = vmul.f32 %v2770, 0.01
    %v2833 = vmul.f32 %v2773, 0.01
    %v2834 = vmul.f32 %v2778, 0.01
    %v2835 = vmul.f32 %v2781, 0.01
    %v2836 = vmul.f32 %v2786, 0.01
    %v2837 = vmul.f32 %v2789, 0.01
    %v2838 = vmul.f32 %v2794, 0.01
    %v2839 = vmul.f32 %v2797, 0.01
    %v2840 = vmul.f32 %v2802, 0.01
    %v2841 = vmul.f32 %v2805, 0.01
    %v2842 = vmul.f32 %v2810, 0.01
    %v2843 = vmul.f32 %v2813, 0.01
    %v2844 = vmul.f32 %v2818, 0.01
    %v2845 = vmul.f32 %v2821, 0.01
    %v2846 = vmul.f32 %v2826, 0.01
    %v2847 = vmul.f32 %v2829, 0.01
    %v2848 = vmax.f32 %v2770, %v2832
    %v2849 = vmax.f32 %v2773, %v2833
    %v2850 = vmax.f32 %v2778, %v2834
    %v2851 = vmax.f32 %v2781, %v2835
    %v2852 = vmax.f32 %v2786, %v2836
    %v2853 = vmax.f32 %v2789, %v2837
    %v2854 = vmax.f32 %v2794, %v2838
    %v2855 = vmax.f32 %v2797, %v2839
    %v2856 = vmax.f32 %v2802, %v2840
    %v2857 = vmax.f32 %v2805, %v2841
    %v2858 = vmax.f32 %v2810, %v2842
    %v2859 = vmax.f32 %v2813, %v2843
    %v2860 = vmax.f32 %v2818, %v2844
    %v2861 = vmax.f32 %v2821, %v2845
    %v2862 = vmax.f32 %v2826, %v2846
    %v2863 = vmax.f32 %v2829, %v2847
    %v2864 = vpack.c.bf16 %v2849, %v2848
    %v2865 = vpack.c.bf16 %v2851, %v2850
    %v2866 = vpack.c.bf16 %v2853, %v2852
    %v2867 = vpack.c.bf16 %v2855, %v2854
    %v2868 = vpack.c.bf16 %v2857, %v2856
    %v2869 = vpack.c.bf16 %v2859, %v2858
    %v2870 = vpack.c.bf16 %v2861, %v2860
    %v2871 = vpack.c.bf16 %v2863, %v2862
    %s2872 = scalar_lea.vmem %s5, 8
    %v2873 = vld [vmem:[%s2872] sm:$0xf]
    %s2874 = scalar_lea.vmem %s6, 16
    %v2875 = vld [vmem:[%s2874] sm:$0xff]
    %2877 = vset.pattern.permute.xlu0 0
    %2878 = vperm.xlu0 %2877, %v2875
    %v2879 = vpop.permute.xlu0 %2878
    %2881 = vmatprep.subr.bf16.mxu0 0
    %2882 = vmatpush1.bf16.msra.mxu0 %v2871
    %2883 = vmatprep.subr.bf16.mxu0 0
    %2884 = vmatpush1.bf16.msra.mxu0 %v2870
    %2885 = vmatprep.subr.bf16.mxu0 0
    %2886 = vmatpush1.bf16.msra.mxu0 %v2869
    %2887 = vmatprep.subr.bf16.mxu0 0
    %2888 = vmatpush1.bf16.msra.mxu0 %v2868
    %2889 = vmatprep.subr.bf16.mxu0 0
    %2890 = vmatpush1.bf16.msra.mxu0 %v2867
    %2891 = vmatprep.subr.bf16.mxu0 0
    %2892 = vmatpush1.bf16.msra.mxu0 %v2866
    %2893 = vmatprep.subr.bf16.mxu0 0
    %2894 = vmatpush1.bf16.msra.mxu0 %v2865
    %2895 = vmatprep.subr.bf16.mxu0 0
    %2896 = vmatpush1.bf16.msra.mxu0 %v2864
    %2897 = vmatprep.subr.bf16.mxu0 0
    %2898 = vmatpush2.bf16.msra.mxu0 0
    %2899 = vmatprep.subr.bf16.mxu0 0
    %2900 = vmatpush2.bf16.msra.mxu0 0
    %2901 = vmatprep.subr.bf16.mxu0 0
    %2902 = vmatpush2.bf16.msra.mxu0 0
    %2903 = vmatprep.subr.bf16.mxu0 0
    %2904 = vmatpush2.bf16.msra.mxu0 0
    %2905 = vmatprep.subr.bf16.mxu0 0
    %2906 = vmatpush2.bf16.msra.mxu0 0
    %2907 = vmatprep.subr.bf16.mxu0 0
    %2908 = vmatpush2.bf16.msra.mxu0 0
    %2909 = vmatprep.subr.bf16.mxu0 0
    %2910 = vmatpush2.bf16.msra.mxu0 0
    %2911 = vmatprep.subr.bf16.mxu0 0
    %2912 = vmatpush2.bf16.msra.mxu0 0
    %2913 = vmatprep.mubr.bf16.mxu0 0
    %2914 = vmatmul.mubr.bf16.gmra.mxu0 %v2873
    %v2915 = vpop.f32.mrf.mxu0
    %v2916 = vadd.f32 %v2879, %v2915
    %v2917 = vpop.f32.mrf.mxu0
    %v2918 = vpop.f32.mrf.mxu0
    %v2919 = vpop.f32.mrf.mxu0
    %2920 = vdwg.mxu0
    %v2921 = vtanh.pop %v2916
    %v2922 = vsub.f32 %v755, %v2916
    %v2923 = vsub.f32 0.0, %v2921
    %v2924 = vmul.f32 %v2923, 1.442695
    %v2925 = vpow.pop %v2924
    %v2927 = vrot.slane %v2925, 7
    %v2929 = vmul.f32 %v2922, %v2927
    %v2930 = vsub.f32 %v2206, %v2921
    %s2931 = scalar_lea.vmem %s1, 128
    %v2932 = vld [vmem:[%s2931] sm:$0xff]
    %v2933 = vld [vmem:[%s2931 + $0x8] sm:$0xff]
    %v2934 = vld [vmem:[%s2931 + $0x10] sm:$0xff]
    %v2935 = vld [vmem:[%s2931 + $0x18] sm:$0xff]
    %v2936 = vld [vmem:[%s2931 + $0x20] sm:$0xff]
    %v2937 = vld [vmem:[%s2931 + $0x28] sm:$0xff]
    %v2938 = vld [vmem:[%s2931 + $0x30] sm:$0xff]
    %v2939 = vld [vmem:[%s2931 + $0x38] sm:$0xff]
    %v2940 = vld [vmem:[%s2931 + $0x40] sm:$0xff]
    %v2941 = vld [vmem:[%s2931 + $0x48] sm:$0xff]
    %v2942 = vld [vmem:[%s2931 + $0x50] sm:$0xff]
    %v2943 = vld [vmem:[%s2931 + $0x58] sm:$0xff]
    %v2944 = vld [vmem:[%s2931 + $0x60] sm:$0xff]
    %v2945 = vld [vmem:[%s2931 + $0x68] sm:$0xff]
    %v2946 = vld [vmem:[%s2931 + $0x70] sm:$0xff]
    %v2947 = vld [vmem:[%s2931 + $0x78] sm:$0xff]
    %2949 = vset.pattern.permute.xlu0 0
    %2950 = vperm.xlu0 %2949, %v2932
    %v2951 = vpop.permute.xlu0 %2950
    %2954 = vset.pattern.permute.xlu0 0
    %2955 = vperm.xlu0 %2954, %v2933
    %v2956 = vpop.permute.xlu0 %2955
    %2959 = vset.pattern.permute.xlu0 0
    %2960 = vperm.xlu0 %2959, %v2934
    %v2961 = vpop.permute.xlu0 %2960
    %2964 = vset.pattern.permute.xlu0 0
    %2965 = vperm.xlu0 %2964, %v2935
    %v2966 = vpop.permute.xlu0 %2965
    %2969 = vset.pattern.permute.xlu0 0
    %2970 = vperm.xlu0 %2969, %v2936
    %v2971 = vpop.permute.xlu0 %2970
    %2974 = vset.pattern.permute.xlu0 0
    %2975 = vperm.xlu0 %2974, %v2937
    %v2976 = vpop.permute.xlu0 %2975
    %2979 = vset.pattern.permute.xlu0 0
    %2980 = vperm.xlu0 %2979, %v2938
    %v2981 = vpop.permute.xlu0 %2980
    %2984 = vset.pattern.permute.xlu0 0
    %2985 = vperm.xlu0 %2984, %v2939
    %v2986 = vpop.permute.xlu0 %2985
    %2989 = vset.pattern.permute.xlu0 0
    %2990 = vperm.xlu0 %2989, %v2940
    %v2991 = vpop.permute.xlu0 %2990
    %2994 = vset.pattern.permute.xlu0 0
    %2995 = vperm.xlu0 %2994, %v2941
    %v2996 = vpop.permute.xlu0 %2995
    %2999 = vset.pattern.permute.xlu0 0
    %3000 = vperm.xlu0 %2999, %v2942
    %v3001 = vpop.permute.xlu0 %3000
    %3004 = vset.pattern.permute.xlu0 0
    %3005 = vperm.xlu0 %3004, %v2943
    %v3006 = vpop.permute.xlu0 %3005
    %3009 = vset.pattern.permute.xlu0 0
    %3010 = vperm.xlu0 %3009, %v2944
    %v3011 = vpop.permute.xlu0 %3010
    %3014 = vset.pattern.permute.xlu0 0
    %3015 = vperm.xlu0 %3014, %v2945
    %v3016 = vpop.permute.xlu0 %3015
    %3019 = vset.pattern.permute.xlu0 0
    %3020 = vperm.xlu0 %3019, %v2946
    %v3021 = vpop.permute.xlu0 %3020
    %3024 = vset.pattern.permute.xlu0 0
    %3025 = vperm.xlu0 %3024, %v2947
    %v3026 = vpop.permute.xlu0 %3025
    %v3028 = vlaneseq
    %v3029 = vshrl.u32 %v3028, 7
    %v3030 = vsub.s32 1, %v3029
    %v3031 = vrot.slane %v2929, %v3030
    %v3032 = vmul.f32 %v2951, %v3031
    %v3033 = vmul.f32 %v2956, %v3031
    %v3034 = vmul.f32 %v2961, %v3031
    %v3035 = vmul.f32 %v2966, %v3031
    %v3036 = vmul.f32 %v2971, %v3031
    %v3037 = vmul.f32 %v2976, %v3031
    %v3038 = vmul.f32 %v2981, %v3031
    %v3039 = vmul.f32 %v2986, %v3031
    %v3040 = vmul.f32 %v2991, %v3031
    %v3041 = vmul.f32 %v2996, %v3031
    %v3042 = vmul.f32 %v3001, %v3031
    %v3043 = vmul.f32 %v3006, %v3031
    %v3044 = vmul.f32 %v3011, %v3031
    %v3045 = vmul.f32 %v3016, %v3031
    %v3046 = vmul.f32 %v3021, %v3031
    %v3047 = vmul.f32 %v3026, %v3031
    %3048 = vset.pattern.permute.xlu0 1
    %3049 = vperm.xlu0 %3048, %v2932
    %v3050 = vpop.permute.xlu0 %3049
    %3052 = vset.pattern.permute.xlu0 1
    %3053 = vperm.xlu0 %3052, %v2933
    %v3054 = vpop.permute.xlu0 %3053
    %3056 = vset.pattern.permute.xlu0 1
    %3057 = vperm.xlu0 %3056, %v2934
    %v3058 = vpop.permute.xlu0 %3057
    %3060 = vset.pattern.permute.xlu0 1
    %3061 = vperm.xlu0 %3060, %v2935
    %v3062 = vpop.permute.xlu0 %3061
    %3064 = vset.pattern.permute.xlu0 1
    %3065 = vperm.xlu0 %3064, %v2936
    %v3066 = vpop.permute.xlu0 %3065
    %3068 = vset.pattern.permute.xlu0 1
    %3069 = vperm.xlu0 %3068, %v2937
    %v3070 = vpop.permute.xlu0 %3069
    %3072 = vset.pattern.permute.xlu0 1
    %3073 = vperm.xlu0 %3072, %v2938
    %v3074 = vpop.permute.xlu0 %3073
    %3076 = vset.pattern.permute.xlu0 1
    %3077 = vperm.xlu0 %3076, %v2939
    %v3078 = vpop.permute.xlu0 %3077
    %3080 = vset.pattern.permute.xlu0 1
    %3081 = vperm.xlu0 %3080, %v2940
    %v3082 = vpop.permute.xlu0 %3081
    %3084 = vset.pattern.permute.xlu0 1
    %3085 = vperm.xlu0 %3084, %v2941
    %v3086 = vpop.permute.xlu0 %3085
    %3088 = vset.pattern.permute.xlu0 1
    %3089 = vperm.xlu0 %3088, %v2942
    %v3090 = vpop.permute.xlu0 %3089
    %3092 = vset.pattern.permute.xlu0 1
    %3093 = vperm.xlu0 %3092, %v2943
    %v3094 = vpop.permute.xlu0 %3093
    %3096 = vset.pattern.permute.xlu0 1
    %3097 = vperm.xlu0 %3096, %v2944
    %v3098 = vpop.permute.xlu0 %3097
    %3100 = vset.pattern.permute.xlu0 1
    %3101 = vperm.xlu0 %3100, %v2945
    %v3102 = vpop.permute.xlu0 %3101
    %3104 = vset.pattern.permute.xlu0 1
    %3105 = vperm.xlu0 %3104, %v2946
    %v3106 = vpop.permute.xlu0 %3105
    %3108 = vset.pattern.permute.xlu0 1
    %3109 = vperm.xlu0 %3108, %v2947
    %v3110 = vpop.permute.xlu0 %3109
    %v3112 = vmul.f32 %v3050, %v2387
    %v3113 = vmul.f32 %v3054, %v2387
    %v3114 = vmul.f32 %v3058, %v2387
    %v3115 = vmul.f32 %v3062, %v2387
    %v3116 = vmul.f32 %v3066, %v2387
    %v3117 = vmul.f32 %v3070, %v2387
    %v3118 = vmul.f32 %v3074, %v2387
    %v3119 = vmul.f32 %v3078, %v2387
    %v3120 = vmul.f32 %v3082, %v2387
    %v3121 = vmul.f32 %v3086, %v2387
    %v3122 = vmul.f32 %v3090, %v2387
    %v3123 = vmul.f32 %v3094, %v2387
    %v3124 = vmul.f32 %v3098, %v2387
    %v3125 = vmul.f32 %v3102, %v2387
    %v3126 = vmul.f32 %v3106, %v2387
    %v3127 = vmul.f32 %v3110, %v2387
    %v3128 = vadd.f32 %v3032, %v3112
    %v3129 = vadd.f32 %v3033, %v3113
    %v3130 = vadd.f32 %v3034, %v3114
    %v3131 = vadd.f32 %v3035, %v3115
    %v3132 = vadd.f32 %v3036, %v3116
    %v3133 = vadd.f32 %v3037, %v3117
    %v3134 = vadd.f32 %v3038, %v3118
    %v3135 = vadd.f32 %v3039, %v3119
    %v3136 = vadd.f32 %v3040, %v3120
    %v3137 = vadd.f32 %v3041, %v3121
    %v3138 = vadd.f32 %v3042, %v3122
    %v3139 = vadd.f32 %v3043, %v3123
    %v3140 = vadd.f32 %v3044, %v3124
    %v3141 = vadd.f32 %v3045, %v3125
    %v3142 = vadd.f32 %v3046, %v3126
    %v3143 = vadd.f32 %v3047, %v3127
    %s3144 = scalar_lea.vmem %s2, 128
    %v3145 = vld [vmem:[%s3144] sm:$0xff]
    %v3146 = vld [vmem:[%s3144 + $0x8] sm:$0xff]
    %v3147 = vld [vmem:[%s3144 + $0x10] sm:$0xff]
    %v3148 = vld [vmem:[%s3144 + $0x18] sm:$0xff]
    %v3149 = vld [vmem:[%s3144 + $0x20] sm:$0xff]
    %v3150 = vld [vmem:[%s3144 + $0x28] sm:$0xff]
    %v3151 = vld [vmem:[%s3144 + $0x30] sm:$0xff]
    %v3152 = vld [vmem:[%s3144 + $0x38] sm:$0xff]
    %v3153 = vld [vmem:[%s3144 + $0x40] sm:$0xff]
    %v3154 = vld [vmem:[%s3144 + $0x48] sm:$0xff]
    %v3155 = vld [vmem:[%s3144 + $0x50] sm:$0xff]
    %v3156 = vld [vmem:[%s3144 + $0x58] sm:$0xff]
    %v3157 = vld [vmem:[%s3144 + $0x60] sm:$0xff]
    %v3158 = vld [vmem:[%s3144 + $0x68] sm:$0xff]
    %v3159 = vld [vmem:[%s3144 + $0x70] sm:$0xff]
    %v3160 = vld [vmem:[%s3144 + $0x78] sm:$0xff]
    %3162 = vset.pattern.permute.xlu0 0
    %3163 = vperm.xlu0 %3162, %v3145
    %v3164 = vpop.permute.xlu0 %3163
    %3167 = vset.pattern.permute.xlu0 0
    %3168 = vperm.xlu0 %3167, %v3146
    %v3169 = vpop.permute.xlu0 %3168
    %3172 = vset.pattern.permute.xlu0 0
    %3173 = vperm.xlu0 %3172, %v3147
    %v3174 = vpop.permute.xlu0 %3173
    %3177 = vset.pattern.permute.xlu0 0
    %3178 = vperm.xlu0 %3177, %v3148
    %v3179 = vpop.permute.xlu0 %3178
    %3182 = vset.pattern.permute.xlu0 0
    %3183 = vperm.xlu0 %3182, %v3149
    %v3184 = vpop.permute.xlu0 %3183
    %3187 = vset.pattern.permute.xlu0 0
    %3188 = vperm.xlu0 %3187, %v3150
    %v3189 = vpop.permute.xlu0 %3188
    %3192 = vset.pattern.permute.xlu0 0
    %3193 = vperm.xlu0 %3192, %v3151
    %v3194 = vpop.permute.xlu0 %3193
    %3197 = vset.pattern.permute.xlu0 0
    %3198 = vperm.xlu0 %3197, %v3152
    %v3199 = vpop.permute.xlu0 %3198
    %3202 = vset.pattern.permute.xlu0 0
    %3203 = vperm.xlu0 %3202, %v3153
    %v3204 = vpop.permute.xlu0 %3203
    %3207 = vset.pattern.permute.xlu0 0
    %3208 = vperm.xlu0 %3207, %v3154
    %v3209 = vpop.permute.xlu0 %3208
    %3212 = vset.pattern.permute.xlu0 0
    %3213 = vperm.xlu0 %3212, %v3155
    %v3214 = vpop.permute.xlu0 %3213
    %3217 = vset.pattern.permute.xlu0 0
    %3218 = vperm.xlu0 %3217, %v3156
    %v3219 = vpop.permute.xlu0 %3218
    %3222 = vset.pattern.permute.xlu0 0
    %3223 = vperm.xlu0 %3222, %v3157
    %v3224 = vpop.permute.xlu0 %3223
    %3227 = vset.pattern.permute.xlu0 0
    %3228 = vperm.xlu0 %3227, %v3158
    %v3229 = vpop.permute.xlu0 %3228
    %3232 = vset.pattern.permute.xlu0 0
    %3233 = vperm.xlu0 %3232, %v3159
    %v3234 = vpop.permute.xlu0 %3233
    %3237 = vset.pattern.permute.xlu0 0
    %3238 = vperm.xlu0 %3237, %v3160
    %v3239 = vpop.permute.xlu0 %3238
    %v3241 = vadd.f32 %v3128, %v3164
    %v3242 = vadd.f32 %v3129, %v3169
    %v3243 = vadd.f32 %v3130, %v3174
    %v3244 = vadd.f32 %v3131, %v3179
    %v3245 = vadd.f32 %v3132, %v3184
    %v3246 = vadd.f32 %v3133, %v3189
    %v3247 = vadd.f32 %v3134, %v3194
    %v3248 = vadd.f32 %v3135, %v3199
    %v3249 = vadd.f32 %v3136, %v3204
    %v3250 = vadd.f32 %v3137, %v3209
    %v3251 = vadd.f32 %v3138, %v3214
    %v3252 = vadd.f32 %v3139, %v3219
    %v3253 = vadd.f32 %v3140, %v3224
    %v3254 = vadd.f32 %v3141, %v3229
    %v3255 = vadd.f32 %v3142, %v3234
    %v3256 = vadd.f32 %v3143, %v3239
    %v3257 = vmul.f32 %v3241, 0.01
    %v3258 = vmul.f32 %v3242, 0.01
    %v3259 = vmul.f32 %v3243, 0.01
    %v3260 = vmul.f32 %v3244, 0.01
    %v3261 = vmul.f32 %v3245, 0.01
    %v3262 = vmul.f32 %v3246, 0.01
    %v3263 = vmul.f32 %v3247, 0.01
    %v3264 = vmul.f32 %v3248, 0.01
    %v3265 = vmul.f32 %v3249, 0.01
    %v3266 = vmul.f32 %v3250, 0.01
    %v3267 = vmul.f32 %v3251, 0.01
    %v3268 = vmul.f32 %v3252, 0.01
    %v3269 = vmul.f32 %v3253, 0.01
    %v3270 = vmul.f32 %v3254, 0.01
    %v3271 = vmul.f32 %v3255, 0.01
    %v3272 = vmul.f32 %v3256, 0.01
    %v3273 = vmax.f32 %v3241, %v3257
    %v3274 = vmax.f32 %v3242, %v3258
    %v3275 = vmax.f32 %v3243, %v3259
    %v3276 = vmax.f32 %v3244, %v3260
    %v3277 = vmax.f32 %v3245, %v3261
    %v3278 = vmax.f32 %v3246, %v3262
    %v3279 = vmax.f32 %v3247, %v3263
    %v3280 = vmax.f32 %v3248, %v3264
    %v3281 = vmax.f32 %v3249, %v3265
    %v3282 = vmax.f32 %v3250, %v3266
    %v3283 = vmax.f32 %v3251, %v3267
    %v3284 = vmax.f32 %v3252, %v3268
    %v3285 = vmax.f32 %v3253, %v3269
    %v3286 = vmax.f32 %v3254, %v3270
    %v3287 = vmax.f32 %v3255, %v3271
    %v3288 = vmax.f32 %v3256, %v3272
    %v3289 = vpack.c.bf16 %v3274, %v3273
    %v3290 = vpack.c.bf16 %v3276, %v3275
    %v3291 = vpack.c.bf16 %v3278, %v3277
    %v3292 = vpack.c.bf16 %v3280, %v3279
    %v3293 = vpack.c.bf16 %v3282, %v3281
    %v3294 = vpack.c.bf16 %v3284, %v3283
    %v3295 = vpack.c.bf16 %v3286, %v3285
    %v3296 = vpack.c.bf16 %v3288, %v3287
    %s3297 = scalar_lea.vmem %s3, 64
    %v3298 = vld [vmem:[%s3297] sm:$0xf]
    %v3299 = vld [vmem:[%s3297 + $0x4] sm:$0xf]
    %v3300 = vld [vmem:[%s3297 + $0x8] sm:$0xf]
    %v3301 = vld [vmem:[%s3297 + $0xc] sm:$0xf]
    %v3302 = vld [vmem:[%s3297 + $0x10] sm:$0xf]
    %v3303 = vld [vmem:[%s3297 + $0x14] sm:$0xf]
    %v3304 = vld [vmem:[%s3297 + $0x18] sm:$0xf]
    %v3305 = vld [vmem:[%s3297 + $0x1c] sm:$0xf]
    %v3306 = vld [vmem:[%s3297 + $0x20] sm:$0xf]
    %v3307 = vld [vmem:[%s3297 + $0x24] sm:$0xf]
    %v3308 = vld [vmem:[%s3297 + $0x28] sm:$0xf]
    %v3309 = vld [vmem:[%s3297 + $0x2c] sm:$0xf]
    %v3310 = vld [vmem:[%s3297 + $0x30] sm:$0xf]
    %v3311 = vld [vmem:[%s3297 + $0x34] sm:$0xf]
    %v3312 = vld [vmem:[%s3297 + $0x38] sm:$0xf]
    %v3313 = vld [vmem:[%s3297 + $0x3c] sm:$0xf]
    %s3314 = scalar_lea.vmem %s4, 128
    %v3315 = vld [vmem:[%s3314] sm:$0xff]
    %v3316 = vld [vmem:[%s3314 + $0x8] sm:$0xff]
    %v3317 = vld [vmem:[%s3314 + $0x10] sm:$0xff]
    %v3318 = vld [vmem:[%s3314 + $0x18] sm:$0xff]
    %v3319 = vld [vmem:[%s3314 + $0x20] sm:$0xff]
    %v3320 = vld [vmem:[%s3314 + $0x28] sm:$0xff]
    %v3321 = vld [vmem:[%s3314 + $0x30] sm:$0xff]
    %v3322 = vld [vmem:[%s3314 + $0x38] sm:$0xff]
    %v3323 = vld [vmem:[%s3314 + $0x40] sm:$0xff]
    %v3324 = vld [vmem:[%s3314 + $0x48] sm:$0xff]
    %v3325 = vld [vmem:[%s3314 + $0x50] sm:$0xff]
    %v3326 = vld [vmem:[%s3314 + $0x58] sm:$0xff]
    %v3327 = vld [vmem:[%s3314 + $0x60] sm:$0xff]
    %v3328 = vld [vmem:[%s3314 + $0x68] sm:$0xff]
    %v3329 = vld [vmem:[%s3314 + $0x70] sm:$0xff]
    %v3330 = vld [vmem:[%s3314 + $0x78] sm:$0xff]
    %3332 = vset.pattern.permute.xlu0 0
    %3333 = vperm.xlu0 %3332, %v3315
    %v3334 = vpop.permute.xlu0 %3333
    %3337 = vset.pattern.permute.xlu0 0
    %3338 = vperm.xlu0 %3337, %v3316
    %v3339 = vpop.permute.xlu0 %3338
    %3342 = vset.pattern.permute.xlu0 0
    %3343 = vperm.xlu0 %3342, %v3317
    %v3344 = vpop.permute.xlu0 %3343
    %3347 = vset.pattern.permute.xlu0 0
    %3348 = vperm.xlu0 %3347, %v3318
    %v3349 = vpop.permute.xlu0 %3348
    %3352 = vset.pattern.permute.xlu0 0
    %3353 = vperm.xlu0 %3352, %v3319
    %v3354 = vpop.permute.xlu0 %3353
    %3357 = vset.pattern.permute.xlu0 0
    %3358 = vperm.xlu0 %3357, %v3320
    %v3359 = vpop.permute.xlu0 %3358
    %3362 = vset.pattern.permute.xlu0 0
    %3363 = vperm.xlu0 %3362, %v3321
    %v3364 = vpop.permute.xlu0 %3363
    %3367 = vset.pattern.permute.xlu0 0
    %3368 = vperm.xlu0 %3367, %v3322
    %v3369 = vpop.permute.xlu0 %3368
    %3372 = vset.pattern.permute.xlu0 0
    %3373 = vperm.xlu0 %3372, %v3323
    %v3374 = vpop.permute.xlu0 %3373
    %3377 = vset.pattern.permute.xlu0 0
    %3378 = vperm.xlu0 %3377, %v3324
    %v3379 = vpop.permute.xlu0 %3378
    %3382 = vset.pattern.permute.xlu0 0
    %3383 = vperm.xlu0 %3382, %v3325
    %v3384 = vpop.permute.xlu0 %3383
    %3387 = vset.pattern.permute.xlu0 0
    %3388 = vperm.xlu0 %3387, %v3326
    %v3389 = vpop.permute.xlu0 %3388
    %3392 = vset.pattern.permute.xlu0 0
    %3393 = vperm.xlu0 %3392, %v3327
    %v3394 = vpop.permute.xlu0 %3393
    %3397 = vset.pattern.permute.xlu0 0
    %3398 = vperm.xlu0 %3397, %v3328
    %v3399 = vpop.permute.xlu0 %3398
    %3402 = vset.pattern.permute.xlu0 0
    %3403 = vperm.xlu0 %3402, %v3329
    %v3404 = vpop.permute.xlu0 %3403
    %3407 = vset.pattern.permute.xlu0 0
    %3408 = vperm.xlu0 %3407, %v3330
    %v3409 = vpop.permute.xlu0 %3408
    %v3427 = vunpack.c.l.b16 %v3298
    %v3428 = vunpack.c.l.b16 %v3299
    %v3429 = vunpack.c.l.b16 %v3300
    %v3430 = vunpack.c.l.b16 %v3301
    %v3431 = vunpack.c.l.b16 %v3302
    %v3432 = vunpack.c.l.b16 %v3303
    %v3433 = vunpack.c.l.b16 %v3304
    %v3434 = vunpack.c.l.b16 %v3305
    %v3435 = vunpack.c.l.b16 %v3306
    %v3436 = vunpack.c.l.b16 %v3307
    %v3437 = vunpack.c.l.b16 %v3308
    %v3438 = vunpack.c.l.b16 %v3309
    %v3439 = vunpack.c.l.b16 %v3310
    %v3440 = vunpack.c.l.b16 %v3311
    %v3441 = vunpack.c.l.b16 %v3312
    %v3442 = vunpack.c.l.b16 %v3313
    %v3443 = vpack.c.b16 %v3428, %v3427
    %v3444 = vpack.c.b16 %v3430, %v3429
    %v3445 = vpack.c.b16 %v3432, %v3431
    %v3446 = vpack.c.b16 %v3434, %v3433
    %v3447 = vpack.c.b16 %v3436, %v3435
    %v3448 = vpack.c.b16 %v3438, %v3437
    %v3449 = vpack.c.b16 %v3440, %v3439
    %v3450 = vpack.c.b16 %v3442, %v3441
    %3459 = vmatprep.subr.bf16.mxu0 0
    %3460 = vmatpush1.bf16.msra.mxu0 %v3296
    %3461 = vmatprep.subr.bf16.mxu0 0
    %3462 = vmatpush1.bf16.msra.mxu0 %v3295
    %3463 = vmatprep.subr.bf16.mxu0 0
    %3464 = vmatpush1.bf16.msra.mxu0 %v3294
    %3465 = vmatprep.subr.bf16.mxu0 0
    %3466 = vmatpush1.bf16.msra.mxu0 %v3293
    %3467 = vmatprep.subr.bf16.mxu0 0
    %3468 = vmatpush1.bf16.msra.mxu0 %v3292
    %3469 = vmatprep.subr.bf16.mxu0 0
    %3470 = vmatpush1.bf16.msra.mxu0 %v3291
    %3471 = vmatprep.subr.bf16.mxu0 0
    %3472 = vmatpush1.bf16.msra.mxu0 %v3290
    %3473 = vmatprep.subr.bf16.mxu0 0
    %3474 = vmatpush1.bf16.msra.mxu0 %v3289
    %3475 = vmatprep.subr.bf16.mxu0 0
    %3476 = vmatpush2.bf16.msra.mxu0 0
    %3477 = vmatprep.subr.bf16.mxu0 0
    %3478 = vmatpush2.bf16.msra.mxu0 0
    %3479 = vmatprep.subr.bf16.mxu0 0
    %3480 = vmatpush2.bf16.msra.mxu0 0
    %3481 = vmatprep.subr.bf16.mxu0 0
    %3482 = vmatpush2.bf16.msra.mxu0 0
    %3483 = vmatprep.subr.bf16.mxu0 0
    %3484 = vmatpush2.bf16.msra.mxu0 0
    %3485 = vmatprep.subr.bf16.mxu0 0
    %3486 = vmatpush2.bf16.msra.mxu0 0
    %3487 = vmatprep.subr.bf16.mxu0 0
    %3488 = vmatpush2.bf16.msra.mxu0 0
    %3489 = vmatprep.subr.bf16.mxu0 0
    %3490 = vmatpush2.bf16.msra.mxu0 0
    %3491 = vmatprep.mubr.bf16.mxu0 0
    %3492 = vmatmul.mubr.bf16.gmra.mxu0 %v3443
    %v3493 = vpop.f32.mrf.mxu0
    %v3494 = vadd.f32 %v3334, %v3493
    %v3495 = vpop.f32.mrf.mxu0
    %v3496 = vpop.f32.mrf.mxu0
    %v3497 = vadd.f32 %v3339, %v3496
    %v3498 = vpop.f32.mrf.mxu0
    %3499 = vmatprep.mubr.bf16.mxu0 0
    %3500 = vmatmul.mubr.bf16.gmra.mxu0 %v3444
    %v3501 = vpop.f32.mrf.mxu0
    %v3502 = vadd.f32 %v3344, %v3501
    %v3503 = vpop.f32.mrf.mxu0
    %v3504 = vpop.f32.mrf.mxu0
    %v3505 = vadd.f32 %v3349, %v3504
    %v3506 = vpop.f32.mrf.mxu0
    %3507 = vmatprep.mubr.bf16.mxu0 0
    %3508 = vmatmul.mubr.bf16.gmra.mxu0 %v3445
    %v3509 = vpop.f32.mrf.mxu0
    %v3510 = vadd.f32 %v3354, %v3509
    %v3511 = vpop.f32.mrf.mxu0
    %v3512 = vpop.f32.mrf.mxu0
    %v3513 = vadd.f32 %v3359, %v3512
    %v3514 = vpop.f32.mrf.mxu0
    %3515 = vmatprep.mubr.bf16.mxu0 0
    %3516 = vmatmul.mubr.bf16.gmra.mxu0 %v3446
    %v3517 = vpop.f32.mrf.mxu0
    %v3518 = vadd.f32 %v3364, %v3517
    %v3519 = vpop.f32.mrf.mxu0
    %v3520 = vpop.f32.mrf.mxu0
    %v3521 = vadd.f32 %v3369, %v3520
    %v3522 = vpop.f32.mrf.mxu0
    %3523 = vmatprep.mubr.bf16.mxu0 0
    %3524 = vmatmul.mubr.bf16.gmra.mxu0 %v3447
    %v3525 = vpop.f32.mrf.mxu0
    %v3526 = vadd.f32 %v3374, %v3525
    %v3527 = vpop.f32.mrf.mxu0
    %v3528 = vpop.f32.mrf.mxu0
    %v3529 = vadd.f32 %v3379, %v3528
    %v3530 = vpop.f32.mrf.mxu0
    %3531 = vmatprep.mubr.bf16.mxu0 0
    %3532 = vmatmul.mubr.bf16.gmra.mxu0 %v3448
    %v3533 = vpop.f32.mrf.mxu0
    %v3534 = vadd.f32 %v3384, %v3533
    %v3535 = vpop.f32.mrf.mxu0
    %v3536 = vpop.f32.mrf.mxu0
    %v3537 = vadd.f32 %v3389, %v3536
    %v3538 = vpop.f32.mrf.mxu0
    %3539 = vmatprep.mubr.bf16.mxu0 0
    %3540 = vmatmul.mubr.bf16.gmra.mxu0 %v3449
    %v3541 = vpop.f32.mrf.mxu0
    %v3542 = vadd.f32 %v3394, %v3541
    %v3543 = vpop.f32.mrf.mxu0
    %v3544 = vpop.f32.mrf.mxu0
    %v3545 = vadd.f32 %v3399, %v3544
    %v3546 = vpop.f32.mrf.mxu0
    %3547 = vmatprep.mubr.bf16.mxu0 0
    %3548 = vmatmul.mubr.bf16.gmra.mxu0 %v3450
    %v3549 = vpop.f32.mrf.mxu0
    %v3550 = vadd.f32 %v3404, %v3549
    %v3551 = vpop.f32.mrf.mxu0
    %v3552 = vpop.f32.mrf.mxu0
    %v3553 = vadd.f32 %v3409, %v3552
    %v3554 = vpop.f32.mrf.mxu0
    %3555 = vdwg.mxu0
    %v3556 = vmul.f32 %v3494, 0.01
    %v3557 = vmul.f32 %v3497, 0.01
    %v3558 = vmul.f32 %v3502, 0.01
    %v3559 = vmul.f32 %v3505, 0.01
    %v3560 = vmul.f32 %v3510, 0.01
    %v3561 = vmul.f32 %v3513, 0.01
    %v3562 = vmul.f32 %v3518, 0.01
    %v3563 = vmul.f32 %v3521, 0.01
    %v3564 = vmul.f32 %v3526, 0.01
    %v3565 = vmul.f32 %v3529, 0.01
    %v3566 = vmul.f32 %v3534, 0.01
    %v3567 = vmul.f32 %v3537, 0.01
    %v3568 = vmul.f32 %v3542, 0.01
    %v3569 = vmul.f32 %v3545, 0.01
    %v3570 = vmul.f32 %v3550, 0.01
    %v3571 = vmul.f32 %v3553, 0.01
    %v3572 = vmax.f32 %v3494, %v3556
    %v3573 = vmax.f32 %v3497, %v3557
    %v3574 = vmax.f32 %v3502, %v3558
    %v3575 = vmax.f32 %v3505, %v3559
    %v3576 = vmax.f32 %v3510, %v3560
    %v3577 = vmax.f32 %v3513, %v3561
    %v3578 = vmax.f32 %v3518, %v3562
    %v3579 = vmax.f32 %v3521, %v3563
    %v3580 = vmax.f32 %v3526, %v3564
    %v3581 = vmax.f32 %v3529, %v3565
    %v3582 = vmax.f32 %v3534, %v3566
    %v3583 = vmax.f32 %v3537, %v3567
    %v3584 = vmax.f32 %v3542, %v3568
    %v3585 = vmax.f32 %v3545, %v3569
    %v3586 = vmax.f32 %v3550, %v3570
    %v3587 = vmax.f32 %v3553, %v3571
    %v3588 = vpack.c.bf16 %v3573, %v3572
    %v3589 = vpack.c.bf16 %v3575, %v3574
    %v3590 = vpack.c.bf16 %v3577, %v3576
    %v3591 = vpack.c.bf16 %v3579, %v3578
    %v3592 = vpack.c.bf16 %v3581, %v3580
    %v3593 = vpack.c.bf16 %v3583, %v3582
    %v3594 = vpack.c.bf16 %v3585, %v3584
    %v3595 = vpack.c.bf16 %v3587, %v3586
    %s3596 = scalar_lea.vmem %s5, 4
    %v3597 = vld [vmem:[%s3596] sm:$0xf]
    %s3598 = scalar_lea.vmem %s6, 8
    %v3599 = vld [vmem:[%s3598] sm:$0xff]
    %3601 = vset.pattern.permute.xlu0 0
    %3602 = vperm.xlu0 %3601, %v3599
    %v3603 = vpop.permute.xlu0 %3602
    %3605 = vmatprep.subr.bf16.mxu0 0
    %3606 = vmatpush1.bf16.msra.mxu0 %v3595
    %3607 = vmatprep.subr.bf16.mxu0 0
    %3608 = vmatpush1.bf16.msra.mxu0 %v3594
    %3609 = vmatprep.subr.bf16.mxu0 0
    %3610 = vmatpush1.bf16.msra.mxu0 %v3593
    %3611 = vmatprep.subr.bf16.mxu0 0
    %3612 = vmatpush1.bf16.msra.mxu0 %v3592
    %3613 = vmatprep.subr.bf16.mxu0 0
    %3614 = vmatpush1.bf16.msra.mxu0 %v3591
    %3615 = vmatprep.subr.bf16.mxu0 0
    %3616 = vmatpush1.bf16.msra.mxu0 %v3590
    %3617 = vmatprep.subr.bf16.mxu0 0
    %3618 = vmatpush1.bf16.msra.mxu0 %v3589
    %3619 = vmatprep.subr.bf16.mxu0 0
    %3620 = vmatpush1.bf16.msra.mxu0 %v3588
    %3621 = vmatprep.subr.bf16.mxu0 0
    %3622 = vmatpush2.bf16.msra.mxu0 0
    %3623 = vmatprep.subr.bf16.mxu0 0
    %3624 = vmatpush2.bf16.msra.mxu0 0
    %3625 = vmatprep.subr.bf16.mxu0 0
    %3626 = vmatpush2.bf16.msra.mxu0 0
    %3627 = vmatprep.subr.bf16.mxu0 0
    %3628 = vmatpush2.bf16.msra.mxu0 0
    %3629 = vmatprep.subr.bf16.mxu0 0
    %3630 = vmatpush2.bf16.msra.mxu0 0
    %3631 = vmatprep.subr.bf16.mxu0 0
    %3632 = vmatpush2.bf16.msra.mxu0 0
    %3633 = vmatprep.subr.bf16.mxu0 0
    %3634 = vmatpush2.bf16.msra.mxu0 0
    %3635 = vmatprep.subr.bf16.mxu0 0
    %3636 = vmatpush2.bf16.msra.mxu0 0
    %3637 = vmatprep.mubr.bf16.mxu0 0
    %3638 = vmatmul.mubr.bf16.gmra.mxu0 %v3597
    %v3639 = vpop.f32.mrf.mxu0
    %v3640 = vadd.f32 %v3603, %v3639
    %v3641 = vpop.f32.mrf.mxu0
    %v3642 = vpop.f32.mrf.mxu0
    %v3643 = vpop.f32.mrf.mxu0
    %3644 = vdwg.mxu0
    %v3645 = vtanh.pop %v3640
    %v3647 = vrot.slane %v3640, 1
    %v3649 = vsub.f32 %v1478, %v3647
    %v3650 = vsub.f32 0.0, %v3645
    %v3651 = vmul.f32 %v3650, 1.442695
    %v3652 = vpow.pop %v3651
    %v3653 = vmul.f32 %v3649, %v3652
    %v3654 = vsub.f32 %v2930, %v3645
    %v3655 = vld [vmem:[%s1] sm:$0xff]
    %v3656 = vld [vmem:[%s1 + $0x8] sm:$0xff]
    %v3657 = vld [vmem:[%s1 + $0x10] sm:$0xff]
    %v3658 = vld [vmem:[%s1 + $0x18] sm:$0xff]
    %v3659 = vld [vmem:[%s1 + $0x20] sm:$0xff]
    %v3660 = vld [vmem:[%s1 + $0x28] sm:$0xff]
    %v3661 = vld [vmem:[%s1 + $0x30] sm:$0xff]
    %v3662 = vld [vmem:[%s1 + $0x38] sm:$0xff]
    %v3663 = vld [vmem:[%s1 + $0x40] sm:$0xff]
    %v3664 = vld [vmem:[%s1 + $0x48] sm:$0xff]
    %v3665 = vld [vmem:[%s1 + $0x50] sm:$0xff]
    %v3666 = vld [vmem:[%s1 + $0x58] sm:$0xff]
    %v3667 = vld [vmem:[%s1 + $0x60] sm:$0xff]
    %v3668 = vld [vmem:[%s1 + $0x68] sm:$0xff]
    %v3669 = vld [vmem:[%s1 + $0x70] sm:$0xff]
    %v3670 = vld [vmem:[%s1 + $0x78] sm:$0xff]
    %3672 = vset.pattern.permute.xlu0 0
    %3673 = vperm.xlu0 %3672, %v3655
    %v3674 = vpop.permute.xlu0 %3673
    %3677 = vset.pattern.permute.xlu0 0
    %3678 = vperm.xlu0 %3677, %v3656
    %v3679 = vpop.permute.xlu0 %3678
    %3682 = vset.pattern.permute.xlu0 0
    %3683 = vperm.xlu0 %3682, %v3657
    %v3684 = vpop.permute.xlu0 %3683
    %3687 = vset.pattern.permute.xlu0 0
    %3688 = vperm.xlu0 %3687, %v3658
    %v3689 = vpop.permute.xlu0 %3688
    %3692 = vset.pattern.permute.xlu0 0
    %3693 = vperm.xlu0 %3692, %v3659
    %v3694 = vpop.permute.xlu0 %3693
    %3697 = vset.pattern.permute.xlu0 0
    %3698 = vperm.xlu0 %3697, %v3660
    %v3699 = vpop.permute.xlu0 %3698
    %3702 = vset.pattern.permute.xlu0 0
    %3703 = vperm.xlu0 %3702, %v3661
    %v3704 = vpop.permute.xlu0 %3703
    %3707 = vset.pattern.permute.xlu0 0
    %3708 = vperm.xlu0 %3707, %v3662
    %v3709 = vpop.permute.xlu0 %3708
    %3712 = vset.pattern.permute.xlu0 0
    %3713 = vperm.xlu0 %3712, %v3663
    %v3714 = vpop.permute.xlu0 %3713
    %3717 = vset.pattern.permute.xlu0 0
    %3718 = vperm.xlu0 %3717, %v3664
    %v3719 = vpop.permute.xlu0 %3718
    %3722 = vset.pattern.permute.xlu0 0
    %3723 = vperm.xlu0 %3722, %v3665
    %v3724 = vpop.permute.xlu0 %3723
    %3727 = vset.pattern.permute.xlu0 0
    %3728 = vperm.xlu0 %3727, %v3666
    %v3729 = vpop.permute.xlu0 %3728
    %3732 = vset.pattern.permute.xlu0 0
    %3733 = vperm.xlu0 %3732, %v3667
    %v3734 = vpop.permute.xlu0 %3733
    %3737 = vset.pattern.permute.xlu0 0
    %3738 = vperm.xlu0 %3737, %v3668
    %v3739 = vpop.permute.xlu0 %3738
    %3742 = vset.pattern.permute.xlu0 0
    %3743 = vperm.xlu0 %3742, %v3669
    %v3744 = vpop.permute.xlu0 %3743
    %3747 = vset.pattern.permute.xlu0 0
    %3748 = vperm.xlu0 %3747, %v3670
    %v3749 = vpop.permute.xlu0 %3748
    %v3751 = vlaneseq
    %v3752 = vshrl.u32 %v3751, 7
    %v3753 = vsub.s32 0, %v3752
    %v3754 = vrot.slane %v3653, %v3753
    %v3755 = vmul.f32 %v3674, %v3754
    %v3756 = vmul.f32 %v3679, %v3754
    %v3757 = vmul.f32 %v3684, %v3754
    %v3758 = vmul.f32 %v3689, %v3754
    %v3759 = vmul.f32 %v3694, %v3754
    %v3760 = vmul.f32 %v3699, %v3754
    %v3761 = vmul.f32 %v3704, %v3754
    %v3762 = vmul.f32 %v3709, %v3754
    %v3763 = vmul.f32 %v3714, %v3754
    %v3764 = vmul.f32 %v3719, %v3754
    %v3765 = vmul.f32 %v3724, %v3754
    %v3766 = vmul.f32 %v3729, %v3754
    %v3767 = vmul.f32 %v3734, %v3754
    %v3768 = vmul.f32 %v3739, %v3754
    %v3769 = vmul.f32 %v3744, %v3754
    %v3770 = vmul.f32 %v3749, %v3754
    %3771 = vset.pattern.permute.xlu0 1
    %3772 = vperm.xlu0 %3771, %v3655
    %v3773 = vpop.permute.xlu0 %3772
    %3775 = vset.pattern.permute.xlu0 1
    %3776 = vperm.xlu0 %3775, %v3656
    %v3777 = vpop.permute.xlu0 %3776
    %3779 = vset.pattern.permute.xlu0 1
    %3780 = vperm.xlu0 %3779, %v3657
    %v3781 = vpop.permute.xlu0 %3780
    %3783 = vset.pattern.permute.xlu0 1
    %3784 = vperm.xlu0 %3783, %v3658
    %v3785 = vpop.permute.xlu0 %3784
    %3787 = vset.pattern.permute.xlu0 1
    %3788 = vperm.xlu0 %3787, %v3659
    %v3789 = vpop.permute.xlu0 %3788
    %3791 = vset.pattern.permute.xlu0 1
    %3792 = vperm.xlu0 %3791, %v3660
    %v3793 = vpop.permute.xlu0 %3792
    %3795 = vset.pattern.permute.xlu0 1
    %3796 = vperm.xlu0 %3795, %v3661
    %v3797 = vpop.permute.xlu0 %3796
    %3799 = vset.pattern.permute.xlu0 1
    %3800 = vperm.xlu0 %3799, %v3662
    %v3801 = vpop.permute.xlu0 %3800
    %3803 = vset.pattern.permute.xlu0 1
    %3804 = vperm.xlu0 %3803, %v3663
    %v3805 = vpop.permute.xlu0 %3804
    %3807 = vset.pattern.permute.xlu0 1
    %3808 = vperm.xlu0 %3807, %v3664
    %v3809 = vpop.permute.xlu0 %3808
    %3811 = vset.pattern.permute.xlu0 1
    %3812 = vperm.xlu0 %3811, %v3665
    %v3813 = vpop.permute.xlu0 %3812
    %3815 = vset.pattern.permute.xlu0 1
    %3816 = vperm.xlu0 %3815, %v3666
    %v3817 = vpop.permute.xlu0 %3816
    %3819 = vset.pattern.permute.xlu0 1
    %3820 = vperm.xlu0 %3819, %v3667
    %v3821 = vpop.permute.xlu0 %3820
    %3823 = vset.pattern.permute.xlu0 1
    %3824 = vperm.xlu0 %3823, %v3668
    %v3825 = vpop.permute.xlu0 %3824
    %3827 = vset.pattern.permute.xlu0 1
    %3828 = vperm.xlu0 %3827, %v3669
    %v3829 = vpop.permute.xlu0 %3828
    %3831 = vset.pattern.permute.xlu0 1
    %3832 = vperm.xlu0 %3831, %v3670
    %v3833 = vpop.permute.xlu0 %3832
    %v3835 = vmul.f32 %v3773, %v3031
    %v3836 = vmul.f32 %v3777, %v3031
    %v3837 = vmul.f32 %v3781, %v3031
    %v3838 = vmul.f32 %v3785, %v3031
    %v3839 = vmul.f32 %v3789, %v3031
    %v3840 = vmul.f32 %v3793, %v3031
    %v3841 = vmul.f32 %v3797, %v3031
    %v3842 = vmul.f32 %v3801, %v3031
    %v3843 = vmul.f32 %v3805, %v3031
    %v3844 = vmul.f32 %v3809, %v3031
    %v3845 = vmul.f32 %v3813, %v3031
    %v3846 = vmul.f32 %v3817, %v3031
    %v3847 = vmul.f32 %v3821, %v3031
    %v3848 = vmul.f32 %v3825, %v3031
    %v3849 = vmul.f32 %v3829, %v3031
    %v3850 = vmul.f32 %v3833, %v3031
    %v3851 = vadd.f32 %v3755, %v3835
    %v3852 = vadd.f32 %v3756, %v3836
    %v3853 = vadd.f32 %v3757, %v3837
    %v3854 = vadd.f32 %v3758, %v3838
    %v3855 = vadd.f32 %v3759, %v3839
    %v3856 = vadd.f32 %v3760, %v3840
    %v3857 = vadd.f32 %v3761, %v3841
    %v3858 = vadd.f32 %v3762, %v3842
    %v3859 = vadd.f32 %v3763, %v3843
    %v3860 = vadd.f32 %v3764, %v3844
    %v3861 = vadd.f32 %v3765, %v3845
    %v3862 = vadd.f32 %v3766, %v3846
    %v3863 = vadd.f32 %v3767, %v3847
    %v3864 = vadd.f32 %v3768, %v3848
    %v3865 = vadd.f32 %v3769, %v3849
    %v3866 = vadd.f32 %v3770, %v3850
    %v3867 = vld [vmem:[%s2] sm:$0xff]
    %v3868 = vld [vmem:[%s2 + $0x8] sm:$0xff]
    %v3869 = vld [vmem:[%s2 + $0x10] sm:$0xff]
    %v3870 = vld [vmem:[%s2 + $0x18] sm:$0xff]
    %v3871 = vld [vmem:[%s2 + $0x20] sm:$0xff]
    %v3872 = vld [vmem:[%s2 + $0x28] sm:$0xff]
    %v3873 = vld [vmem:[%s2 + $0x30] sm:$0xff]
    %v3874 = vld [vmem:[%s2 + $0x38] sm:$0xff]
    %v3875 = vld [vmem:[%s2 + $0x40] sm:$0xff]
    %v3876 = vld [vmem:[%s2 + $0x48] sm:$0xff]
    %v3877 = vld [vmem:[%s2 + $0x50] sm:$0xff]
    %v3878 = vld [vmem:[%s2 + $0x58] sm:$0xff]
    %v3879 = vld [vmem:[%s2 + $0x60] sm:$0xff]
    %v3880 = vld [vmem:[%s2 + $0x68] sm:$0xff]
    %v3881 = vld [vmem:[%s2 + $0x70] sm:$0xff]
    %v3882 = vld [vmem:[%s2 + $0x78] sm:$0xff]
    %3884 = vset.pattern.permute.xlu0 0
    %3885 = vperm.xlu0 %3884, %v3867
    %v3886 = vpop.permute.xlu0 %3885
    %3889 = vset.pattern.permute.xlu0 0
    %3890 = vperm.xlu0 %3889, %v3868
    %v3891 = vpop.permute.xlu0 %3890
    %3894 = vset.pattern.permute.xlu0 0
    %3895 = vperm.xlu0 %3894, %v3869
    %v3896 = vpop.permute.xlu0 %3895
    %3899 = vset.pattern.permute.xlu0 0
    %3900 = vperm.xlu0 %3899, %v3870
    %v3901 = vpop.permute.xlu0 %3900
    %3904 = vset.pattern.permute.xlu0 0
    %3905 = vperm.xlu0 %3904, %v3871
    %v3906 = vpop.permute.xlu0 %3905
    %3909 = vset.pattern.permute.xlu0 0
    %3910 = vperm.xlu0 %3909, %v3872
    %v3911 = vpop.permute.xlu0 %3910
    %3914 = vset.pattern.permute.xlu0 0
    %3915 = vperm.xlu0 %3914, %v3873
    %v3916 = vpop.permute.xlu0 %3915
    %3919 = vset.pattern.permute.xlu0 0
    %3920 = vperm.xlu0 %3919, %v3874
    %v3921 = vpop.permute.xlu0 %3920
    %3924 = vset.pattern.permute.xlu0 0
    %3925 = vperm.xlu0 %3924, %v3875
    %v3926 = vpop.permute.xlu0 %3925
    %3929 = vset.pattern.permute.xlu0 0
    %3930 = vperm.xlu0 %3929, %v3876
    %v3931 = vpop.permute.xlu0 %3930
    %3934 = vset.pattern.permute.xlu0 0
    %3935 = vperm.xlu0 %3934, %v3877
    %v3936 = vpop.permute.xlu0 %3935
    %3939 = vset.pattern.permute.xlu0 0
    %3940 = vperm.xlu0 %3939, %v3878
    %v3941 = vpop.permute.xlu0 %3940
    %3944 = vset.pattern.permute.xlu0 0
    %3945 = vperm.xlu0 %3944, %v3879
    %v3946 = vpop.permute.xlu0 %3945
    %3949 = vset.pattern.permute.xlu0 0
    %3950 = vperm.xlu0 %3949, %v3880
    %v3951 = vpop.permute.xlu0 %3950
    %3954 = vset.pattern.permute.xlu0 0
    %3955 = vperm.xlu0 %3954, %v3881
    %v3956 = vpop.permute.xlu0 %3955
    %3959 = vset.pattern.permute.xlu0 0
    %3960 = vperm.xlu0 %3959, %v3882
    %v3961 = vpop.permute.xlu0 %3960
    %v3963 = vadd.f32 %v3851, %v3886
    %v3964 = vadd.f32 %v3852, %v3891
    %v3965 = vadd.f32 %v3853, %v3896
    %v3966 = vadd.f32 %v3854, %v3901
    %v3967 = vadd.f32 %v3855, %v3906
    %v3968 = vadd.f32 %v3856, %v3911
    %v3969 = vadd.f32 %v3857, %v3916
    %v3970 = vadd.f32 %v3858, %v3921
    %v3971 = vadd.f32 %v3859, %v3926
    %v3972 = vadd.f32 %v3860, %v3931
    %v3973 = vadd.f32 %v3861, %v3936
    %v3974 = vadd.f32 %v3862, %v3941
    %v3975 = vadd.f32 %v3863, %v3946
    %v3976 = vadd.f32 %v3864, %v3951
    %v3977 = vadd.f32 %v3865, %v3956
    %v3978 = vadd.f32 %v3866, %v3961
    %v3979 = vmul.f32 %v3963, 0.01
    %v3980 = vmul.f32 %v3964, 0.01
    %v3981 = vmul.f32 %v3965, 0.01
    %v3982 = vmul.f32 %v3966, 0.01
    %v3983 = vmul.f32 %v3967, 0.01
    %v3984 = vmul.f32 %v3968, 0.01
    %v3985 = vmul.f32 %v3969, 0.01
    %v3986 = vmul.f32 %v3970, 0.01
    %v3987 = vmul.f32 %v3971, 0.01
    %v3988 = vmul.f32 %v3972, 0.01
    %v3989 = vmul.f32 %v3973, 0.01
    %v3990 = vmul.f32 %v3974, 0.01
    %v3991 = vmul.f32 %v3975, 0.01
    %v3992 = vmul.f32 %v3976, 0.01
    %v3993 = vmul.f32 %v3977, 0.01
    %v3994 = vmul.f32 %v3978, 0.01
    %v3995 = vmax.f32 %v3963, %v3979
    %v3996 = vmax.f32 %v3964, %v3980
    %v3997 = vmax.f32 %v3965, %v3981
    %v3998 = vmax.f32 %v3966, %v3982
    %v3999 = vmax.f32 %v3967, %v3983
    %v4000 = vmax.f32 %v3968, %v3984
    %v4001 = vmax.f32 %v3969, %v3985
    %v4002 = vmax.f32 %v3970, %v3986
    %v4003 = vmax.f32 %v3971, %v3987
    %v4004 = vmax.f32 %v3972, %v3988
    %v4005 = vmax.f32 %v3973, %v3989
    %v4006 = vmax.f32 %v3974, %v3990
    %v4007 = vmax.f32 %v3975, %v3991
    %v4008 = vmax.f32 %v3976, %v3992
    %v4009 = vmax.f32 %v3977, %v3993
    %v4010 = vmax.f32 %v3978, %v3994
    %v4011 = vpack.c.bf16 %v3996, %v3995
    %v4012 = vpack.c.bf16 %v3998, %v3997
    %v4013 = vpack.c.bf16 %v4000, %v3999
    %v4014 = vpack.c.bf16 %v4002, %v4001
    %v4015 = vpack.c.bf16 %v4004, %v4003
    %v4016 = vpack.c.bf16 %v4006, %v4005
    %v4017 = vpack.c.bf16 %v4008, %v4007
    %v4018 = vpack.c.bf16 %v4010, %v4009
    %v4019 = vld [vmem:[%s3] sm:$0xf]
    %v4020 = vld [vmem:[%s3 + $0x4] sm:$0xf]
    %v4021 = vld [vmem:[%s3 + $0x8] sm:$0xf]
    %v4022 = vld [vmem:[%s3 + $0xc] sm:$0xf]
    %v4023 = vld [vmem:[%s3 + $0x10] sm:$0xf]
    %v4024 = vld [vmem:[%s3 + $0x14] sm:$0xf]
    %v4025 = vld [vmem:[%s3 + $0x18] sm:$0xf]
    %v4026 = vld [vmem:[%s3 + $0x1c] sm:$0xf]
    %v4027 = vld [vmem:[%s3 + $0x20] sm:$0xf]
    %v4028 = vld [vmem:[%s3 + $0x24] sm:$0xf]
    %v4029 = vld [vmem:[%s3 + $0x28] sm:$0xf]
    %v4030 = vld [vmem:[%s3 + $0x2c] sm:$0xf]
    %v4031 = vld [vmem:[%s3 + $0x30] sm:$0xf]
    %v4032 = vld [vmem:[%s3 + $0x34] sm:$0xf]
    %v4033 = vld [vmem:[%s3 + $0x38] sm:$0xf]
    %v4034 = vld [vmem:[%s3 + $0x3c] sm:$0xf]
    %v4035 = vld [vmem:[%s4] sm:$0xff]
    %v4036 = vld [vmem:[%s4 + $0x8] sm:$0xff]
    %v4037 = vld [vmem:[%s4 + $0x10] sm:$0xff]
    %v4038 = vld [vmem:[%s4 + $0x18] sm:$0xff]
    %v4039 = vld [vmem:[%s4 + $0x20] sm:$0xff]
    %v4040 = vld [vmem:[%s4 + $0x28] sm:$0xff]
    %v4041 = vld [vmem:[%s4 + $0x30] sm:$0xff]
    %v4042 = vld [vmem:[%s4 + $0x38] sm:$0xff]
    %v4043 = vld [vmem:[%s4 + $0x40] sm:$0xff]
    %v4044 = vld [vmem:[%s4 + $0x48] sm:$0xff]
    %v4045 = vld [vmem:[%s4 + $0x50] sm:$0xff]
    %v4046 = vld [vmem:[%s4 + $0x58] sm:$0xff]
    %v4047 = vld [vmem:[%s4 + $0x60] sm:$0xff]
    %v4048 = vld [vmem:[%s4 + $0x68] sm:$0xff]
    %v4049 = vld [vmem:[%s4 + $0x70] sm:$0xff]
    %v4050 = vld [vmem:[%s4 + $0x78] sm:$0xff]
    %4052 = vset.pattern.permute.xlu0 0
    %4053 = vperm.xlu0 %4052, %v4035
    %v4054 = vpop.permute.xlu0 %4053
    %4057 = vset.pattern.permute.xlu0 0
    %4058 = vperm.xlu0 %4057, %v4036
    %v4059 = vpop.permute.xlu0 %4058
    %4062 = vset.pattern.permute.xlu0 0
    %4063 = vperm.xlu0 %4062, %v4037
    %v4064 = vpop.permute.xlu0 %4063
    %4067 = vset.pattern.permute.xlu0 0
    %4068 = vperm.xlu0 %4067, %v4038
    %v4069 = vpop.permute.xlu0 %4068
    %4072 = vset.pattern.permute.xlu0 0
    %4073 = vperm.xlu0 %4072, %v4039
    %v4074 = vpop.permute.xlu0 %4073
    %4077 = vset.pattern.permute.xlu0 0
    %4078 = vperm.xlu0 %4077, %v4040
    %v4079 = vpop.permute.xlu0 %4078
    %4082 = vset.pattern.permute.xlu0 0
    %4083 = vperm.xlu0 %4082, %v4041
    %v4084 = vpop.permute.xlu0 %4083
    %4087 = vset.pattern.permute.xlu0 0
    %4088 = vperm.xlu0 %4087, %v4042
    %v4089 = vpop.permute.xlu0 %4088
    %4092 = vset.pattern.permute.xlu0 0
    %4093 = vperm.xlu0 %4092, %v4043
    %v4094 = vpop.permute.xlu0 %4093
    %4097 = vset.pattern.permute.xlu0 0
    %4098 = vperm.xlu0 %4097, %v4044
    %v4099 = vpop.permute.xlu0 %4098
    %4102 = vset.pattern.permute.xlu0 0
    %4103 = vperm.xlu0 %4102, %v4045
    %v4104 = vpop.permute.xlu0 %4103
    %4107 = vset.pattern.permute.xlu0 0
    %4108 = vperm.xlu0 %4107, %v4046
    %v4109 = vpop.permute.xlu0 %4108
    %4112 = vset.pattern.permute.xlu0 0
    %4113 = vperm.xlu0 %4112, %v4047
    %v4114 = vpop.permute.xlu0 %4113
    %4117 = vset.pattern.permute.xlu0 0
    %4118 = vperm.xlu0 %4117, %v4048
    %v4119 = vpop.permute.xlu0 %4118
    %4122 = vset.pattern.permute.xlu0 0
    %4123 = vperm.xlu0 %4122, %v4049
    %v4124 = vpop.permute.xlu0 %4123
    %4127 = vset.pattern.permute.xlu0 0
    %4128 = vperm.xlu0 %4127, %v4050
    %v4129 = vpop.permute.xlu0 %4128
    %v4147 = vunpack.c.l.b16 %v4019
    %v4148 = vunpack.c.l.b16 %v4020
    %v4149 = vunpack.c.l.b16 %v4021
    %v4150 = vunpack.c.l.b16 %v4022
    %v4151 = vunpack.c.l.b16 %v4023
    %v4152 = vunpack.c.l.b16 %v4024
    %v4153 = vunpack.c.l.b16 %v4025
    %v4154 = vunpack.c.l.b16 %v4026
    %v4155 = vunpack.c.l.b16 %v4027
    %v4156 = vunpack.c.l.b16 %v4028
    %v4157 = vunpack.c.l.b16 %v4029
    %v4158 = vunpack.c.l.b16 %v4030
    %v4159 = vunpack.c.l.b16 %v4031
    %v4160 = vunpack.c.l.b16 %v4032
    %v4161 = vunpack.c.l.b16 %v4033
    %v4162 = vunpack.c.l.b16 %v4034
    %v4163 = vpack.c.b16 %v4148, %v4147
    %v4164 = vpack.c.b16 %v4150, %v4149
    %v4165 = vpack.c.b16 %v4152, %v4151
    %v4166 = vpack.c.b16 %v4154, %v4153
    %v4167 = vpack.c.b16 %v4156, %v4155
    %v4168 = vpack.c.b16 %v4158, %v4157
    %v4169 = vpack.c.b16 %v4160, %v4159
    %v4170 = vpack.c.b16 %v4162, %v4161
    %4179 = vmatprep.subr.bf16.mxu0 0
    %4180 = vmatpush1.bf16.msra.mxu0 %v4018
    %4181 = vmatprep.subr.bf16.mxu0 0
    %4182 = vmatpush1.bf16.msra.mxu0 %v4017
    %4183 = vmatprep.subr.bf16.mxu0 0
    %4184 = vmatpush1.bf16.msra.mxu0 %v4016
    %4185 = vmatprep.subr.bf16.mxu0 0
    %4186 = vmatpush1.bf16.msra.mxu0 %v4015
    %4187 = vmatprep.subr.bf16.mxu0 0
    %4188 = vmatpush1.bf16.msra.mxu0 %v4014
    %4189 = vmatprep.subr.bf16.mxu0 0
    %4190 = vmatpush1.bf16.msra.mxu0 %v4013
    %4191 = vmatprep.subr.bf16.mxu0 0
    %4192 = vmatpush1.bf16.msra.mxu0 %v4012
    %4193 = vmatprep.subr.bf16.mxu0 0
    %4194 = vmatpush1.bf16.msra.mxu0 %v4011
    %4195 = vmatprep.subr.bf16.mxu0 0
    %4196 = vmatpush2.bf16.msra.mxu0 0
    %4197 = vmatprep.subr.bf16.mxu0 0
    %4198 = vmatpush2.bf16.msra.mxu0 0
    %4199 = vmatprep.subr.bf16.mxu0 0
    %4200 = vmatpush2.bf16.msra.mxu0 0
    %4201 = vmatprep.subr.bf16.mxu0 0
    %4202 = vmatpush2.bf16.msra.mxu0 0
    %4203 = vmatprep.subr.bf16.mxu0 0
    %4204 = vmatpush2.bf16.msra.mxu0 0
    %4205 = vmatprep.subr.bf16.mxu0 0
    %4206 = vmatpush2.bf16.msra.mxu0 0
    %4207 = vmatprep.subr.bf16.mxu0 0
    %4208 = vmatpush2.bf16.msra.mxu0 0
    %4209 = vmatprep.subr.bf16.mxu0 0
    %4210 = vmatpush2.bf16.msra.mxu0 0
    %4211 = vmatprep.mubr.bf16.mxu0 0
    %4212 = vmatmul.mubr.bf16.gmra.mxu0 %v4163
    %v4213 = vpop.f32.mrf.mxu0
    %v4214 = vadd.f32 %v4054, %v4213
    %v4215 = vpop.f32.mrf.mxu0
    %v4216 = vpop.f32.mrf.mxu0
    %v4217 = vadd.f32 %v4059, %v4216
    %v4218 = vpop.f32.mrf.mxu0
    %4219 = vmatprep.mubr.bf16.mxu0 0
    %4220 = vmatmul.mubr.bf16.gmra.mxu0 %v4164
    %v4221 = vpop.f32.mrf.mxu0
    %v4222 = vadd.f32 %v4064, %v4221
    %v4223 = vpop.f32.mrf.mxu0
    %v4224 = vpop.f32.mrf.mxu0
    %v4225 = vadd.f32 %v4069, %v4224
    %v4226 = vpop.f32.mrf.mxu0
    %4227 = vmatprep.mubr.bf16.mxu0 0
    %4228 = vmatmul.mubr.bf16.gmra.mxu0 %v4165
    %v4229 = vpop.f32.mrf.mxu0
    %v4230 = vadd.f32 %v4074, %v4229
    %v4231 = vpop.f32.mrf.mxu0
    %v4232 = vpop.f32.mrf.mxu0
    %v4233 = vadd.f32 %v4079, %v4232
    %v4234 = vpop.f32.mrf.mxu0
    %4235 = vmatprep.mubr.bf16.mxu0 0
    %4236 = vmatmul.mubr.bf16.gmra.mxu0 %v4166
    %v4237 = vpop.f32.mrf.mxu0
    %v4238 = vadd.f32 %v4084, %v4237
    %v4239 = vpop.f32.mrf.mxu0
    %v4240 = vpop.f32.mrf.mxu0
    %v4241 = vadd.f32 %v4089, %v4240
    %v4242 = vpop.f32.mrf.mxu0
    %4243 = vmatprep.mubr.bf16.mxu0 0
    %4244 = vmatmul.mubr.bf16.gmra.mxu0 %v4167
    %v4245 = vpop.f32.mrf.mxu0
    %v4246 = vadd.f32 %v4094, %v4245
    %v4247 = vpop.f32.mrf.mxu0
    %v4248 = vpop.f32.mrf.mxu0
    %v4249 = vadd.f32 %v4099, %v4248
    %v4250 = vpop.f32.mrf.mxu0
    %4251 = vmatprep.mubr.bf16.mxu0 0
    %4252 = vmatmul.mubr.bf16.gmra.mxu0 %v4168
    %v4253 = vpop.f32.mrf.mxu0
    %v4254 = vadd.f32 %v4104, %v4253
    %v4255 = vpop.f32.mrf.mxu0
    %v4256 = vpop.f32.mrf.mxu0
    %v4257 = vadd.f32 %v4109, %v4256
    %v4258 = vpop.f32.mrf.mxu0
    %4259 = vmatprep.mubr.bf16.mxu0 0
    %4260 = vmatmul.mubr.bf16.gmra.mxu0 %v4169
    %v4261 = vpop.f32.mrf.mxu0
    %v4262 = vadd.f32 %v4114, %v4261
    %v4263 = vpop.f32.mrf.mxu0
    %v4264 = vpop.f32.mrf.mxu0
    %v4265 = vadd.f32 %v4119, %v4264
    %v4266 = vpop.f32.mrf.mxu0
    %4267 = vmatprep.mubr.bf16.mxu0 0
    %4268 = vmatmul.mubr.bf16.gmra.mxu0 %v4170
    %v4269 = vpop.f32.mrf.mxu0
    %v4270 = vadd.f32 %v4124, %v4269
    %v4271 = vpop.f32.mrf.mxu0
    %v4272 = vpop.f32.mrf.mxu0
    %v4273 = vadd.f32 %v4129, %v4272
    %v4274 = vpop.f32.mrf.mxu0
    %4275 = vdwg.mxu0
    %v4276 = vmul.f32 %v4214, 0.01
    %v4277 = vmul.f32 %v4217, 0.01
    %v4278 = vmul.f32 %v4222, 0.01
    %v4279 = vmul.f32 %v4225, 0.01
    %v4280 = vmul.f32 %v4230, 0.01
    %v4281 = vmul.f32 %v4233, 0.01
    %v4282 = vmul.f32 %v4238, 0.01
    %v4283 = vmul.f32 %v4241, 0.01
    %v4284 = vmul.f32 %v4246, 0.01
    %v4285 = vmul.f32 %v4249, 0.01
    %v4286 = vmul.f32 %v4254, 0.01
    %v4287 = vmul.f32 %v4257, 0.01
    %v4288 = vmul.f32 %v4262, 0.01
    %v4289 = vmul.f32 %v4265, 0.01
    %v4290 = vmul.f32 %v4270, 0.01
    %v4291 = vmul.f32 %v4273, 0.01
    %v4292 = vmax.f32 %v4214, %v4276
    %v4293 = vmax.f32 %v4217, %v4277
    %v4294 = vmax.f32 %v4222, %v4278
    %v4295 = vmax.f32 %v4225, %v4279
    %v4296 = vmax.f32 %v4230, %v4280
    %v4297 = vmax.f32 %v4233, %v4281
    %v4298 = vmax.f32 %v4238, %v4282
    %v4299 = vmax.f32 %v4241, %v4283
    %v4300 = vmax.f32 %v4246, %v4284
    %v4301 = vmax.f32 %v4249, %v4285
    %v4302 = vmax.f32 %v4254, %v4286
    %v4303 = vmax.f32 %v4257, %v4287
    %v4304 = vmax.f32 %v4262, %v4288
    %v4305 = vmax.f32 %v4265, %v4289
    %v4306 = vmax.f32 %v4270, %v4290
    %v4307 = vmax.f32 %v4273, %v4291
    %v4308 = vpack.c.bf16 %v4293, %v4292
    %v4309 = vpack.c.bf16 %v4295, %v4294
    %v4310 = vpack.c.bf16 %v4297, %v4296
    %v4311 = vpack.c.bf16 %v4299, %v4298
    %v4312 = vpack.c.bf16 %v4301, %v4300
    %v4313 = vpack.c.bf16 %v4303, %v4302
    %v4314 = vpack.c.bf16 %v4305, %v4304
    %v4315 = vpack.c.bf16 %v4307, %v4306
    %v4316 = vld [vmem:[%s5] sm:$0xf]
    %v4317 = vld [vmem:[%s6] sm:$0xff]
    %4319 = vset.pattern.permute.xlu0 0
    %4320 = vperm.xlu0 %4319, %v4317
    %v4321 = vpop.permute.xlu0 %4320
    %4323 = vmatprep.subr.bf16.mxu0 0
    %4324 = vmatpush1.bf16.msra.mxu0 %v4315
    %4325 = vmatprep.subr.bf16.mxu0 0
    %4326 = vmatpush1.bf16.msra.mxu0 %v4314
    %4327 = vmatprep.subr.bf16.mxu0 0
    %4328 = vmatpush1.bf16.msra.mxu0 %v4313
    %4329 = vmatprep.subr.bf16.mxu0 0
    %4330 = vmatpush1.bf16.msra.mxu0 %v4312
    %4331 = vmatprep.subr.bf16.mxu0 0
    %4332 = vmatpush1.bf16.msra.mxu0 %v4311
    %4333 = vmatprep.subr.bf16.mxu0 0
    %4334 = vmatpush1.bf16.msra.mxu0 %v4310
    %4335 = vmatprep.subr.bf16.mxu0 0
    %4336 = vmatpush1.bf16.msra.mxu0 %v4309
    %4337 = vmatprep.subr.bf16.mxu0 0
    %4338 = vmatpush1.bf16.msra.mxu0 %v4308
    %4339 = vmatprep.subr.bf16.mxu0 0
    %4340 = vmatpush2.bf16.msra.mxu0 0
    %4341 = vmatprep.subr.bf16.mxu0 0
    %4342 = vmatpush2.bf16.msra.mxu0 0
    %4343 = vmatprep.subr.bf16.mxu0 0
    %4344 = vmatpush2.bf16.msra.mxu0 0
    %4345 = vmatprep.subr.bf16.mxu0 0
    %4346 = vmatpush2.bf16.msra.mxu0 0
    %4347 = vmatprep.subr.bf16.mxu0 0
    %4348 = vmatpush2.bf16.msra.mxu0 0
    %4349 = vmatprep.subr.bf16.mxu0 0
    %4350 = vmatpush2.bf16.msra.mxu0 0
    %4351 = vmatprep.subr.bf16.mxu0 0
    %4352 = vmatpush2.bf16.msra.mxu0 0
    %4353 = vmatprep.subr.bf16.mxu0 0
    %4354 = vmatpush2.bf16.msra.mxu0 0
    %4355 = vmatprep.mubr.bf16.mxu0 0
    %4356 = vmatmul.mubr.bf16.gmra.mxu0 %v4316
    %v4357 = vpop.f32.mrf.mxu0
    %v4358 = vadd.f32 %v4321, %v4357
    %v4359 = vpop.f32.mrf.mxu0
    %v4360 = vpop.f32.mrf.mxu0
    %v4361 = vpop.f32.mrf.mxu0
    %4362 = vdwg.mxu0
    %v4363 = vtanh.pop %v4358
    %v4365 = vrot.slane %v4358, 7
    %v4367 = vsub.f32 %v2205, %v4365
    %v4368 = vsub.f32 0.0, %v4363
    %v4369 = vmul.f32 %v4368, 1.442695
    %v4370 = vpow.pop %v4369
    %v4372 = vrot.slane %v4370, 6
    %v4374 = vmul.f32 %v4367, %v4372
    %v4375 = vsub.f32 %v3654, %v4363
    %v4376 = vmul.f32 %v3653, %v3653
    %v4377 = vmul.f32 %v2929, %v2929
    %v4379 = vrot.slane %v4377, 1
    %v4381 = vadd.f32 %v4376, %v4379
    %v4382 = vmul.f32 %v4374, %v4374
    %v4384 = vrot.slane %v4382, 2
    %v4386 = vadd.f32 %v4381, %v4384
    %v4387 = vmul.f32 %v4386, -0.5
    %v4388 = vsub.f32 %v4387, 2.7568157
    %v4389 = vadd.f32 %v4388, %v4375
    %4390 = vst [vmem:[#allocation2] sm:$0x1] %v4389
    // Predicated region
    $region30: #{tpu_custom_call.1} parent=1 // pred_check
      _
    $region31: #{tpu_custom_call.1} parent=1 // pred_check_branch
      %4392 = sbr.rel (0) target = $region33
    $region32: #{tpu_custom_call.1} parent=1 // pred_region
      %s4394 = ssub.s32 16, 16
      %4395 = vsyncadd [#allocation3], %s4394
      %s4397 = sshll.u32 [#allocation2], 4
      %s4398 = int_to_ptr.vmem [resolvable:$true] %s4397
      %4400 = dma.vmem_to_hbm [thread:$0]  %s4398, 16, %s7, [#allocation3]
    $region33: #{tpu_custom_call.1} parent=1 // pred_fallthru
      _
    // Predicated region
    $region34: #{tpu_custom_call.1} parent=1 // pred_check
      _
    $region35: #{tpu_custom_call.1} parent=1 // pred_check_branch
      %4402 = sbr.rel (0) target = $region37
    $region36: #{tpu_custom_call.1} parent=1 // pred_region
      %4403 = dma.done [#allocation3], 16
    $region37: #{tpu_custom_call.1} parent=1 // pred_fallthru
      _
    %4404 = vsyncpa [#allocation3], 1

</llo_original>
